<compile_context>
chip_gen: v5e
topology: v5e:2x2
jax: 0.10.0
libtpu: 0.0.40
codegen_flags: <defaults>
</compile_context>

<pallas_src>
import functools

import jax
import jax.numpy as jnp
from jax import lax
from jax.experimental import pallas as pl
from jax.experimental.pallas import tpu as pltpu

MARGIN = 1.0
BN_EPS = 1e-5

_VMEM = pl.BlockSpec(memory_space=pltpu.MemorySpace.VMEM)
_SMEM = pl.BlockSpec(memory_space=pltpu.MemorySpace.SMEM)


def _pad128(c):
    return ((c + 127) // 128) * 128


def _pick_row_tile(rows, cap):
    """Largest multiple of 8 that divides `rows` and is <= cap; else full."""
    best = 0
    t = 8
    while t <= min(rows, cap):
        if rows % t == 0:
            best = t
        t += 8
    return best if best > 0 else rows


# ---------------------------------------------------------------------------
# Connector kernel: 1x1 conv + BatchNorm (batch stats) + AB / AT losses,
# row-tiled two-pass reduction.  grid = (phase, row_tile), both "arbitrary"
# because both axes carry cross-iteration state (BN stats / loss accumulators);
# splitting rows across TensorCores would change the BN batch-stat semantics.
# ---------------------------------------------------------------------------
def _connector_loss_kernel(xs_ref, xt_ref, w_ref, gamma_ref, beta_ref,
                           ab_ref, at_ref,
                           sum_ref, sumsq_ref, scale_ref, shift_ref,
                           *, rows_total, ct_true, ab_mult):
    phase = pl.program_id(0)
    r = pl.program_id(1)
    nr = pl.num_programs(1)

    inv_rows = 1.0 / float(rows_total)
    denom = 1.0 / (float(rows_total) * float(ct_true))

    # 1x1 conv over channels == matmul on the MXU (bf16 in, f32 accumulate).
    z = jnp.dot(xs_ref[...], w_ref[...], preferred_element_type=jnp.float32)

    # ---------------- phase 0: accumulate per-channel batch statistics ------
    @pl.when((phase == 0) & (r == 0))
    def _init_stats():
        sum_ref[...] = jnp.zeros_like(sum_ref)
        sumsq_ref[...] = jnp.zeros_like(sumsq_ref)

    @pl.when(phase == 0)
    def _accum_stats():
        sum_ref[...] += jnp.sum(z, axis=0, keepdims=True)
        sumsq_ref[...] += jnp.sum(z * z, axis=0, keepdims=True)

    @pl.when((phase == 0) & (r == nr - 1))
    def _finalize_stats():
        mu = sum_ref[...] * inv_rows
        # E[z^2] - mu^2, clamped at 0 to guard against cancellation.
        var = jnp.maximum(sumsq_ref[...] * inv_rows - mu * mu, 0.0)
        scale = gamma_ref[...] * lax.rsqrt(var + BN_EPS)
        scale_ref[...] = scale
        shift_ref[...] = beta_ref[...] - mu * scale

    # ---------------- phase 1: BN-normalize + AB / AT loss partial sums -----
    @pl.when((phase == 1) & (r == 0))
    def _init_loss():
        ab_ref[...] = jnp.zeros_like(ab_ref)
        at_ref[...] = jnp.zeros_like(at_ref)

    @pl.when(phase == 1)
    def _accum_loss():
        y = z * scale_ref[...] + shift_ref[...]
        xt = xt_ref[...].astype(jnp.float32)
        # mask padded (zero) channel columns out of both losses
        col_ok = lax.broadcasted_iota(jnp.int32, y.shape, 1) < ct_true
        t_pos = xt > 0.0
        m = MARGIN
        # criterion_active_L2(source=y, target=xt, margin) -- term >= 0
        term = (jnp.where(col_ok & (y > -m) & jnp.logical_not(t_pos),
                          (y + m) ** 2, 0.0)
                + jnp.where(col_ok & (y <= m) & t_pos, (y - m) ** 2, 0.0))
        # ((Connect(src) > 0) ^ (tgt > 0)) mismatch count
        mism = jnp.where(col_ok & ((y > 0.0) != t_pos), 1.0, 0.0)
        # lane-dense per-channel partial sums, scaled to the final means
        ab_ref[...] += jnp.sum(term, axis=0, keepdims=True) * (ab_mult * denom)
        at_ref[...] += jnp.sum(mism, axis=0, keepdims=True) * denom


def connector_losses(xs, xt, w_pad, gamma_pad, beta_pad, *,
                     ct_true, ab_mult, tile_rows_cap=2048):
    """xs: (R, Cs_pad) bf16, xt: (R, Ct_pad) bf16, w_pad: (Cs_pad, Ct_pad).

    Returns lane-partial AB / AT loss rows (1, Ct_pad); sum() gives the loss.
    """
    rows, cs_pad = xs.shape
    _, ct_pad = xt.shape
    tile_r = _pick_row_tile(rows, tile_rows_cap)
    nr = rows // tile_r

    kernel = functools.partial(_connector_loss_kernel,
                               rows_total=rows, ct_true=int(ct_true),
                               ab_mult=float(ab_mult))

    fn = pl.pallas_call(
        kernel,
        out_shape=(jax.ShapeDtypeStruct((1, ct_pad), jnp.float32),
                   jax.ShapeDtypeStruct((1, ct_pad), jnp.float32)),
        grid_spec=pltpu.PrefetchScalarGridSpec(
            num_scalar_prefetch=0,
            grid=(2, nr),                                   # (phase, row tile)
            in_specs=[
                pl.BlockSpec((tile_r, cs_pad), lambda p, r: (r, 0)),
                # xt is only needed in phase 1: keep block 0 during phase 0
                pl.BlockSpec((tile_r, ct_pad), lambda p, r: (p * r, 0)),
                pl.BlockSpec((cs_pad, ct_pad), lambda p, r: (0, 0)),
                pl.BlockSpec((1, ct_pad), lambda p, r: (0, 0)),
                pl.BlockSpec((1, ct_pad), lambda p, r: (0, 0)),
            ],
            out_specs=(pl.BlockSpec((1, ct_pad), lambda p, r: (0, 0)),
                       pl.BlockSpec((1, ct_pad), lambda p, r: (0, 0))),
            scratch_shapes=[
                pltpu.VMEM((1, ct_pad), jnp.float32),   # sum(z)
                pltpu.VMEM((1, ct_pad), jnp.float32),   # sum(z^2)
                pltpu.VMEM((1, ct_pad), jnp.float32),   # BN scale
                pltpu.VMEM((1, ct_pad), jnp.float32),   # BN shift
            ]),
        compiler_params=pltpu.CompilerParams(
            dimension_semantics=("arbitrary", "arbitrary"),
            vmem_limit_bytes=48 * 1024 * 1024),
    )
    return fn(xs, xt, w_pad, gamma_pad, beta_pad)


# ---------------------------------------------------------------------------
# Fused loss head: student classifier (linear, classes padded to 128 lanes)
# + cross-entropy from integer labels + DTL 'l2_mean' -- single pallas_call.
# ---------------------------------------------------------------------------
def _head_kernel(fs_ref, ft_ref, w_ref, b_ref, labels_ref, ce_ref, dtl_ref,
                 *, num_classes, dtl_mult):
    # classifier: bf16 matmul on MXU, f32 accumulate
    logits = jnp.dot(fs_ref[...], w_ref[...],
                     preferred_element_type=jnp.float32) + b_ref[...]
    col = lax.broadcasted_iota(jnp.int32, logits.shape, 1)
    valid = col < num_classes
    logits = jnp.where(valid, logits, -1e30)                   # mask padded
    mx = jnp.max(logits, axis=-1, keepdims=True)
    ez = jnp.where(valid, jnp.exp(logits - mx), 0.0)
    lse = mx + jnp.log(jnp.sum(ez, axis=-1, keepdims=True))
    onehot = col == labels_ref[...]                            # built in-kernel
    ce = jnp.sum(jnp.where(onehot, lse - logits, 0.0), axis=-1, keepdims=True)
    ce_ref[0, 0] = jnp.mean(ce)

    # DTL 'l2_mean' in f32: mean(((t - mean(t,1)) - (s - mean(s,1)))**2)
    fs = fs_ref[...].astype(jnp.float32)
    ft = ft_ref[...].astype(jnp.float32)
    s_c = fs - jnp.mean(fs, axis=1, keepdims=True)
    t_c = ft - jnp.mean(ft, axis=1, keepdims=True)
    dtl_ref[0, 0] = jnp.mean((t_c - s_c) ** 2) * dtl_mult


def classifier_dtl_losses(out_fs, out_ft, w_cls_pad, b_cls_pad, labels, *,
                          num_classes, dtl_mult):
    kernel = functools.partial(_head_kernel, num_classes=int(num_classes),
                               dtl_mult=float(dtl_mult))
    fn = pl.pallas_call(
        kernel,
        out_shape=(jax.ShapeDtypeStruct((1, 1), jnp.float32),
                   jax.ShapeDtypeStruct((1, 1), jnp.float32)),
        in_specs=[_VMEM] * 5,
        out_specs=(_SMEM, _SMEM),
    )
    return fn(out_fs, out_ft, w_cls_pad, b_cls_pad, labels)


# ---------------------------------------------------------------------------
# Stand-in teacher / student backbones (glue, plain JAX, deterministic).
# NHWC end-to-end, channel dims zero-padded to multiples of 128 (lane-dense,
# padded channels carry exact zeros), bf16 activations/weights.
# ---------------------------------------------------------------------------
def _normal(key, shape, std):
    return std * jax.random.normal(key, shape, dtype=jnp.float32)


def _relu6(x):
    return jnp.clip(x, 0.0, 6.0)


def _avgpool2_nhwc(x):
    n, h, w, c = x.shape
    return x.reshape(n, h // 2, 2, w // 2, 2, c).mean(axis=(2, 4))


def _conv1x1_nhwc(x, w):                    # x: (N,H,W,Cin), w: (Cin,Cout)
    return jnp.einsum('nhwc,cd->nhwd', x, w)


def _flatten_nhwc(x):                       # (N,H,W,C) -> (N*H*W, C), free
    return x.reshape(-1, x.shape[-1])


def make_backbone_params(key, in_ch, stage_ch, feat_dim):
    n_stage = len(stage_ch)
    keys = jax.random.split(key, 2 * n_stage + 1)
    params, prev_true, prev_dim = [], in_ch, in_ch
    for i, c in enumerate(stage_ch):
        c_pad = _pad128(c)
        wb = jnp.zeros((prev_dim, c_pad), jnp.float32)
        wb = wb.at[:prev_true, :c].set(
            _normal(keys[2 * i], (prev_true, c), (2.0 / c) ** 0.5))
        wp = jnp.zeros((c_pad, c_pad), jnp.float32)             # ~ conv[0:2]
        wp = wp.at[:c, :c].set(_normal(keys[2 * i + 1], (c, c), (2.0 / c) ** 0.5))
        params.append((wb.astype(jnp.bfloat16), wp.astype(jnp.bfloat16)))
        prev_true, prev_dim = c, c_pad
    wt = jnp.zeros((prev_dim, feat_dim), jnp.float32)
    wt = wt.at[:prev_true, :].set(
        _normal(keys[-1], (prev_true, feat_dim), (2.0 / feat_dim) ** 0.5))
    return params, wt.astype(jnp.bfloat16)


def run_backbone(x, params, w_tail, pool_stages):
    feats_block, feats_pre, h = [], [], x.astype(jnp.bfloat16)
    for i, (wb, wp) in enumerate(params):
        h = _relu6(_conv1x1_nhwc(h, wb))
        if pool_stages[i]:
            h = _avgpool2_nhwc(h)
        feats_block.append(h)
        feats_pre.append(_conv1x1_nhwc(h, wp))   # pre-activation analog
    tail = _relu6(_conv1x1_nhwc(h, w_tail))
    out_f = tail.mean(axis=(1, 2))               # global avg pool -> (N, F)
    return feats_block, feats_pre, out_f


# ---------------------------------------------------------------------------
# AB_distill forward (stage1=True, DTL=True)
# ---------------------------------------------------------------------------
def ab_distill_forward(inputs, targets, params, *, channel_t, num_classes,
                       ab_mult, dtl_mult, stage1=True, dtl=True,
                       tile_rows_cap=2048):
    (s_params, s_tail, t_params, t_tail,
     conn_ws, conn_gammas, conn_betas, w_cls_pad, b_cls_pad) = params

    pool = (True, False, True, False)
    s_blocks, s_pres, out_fs = run_backbone(inputs, s_params, s_tail, pool)
    t_blocks, t_pres, out_ft = run_backbone(inputs, t_params, t_tail, pool)

    if stage1:
        # student uses the block output at stage 1 and conv[0:2] pre-acts at
        # 2..4; teacher uses conv[0:2] pre-acts everywhere (as in the source).
        src_feats = [s_blocks[0], s_pres[1], s_pres[2], s_pres[3]]
        tgt_feats = [t_pres[0], t_pres[1], t_pres[2], t_pres[3]]
        loss = jnp.zeros((1, 1), jnp.float32)
        loss_ats = []
        for k in range(4):
            xs = _flatten_nhwc(src_feats[k])
            xt = _flatten_nhwc(tgt_feats[k])
            ab_row, at_row = connector_losses(
                xs, xt, conn_ws[k], conn_gammas[k], conn_betas[k],
                ct_true=channel_t[k], ab_mult=ab_mult,
                tile_rows_cap=tile_rows_cap)
            loss = loss + jnp.sum(ab_row).reshape(1, 1)       # ab_mult folded
            loss_ats.append(jnp.sum(at_row).reshape(1, 1))
        loss_at1, loss_at2, loss_at3, loss_at4 = loss_ats
    else:
        zero = jnp.zeros((1, 1), jnp.float32)
        loss = loss_at1 = loss_at2 = loss_at3 = loss_at4 = zero

    # TODO(synk): `multitask_loss` is not defined in the source module; the
    # single-task case (plain cross-entropy over the student logits) is used.
    labels = targets.astype(jnp.int32).reshape(-1, 1)
    loss_ce, loss_dtl = classifier_dtl_losses(
        out_fs, out_ft, w_cls_pad, b_cls_pad, labels,
        num_classes=num_classes, dtl_mult=dtl_mult)            # dtl_mult folded
    if not dtl:
        loss_dtl = jnp.zeros((1, 1), jnp.float32)

    return jnp.concatenate(
        [loss, loss_ce, loss_dtl, loss_at1, loss_at2, loss_at3, loss_at4],
        axis=1)


# ---------------------------------------------------------------------------
if __name__ == "__main__":
    key = jax.random.PRNGKey(0)
    k_in, k_tgt, k_s, k_t, k_conn, k_cls = jax.random.split(key, 6)

    batch, in_ch, spatial = 2, 3, 16
    channel_s = [4, 8, 16, 16]      # student (expanded) channels per stage
    channel_t = [8, 16, 32, 32]     # teacher (expanded) channels per stage
    feat_dim, num_classes = 32, 10
    ab_mult, dtl_mult = 2.0, 3.0

    # NHWC inputs (channels-last end-to-end, no transposes)
    inputs = jax.random.normal(k_in, (batch, spatial, spatial, in_ch),
                               dtype=jnp.float32)
    targets = jax.random.randint(k_tgt, (batch,), 0, num_classes)

    # stand-in backbones (external t_net / s_net), channel-padded + bf16
    s_params, s_tail = make_backbone_params(k_s, in_ch, channel_s, feat_dim)
    t_params, t_tail = make_backbone_params(k_t, in_ch, channel_t, feat_dim)

    # Connector params: Conv2d(channel_s[k]->channel_t[k], 1x1, bias=False),
    # init N(0, sqrt(2/out_ch)); BN gamma=1, beta=0.  Stored transposed and
    # zero-padded to lane-dense (Cs_pad, Ct_pad) shapes, weights in bf16.
    conn_keys = jax.random.split(k_conn, 4)
    conn_ws, conn_gammas, conn_betas = [], [], []
    for k in range(4):
        cs, ct = channel_s[k], channel_t[k]
        cs_pad, ct_pad = _pad128(cs), _pad128(ct)
        w_true = _normal(conn_keys[k], (ct, cs), (2.0 / ct) ** 0.5)
        w_pad = jnp.zeros((cs_pad, ct_pad), jnp.float32).at[:cs, :ct].set(w_true.T)
        conn_ws.append(w_pad.astype(jnp.bfloat16))
        conn_gammas.append(jnp.zeros((1, ct_pad), jnp.float32).at[:, :ct].set(1.0))
        conn_betas.append(jnp.zeros((1, ct_pad), jnp.float32))

    # student classifier: Linear(feat_dim -> num_classes), class dim padded
    kc1, kc2 = jax.random.split(k_cls)
    w_cls = _normal(kc1, (num_classes, feat_dim), (1.0 / feat_dim) ** 0.5)
    b_cls = _normal(kc2, (num_classes,), 0.01)
    ncls_pad = _pad128(num_classes)
    w_cls_pad = (jnp.zeros((feat_dim, ncls_pad), jnp.float32)
                 .at[:, :num_classes].set(w_cls.T).astype(jnp.bfloat16))
    b_cls_pad = (jnp.zeros((1, ncls_pad), jnp.float32)
                 .at[:, :num_classes].set(b_cls.reshape(1, -1)))

    params = (s_params, s_tail, t_params, t_tail,
              conn_ws, conn_gammas, conn_betas, w_cls_pad, b_cls_pad)

    fwd = jax.jit(functools.partial(
        ab_distill_forward,
        channel_t=tuple(channel_t), num_classes=num_classes,
        ab_mult=ab_mult, dtl_mult=dtl_mult, stage1=True, dtl=True,
        tile_rows_cap=64))   # small cap so the toy shapes exercise the grid

    out = fwd(inputs, targets, params)
    out = jax.block_until_ready(out)
    assert out.shape == (1, 7)
    print("KERNEL_OK")
</pallas_src>

<mosaic_0001>
module attributes {stable_mosaic.version = 11 : i64} {
  func.func @_connector_loss_kernel(%arg0: i32, %arg1: i32, %arg2: memref<64x128xbf16, #tpu.memory_space<vmem>>, %arg3: memref<64x128xbf16, #tpu.memory_space<vmem>>, %arg4: memref<128x128xbf16, #tpu.memory_space<vmem>>, %arg5: memref<1x128xf32, #tpu.memory_space<vmem>>, %arg6: memref<1x128xf32, #tpu.memory_space<vmem>>, %arg7: memref<1x128xf32, #tpu.memory_space<vmem>>, %arg8: memref<1x128xf32, #tpu.memory_space<vmem>>, %arg9: memref<1x128xf32, #tpu.memory_space<vmem>>, %arg10: memref<1x128xf32, #tpu.memory_space<vmem>>, %arg11: memref<1x128xf32, #tpu.memory_space<vmem>>, %arg12: memref<1x128xf32, #tpu.memory_space<vmem>>) attributes {dimension_semantics = [#tpu.dimension_semantics<arbitrary>, #tpu.dimension_semantics<arbitrary>], iteration_bounds = array<i64: 2, 2>, scalar_prefetch = 0 : i64, scratch_operands = 4 : i64, tpu.core_type = #tpu.core_type<tc>, window_params = [{transform_indices = @transform_0, window_bounds = array<i64: 64, 128>}, {transform_indices = @transform_1, window_bounds = array<i64: 64, 128>}, {pipeline_mode = #tpu.pipeline_mode<synchronous>, transform_indices = @transform_2, window_bounds = array<i64: 128, 128>}, {pipeline_mode = #tpu.pipeline_mode<synchronous>, transform_indices = @transform_3, window_bounds = array<i64: 1, 128>}, {pipeline_mode = #tpu.pipeline_mode<synchronous>, transform_indices = @transform_4, window_bounds = array<i64: 1, 128>}, {pipeline_mode = #tpu.pipeline_mode<synchronous>, transform_indices = @transform_5, window_bounds = array<i64: 1, 128>}, {pipeline_mode = #tpu.pipeline_mode<synchronous>, transform_indices = @transform_6, window_bounds = array<i64: 1, 128>}]} {
    %c0 = arith.constant 0 : index
    %c0_0 = arith.constant 0 : index
    %0 = vector.load %arg2[%c0, %c0_0] : memref<64x128xbf16, #tpu.memory_space<vmem>>, vector<64x128xbf16>
    %c0_1 = arith.constant 0 : index
    %c0_2 = arith.constant 0 : index
    %1 = vector.load %arg4[%c0_1, %c0_2] : memref<128x128xbf16, #tpu.memory_space<vmem>>, vector<128x128xbf16>
    %cst = arith.constant dense<0.000000e+00> : vector<64x128xf32>
    %2 = tpu.matmul %0, %1, %cst {dimension_numbers = #tpu.dot_dimension_numbers<[1], [0], [0], [1], [0, 0, 1, 1], [], []>} : vector<64x128xbf16>, vector<128x128xbf16>, vector<64x128xf32> -> vector<64x128xf32>
    %c0_i32 = arith.constant 0 : i32
    %3 = arith.cmpi eq, %arg0, %c0_i32 : i32
    %c0_i32_3 = arith.constant 0 : i32
    %4 = arith.cmpi eq, %arg1, %c0_i32_3 : i32
    %5 = arith.andi %3, %4 : i1
    %6 = arith.extui %5 : i1 to i32
    %c0_i32_4 = arith.constant 0 : i32
    %7 = arith.cmpi ne, %6, %c0_i32_4 : i32
    scf.if %7 {
      %cst_14 = arith.constant 0.000000e+00 : f32
      %24 = vector.broadcast %cst_14 : f32 to vector<1x128xf32>
      %c0_15 = arith.constant 0 : index
      %c0_16 = arith.constant 0 : index
      %25 = vector.load %arg9[%c0_15, %c0_16] : memref<1x128xf32, #tpu.memory_space<vmem>>, vector<1x128xf32>
      tpu.vector_store %arg9[%c0_15, %c0_16], %24 {strides = array<i32>} : memref<1x128xf32, #tpu.memory_space<vmem>>, vector<1x128xf32>,
      %cst_17 = arith.constant 0.000000e+00 : f32
      %26 = vector.broadcast %cst_17 : f32 to vector<1x128xf32>
      %c0_18 = arith.constant 0 : index
      %c0_19 = arith.constant 0 : index
      %27 = vector.load %arg10[%c0_18, %c0_19] : memref<1x128xf32, #tpu.memory_space<vmem>>, vector<1x128xf32>
      tpu.vector_store %arg10[%c0_18, %c0_19], %26 {strides = array<i32>} : memref<1x128xf32, #tpu.memory_space<vmem>>, vector<1x128xf32>,
    } else {
    }
    %c0_i32_5 = arith.constant 0 : i32
    %8 = arith.cmpi eq, %arg0, %c0_i32_5 : i32
    %9 = arith.extui %8 : i1 to i32
    %c0_i32_6 = arith.constant 0 : i32
    %10 = arith.cmpi ne, %9, %c0_i32_6 : i32
    scf.if %10 {
      %c0_14 = arith.constant 0 : index
      %c0_15 = arith.constant 0 : index
      %24 = vector.load %arg9[%c0_14, %c0_15] : memref<1x128xf32, #tpu.memory_space<vmem>>, vector<1x128xf32>
      %cst_16 = arith.constant dense<0.000000e+00> : vector<128xf32>
      %25 = vector.multi_reduction <add>, %2, %cst_16 [0] : vector<64x128xf32> to vector<128xf32>
      %26 = vector.shape_cast %25 : vector<128xf32> to vector<1x128xf32>
      %27 = arith.addf %24, %26 : vector<1x128xf32>
      %c0_17 = arith.constant 0 : index
      %c0_18 = arith.constant 0 : index
      %28 = vector.load %arg9[%c0_17, %c0_18] : memref<1x128xf32, #tpu.memory_space<vmem>>, vector<1x128xf32>
      tpu.vector_store %arg9[%c0_17, %c0_18], %27 {strides = array<i32>} : memref<1x128xf32, #tpu.memory_space<vmem>>, vector<1x128xf32>,
      %c0_19 = arith.constant 0 : index
      %c0_20 = arith.constant 0 : index
      %29 = vector.load %arg10[%c0_19, %c0_20] : memref<1x128xf32, #tpu.memory_space<vmem>>, vector<1x128xf32>
      %30 = arith.mulf %2, %2 : vector<64x128xf32>
      %cst_21 = arith.constant dense<0.000000e+00> : vector<128xf32>
      %31 = vector.multi_reduction <add>, %30, %cst_21 [0] : vector<64x128xf32> to vector<128xf32>
      %32 = vector.shape_cast %31 : vector<128xf32> to vector<1x128xf32>
      %33 = arith.addf %29, %32 : vector<1x128xf32>
      %c0_22 = arith.constant 0 : index
      %c0_23 = arith.constant 0 : index
      %34 = vector.load %arg10[%c0_22, %c0_23] : memref<1x128xf32, #tpu.memory_space<vmem>>, vector<1x128xf32>
      tpu.vector_store %arg10[%c0_22, %c0_23], %33 {strides = array<i32>} : memref<1x128xf32, #tpu.memory_space<vmem>>, vector<1x128xf32>,
    } else {
    }
    %c0_i32_7 = arith.constant 0 : i32
    %11 = arith.cmpi eq, %arg0, %c0_i32_7 : i32
    %c1_i32 = arith.constant 1 : i32
    %12 = arith.cmpi eq, %arg1, %c1_i32 : i32
    %13 = arith.andi %11, %12 : i1
    %14 = arith.extui %13 : i1 to i32
    %c0_i32_8 = arith.constant 0 : i32
    %15 = arith.cmpi ne, %14, %c0_i32_8 : i32
    scf.if %15 {
      %c0_14 = arith.constant 0 : index
      %c0_15 = arith.constant 0 : index
      %24 = vector.load %arg9[%c0_14, %c0_15] : memref<1x128xf32, #tpu.memory_space<vmem>>, vector<1x128xf32>
      %cst_16 = arith.constant 7.812500e-03 : f32
      %25 = vector.broadcast %cst_16 : f32 to vector<1x128xf32>
      %26 = arith.mulf %24, %25 : vector<1x128xf32>
      %c0_17 = arith.constant 0 : index
      %c0_18 = arith.constant 0 : index
      %27 = vector.load %arg10[%c0_17, %c0_18] : memref<1x128xf32, #tpu.memory_space<vmem>>, vector<1x128xf32>
      %cst_19 = arith.constant 7.812500e-03 : f32
      %28 = vector.broadcast %cst_19 : f32 to vector<1x128xf32>
      %29 = arith.mulf %27, %28 : vector<1x128xf32>
      %30 = arith.mulf %26, %26 : vector<1x128xf32>
      %31 = arith.subf %29, %30 : vector<1x128xf32>
      %cst_20 = arith.constant 0.000000e+00 : f32
      %32 = vector.broadcast %cst_20 : f32 to vector<1x128xf32>
      %33 = arith.maximumf %31, %32 : vector<1x128xf32>
      %c0_21 = arith.constant 0 : index
      %c0_22 = arith.constant 0 : index
      %34 = vector.load %arg5[%c0_21, %c0_22] : memref<1x128xf32, #tpu.memory_space<vmem>>, vector<1x128xf32>
      %cst_23 = arith.constant 9.99999974E-6 : f32
      %35 = vector.broadcast %cst_23 : f32 to vector<1x128xf32>
      %36 = arith.addf %33, %35 : vector<1x128xf32>
      %37 = math.rsqrt %36 : vector<1x128xf32>
      %38 = arith.mulf %34, %37 : vector<1x128xf32>
      %c0_24 = arith.constant 0 : index
      %c0_25 = arith.constant 0 : index
      %39 = vector.load %arg11[%c0_24, %c0_25] : memref<1x128xf32, #tpu.memory_space<vmem>>, vector<1x128xf32>
      tpu.vector_store %arg11[%c0_24, %c0_25], %38 {strides = array<i32>} : memref<1x128xf32, #tpu.memory_space<vmem>>, vector<1x128xf32>,
      %c0_26 = arith.constant 0 : index
      %c0_27 = arith.constant 0 : index
      %40 = vector.load %arg6[%c0_26, %c0_27] : memref<1x128xf32, #tpu.memory_space<vmem>>, vector<1x128xf32>
      %41 = arith.mulf %26, %38 : vector<1x128xf32>
      %42 = arith.subf %40, %41 : vector<1x128xf32>
      %c0_28 = arith.constant 0 : index
      %c0_29 = arith.constant 0 : index
      %43 = vector.load %arg12[%c0_28, %c0_29] : memref<1x128xf32, #tpu.memory_space<vmem>>, vector<1x128xf32>
      tpu.vector_store %arg12[%c0_28, %c0_29], %42 {strides = array<i32>} : memref<1x128xf32, #tpu.memory_space<vmem>>, vector<1x128xf32>,
    } else {
    }
    %c1_i32_9 = arith.constant 1 : i32
    %16 = arith.cmpi eq, %arg0, %c1_i32_9 : i32
    %c0_i32_10 = arith.constant 0 : i32
    %17 = arith.cmpi eq, %arg1, %c0_i32_10 : i32
    %18 = arith.andi %16, %17 : i1
    %19 = arith.extui %18 : i1 to i32
    %c0_i32_11 = arith.constant 0 : i32
    %20 = arith.cmpi ne, %19, %c0_i32_11 : i32
    scf.if %20 {
      %cst_14 = arith.constant 0.000000e+00 : f32
      %24 = vector.broadcast %cst_14 : f32 to vector<1x128xf32>
      %c0_15 = arith.constant 0 : index
      %c0_16 = arith.constant 0 : index
      %25 = vector.load %arg7[%c0_15, %c0_16] : memref<1x128xf32, #tpu.memory_space<vmem>>, vector<1x128xf32>
      tpu.vector_store %arg7[%c0_15, %c0_16], %24 {strides = array<i32>} : memref<1x128xf32, #tpu.memory_space<vmem>>, vector<1x128xf32>,
      %cst_17 = arith.constant 0.000000e+00 : f32
      %26 = vector.broadcast %cst_17 : f32 to vector<1x128xf32>
      %c0_18 = arith.constant 0 : index
      %c0_19 = arith.constant 0 : index
      %27 = vector.load %arg8[%c0_18, %c0_19] : memref<1x128xf32, #tpu.memory_space<vmem>>, vector<1x128xf32>
      tpu.vector_store %arg8[%c0_18, %c0_19], %26 {strides = array<i32>} : memref<1x128xf32, #tpu.memory_space<vmem>>, vector<1x128xf32>,
    } else {
    }
    %c1_i32_12 = arith.constant 1 : i32
    %21 = arith.cmpi eq, %arg0, %c1_i32_12 : i32
    %22 = arith.extui %21 : i1 to i32
    %c0_i32_13 = arith.constant 0 : i32
    %23 = arith.cmpi ne, %22, %c0_i32_13 : i32
    scf.if %23 {
      %c0_14 = arith.constant 0 : index
      %c0_15 = arith.constant 0 : index
      %24 = vector.load %arg11[%c0_14, %c0_15] : memref<1x128xf32, #tpu.memory_space<vmem>>, vector<1x128xf32>
      %25 = vector.broadcast %24 : vector<1x128xf32> to vector<64x128xf32>
      %26 = arith.mulf %2, %25 : vector<64x128xf32>
      %c0_16 = arith.constant 0 : index
      %c0_17 = arith.constant 0 : index
      %27 = vector.load %arg12[%c0_16, %c0_17] : memref<1x128xf32, #tpu.memory_space<vmem>>, vector<1x128xf32>
      %28 = vector.broadcast %27 : vector<1x128xf32> to vector<64x128xf32>
      %29 = arith.addf %26, %28 : vector<64x128xf32>
      %c0_18 = arith.constant 0 : index
      %c0_19 = arith.constant 0 : index
      %30 = vector.load %arg3[%c0_18, %c0_19] : memref<64x128xbf16, #tpu.memory_space<vmem>>, vector<64x128xbf16>
      %31 = arith.extf %30 : vector<64x128xbf16> to vector<64x128xf32>
      %32 = tpu.iota {dimensions = array<i32: 1>} : vector<64x128xi32>
      %c8_i32 = arith.constant 8 : i32
      %33 = vector.broadcast %c8_i32 : i32 to vector<64x128xi32>
      %34 = arith.cmpi slt, %32, %33 : vector<64x128xi32>
      %cst_20 = arith.constant 0.000000e+00 : f32
      %35 = vector.broadcast %cst_20 : f32 to vector<64x128xf32>
      %36 = arith.cmpf ogt, %31, %35 : vector<64x128xf32>
      %cst_21 = arith.constant -1.000000e+00 : f32
      %37 = vector.broadcast %cst_21 : f32 to vector<64x128xf32>
      %38 = arith.cmpf ogt, %29, %37 : vector<64x128xf32>
      %39 = arith.andi %34, %38 : vector<64x128xi1>
      %cst_22 = arith.constant dense<true> : vector<64x128xi1>
      %40 = arith.xori %36, %cst_22 : vector<64x128xi1>
      %41 = arith.andi %39, %40 : vector<64x128xi1>
      %cst_23 = arith.constant 1.000000e+00 : f32
      %42 = vector.broadcast %cst_23 : f32 to vector<64x128xf32>
      %43 = arith.addf %29, %42 : vector<64x128xf32>
      %44 = arith.mulf %43, %43 : vector<64x128xf32>
      %cst_24 = arith.constant 0.000000e+00 : f32
      %45 = vector.broadcast %cst_24 : f32 to vector<64x128xf32>
      %46 = arith.select %41, %44, %45 : vector<64x128xi1>, vector<64x128xf32>
      %cst_25 = arith.constant 1.000000e+00 : f32
      %47 = vector.broadcast %cst_25 : f32 to vector<64x128xf32>
      %48 = arith.cmpf ole, %29, %47 : vector<64x128xf32>
      %49 = arith.andi %34, %48 : vector<64x128xi1>
      %50 = arith.andi %49, %36 : vector<64x128xi1>
      %cst_26 = arith.constant 1.000000e+00 : f32
      %51 = vector.broadcast %cst_26 : f32 to vector<64x128xf32>
      %52 = arith.subf %29, %51 : vector<64x128xf32>
      %53 = arith.mulf %52, %52 : vector<64x128xf32>
      %cst_27 = arith.constant 0.000000e+00 : f32
      %54 = vector.broadcast %cst_27 : f32 to vector<64x128xf32>
      %55 = arith.select %50, %53, %54 : vector<64x128xi1>, vector<64x128xf32>
      %56 = arith.addf %46, %55 : vector<64x128xf32>
      %cst_28 = arith.constant 0.000000e+00 : f32
      %57 = vector.broadcast %cst_28 : f32 to vector<64x128xf32>
      %58 = arith.cmpf ogt, %29, %57 : vector<64x128xf32>
      %59 = arith.xori %58, %36 : vector<64x128xi1>
      %60 = arith.andi %34, %59 : vector<64x128xi1>
      %cst_29 = arith.constant 1.000000e+00 : f32
      %cst_30 = arith.constant 0.000000e+00 : f32
      %61 = vector.broadcast %cst_29 : f32 to vector<64x128xf32>
      %62 = vector.broadcast %cst_30 : f32 to vector<64x128xf32>
      %63 = arith.select %60, %61, %62 : vector<64x128xi1>, vector<64x128xf32>
      %c0_31 = arith.constant 0 : index
      %c0_32 = arith.constant 0 : index
      %64 = vector.load %arg7[%c0_31, %c0_32] : memref<1x128xf32, #tpu.memory_space<vmem>>, vector<1x128xf32>
      %cst_33 = arith.constant dense<0.000000e+00> : vector<128xf32>
      %65 = vector.multi_reduction <add>, %56, %cst_33 [0] : vector<64x128xf32> to vector<128xf32>
      %66 = vector.shape_cast %65 : vector<128xf32> to vector<1x128xf32>
      %cst_34 = arith.constant 0.001953125 : f32
      %67 = vector.broadcast %cst_34 : f32 to vector<1x128xf32>
      %68 = arith.mulf %66, %67 : vector<1x128xf32>
      %69 = arith.addf %64, %68 : vector<1x128xf32>
      %c0_35 = arith.constant 0 : index
      %c0_36 = arith.constant 0 : index
      %70 = vector.load %arg7[%c0_35, %c0_36] : memref<1x128xf32, #tpu.memory_space<vmem>>, vector<1x128xf32>
      tpu.vector_store %arg7[%c0_35, %c0_36], %69 {strides = array<i32>} : memref<1x128xf32, #tpu.memory_space<vmem>>, vector<1x128xf32>,
      %c0_37 = arith.constant 0 : index
      %c0_38 = arith.constant 0 : index
      %71 = vector.load %arg8[%c0_37, %c0_38] : memref<1x128xf32, #tpu.memory_space<vmem>>, vector<1x128xf32>
      %cst_39 = arith.constant dense<0.000000e+00> : vector<128xf32>
      %72 = vector.multi_reduction <add>, %63, %cst_39 [0] : vector<64x128xf32> to vector<128xf32>
      %73 = vector.shape_cast %72 : vector<128xf32> to vector<1x128xf32>
      %cst_40 = arith.constant 9.765625E-4 : f32
      %74 = vector.broadcast %cst_40 : f32 to vector<1x128xf32>
      %75 = arith.mulf %73, %74 : vector<1x128xf32>
      %76 = arith.addf %71, %75 : vector<1x128xf32>
      %c0_41 = arith.constant 0 : index
      %c0_42 = arith.constant 0 : index
      %77 = vector.load %arg8[%c0_41, %c0_42] : memref<1x128xf32, #tpu.memory_space<vmem>>, vector<1x128xf32>
      tpu.vector_store %arg8[%c0_41, %c0_42], %76 {strides = array<i32>} : memref<1x128xf32, #tpu.memory_space<vmem>>, vector<1x128xf32>,
    } else {
    }
    return
  }
  func.func @transform_0(%arg0: i32, %arg1: i32) -> (i32, i32) {
    %c0_i32 = arith.constant 0 : i32
    %c0_i32_0 = arith.constant 0 : i32
    return %arg1, %c0_i32 : i32, i32
  }
  func.func @transform_1(%arg0: i32, %arg1: i32) -> (i32, i32) {
    %0 = arith.muli %arg0, %arg1 : i32
    %c0_i32 = arith.constant 0 : i32
    %c0_i32_0 = arith.constant 0 : i32
    return %0, %c0_i32 : i32, i32
  }
  func.func @transform_2(%arg0: i32, %arg1: i32) -> (i32, i32) {
    %c0_i32 = arith.constant 0 : i32
    %c0_i32_0 = arith.constant 0 : i32
    %c0_i32_1 = arith.constant 0 : i32
    return %c0_i32, %c0_i32_0 : i32, i32
  }
  func.func @transform_3(%arg0: i32, %arg1: i32) -> (i32, i32) {
    %c0_i32 = arith.constant 0 : i32
    %c0_i32_0 = arith.constant 0 : i32
    %c0_i32_1 = arith.constant 0 : i32
    return %c0_i32, %c0_i32_0 : i32, i32
  }
  func.func @transform_4(%arg0: i32, %arg1: i32) -> (i32, i32) {
    %c0_i32 = arith.constant 0 : i32
    %c0_i32_0 = arith.constant 0 : i32
    %c0_i32_1 = arith.constant 0 : i32
    return %c0_i32, %c0_i32_0 : i32, i32
  }
  func.func @transform_5(%arg0: i32, %arg1: i32) -> (i32, i32) {
    %c0_i32 = arith.constant 0 : i32
    %c0_i32_0 = arith.constant 0 : i32
    %c0_i32_1 = arith.constant 0 : i32
    return %c0_i32, %c0_i32_0 : i32, i32
  }
  func.func @transform_6(%arg0: i32, %arg1: i32) -> (i32, i32) {
    %c0_i32 = arith.constant 0 : i32
    %c0_i32_0 = arith.constant 0 : i32
    %c0_i32_1 = arith.constant 0 : i32
    return %c0_i32, %c0_i32_0 : i32, i32
  }
}

module attributes {stable_mosaic.version = 11 : i64} {
  func.func @_connector_loss_kernel(%arg0: i32, %arg1: i32, %arg2: memref<64x128xbf16, #tpu.memory_space<vmem>>, %arg3: memref<64x128xbf16, #tpu.memory_space<vmem>>, %arg4: memref<128x128xbf16, #tpu.memory_space<vmem>>, %arg5: memref<1x128xf32, #tpu.memory_space<vmem>>, %arg6: memref<1x128xf32, #tpu.memory_space<vmem>>, %arg7: memref<1x128xf32, #tpu.memory_space<vmem>>, %arg8: memref<1x128xf32, #tpu.memory_space<vmem>>, %arg9: memref<1x128xf32, #tpu.memory_space<vmem>>, %arg10: memref<1x128xf32, #tpu.memory_space<vmem>>, %arg11: memref<1x128xf32, #tpu.memory_space<vmem>>, %arg12: memref<1x128xf32, #tpu.memory_space<vmem>>) attributes {dimension_semantics = [#tpu.dimension_semantics<arbitrary>, #tpu.dimension_semantics<arbitrary>], iteration_bounds = array<i64: 2, 2>, scalar_prefetch = 0 : i64, scratch_operands = 4 : i64, tpu.core_type = #tpu.core_type<tc>, window_params = [{transform_indices = @transform_0, window_bounds = array<i64: 64, 128>}, {transform_indices = @transform_1, window_bounds = array<i64: 64, 128>}, {pipeline_mode = #tpu.pipeline_mode<synchronous>, transform_indices = @transform_2, window_bounds = array<i64: 128, 128>}, {pipeline_mode = #tpu.pipeline_mode<synchronous>, transform_indices = @transform_3, window_bounds = array<i64: 1, 128>}, {pipeline_mode = #tpu.pipeline_mode<synchronous>, transform_indices = @transform_4, window_bounds = array<i64: 1, 128>}, {pipeline_mode = #tpu.pipeline_mode<synchronous>, transform_indices = @transform_5, window_bounds = array<i64: 1, 128>}, {pipeline_mode = #tpu.pipeline_mode<synchronous>, transform_indices = @transform_6, window_bounds = array<i64: 1, 128>}]} {
    %c0 = arith.constant 0 : index
    %c0_0 = arith.constant 0 : index
    %0 = vector.load %arg2[%c0, %c0_0] : memref<64x128xbf16, #tpu.memory_space<vmem>>, vector<64x128xbf16>
    %c0_1 = arith.constant 0 : index
    %c0_2 = arith.constant 0 : index
    %1 = vector.load %arg4[%c0_1, %c0_2] : memref<128x128xbf16, #tpu.memory_space<vmem>>, vector<128x128xbf16>
    %cst = arith.constant dense<0.000000e+00> : vector<64x128xf32>
    %2 = tpu.matmul %0, %1, %cst {dimension_numbers = #tpu.dot_dimension_numbers<[1], [0], [0], [1], [0, 0, 1, 1], [], []>} : vector<64x128xbf16>, vector<128x128xbf16>, vector<64x128xf32> -> vector<64x128xf32>
    %c0_i32 = arith.constant 0 : i32
    %3 = arith.cmpi eq, %arg0, %c0_i32 : i32
    %c0_i32_3 = arith.constant 0 : i32
    %4 = arith.cmpi eq, %arg1, %c0_i32_3 : i32
    %5 = arith.andi %3, %4 : i1
    %6 = arith.extui %5 : i1 to i32
    %c0_i32_4 = arith.constant 0 : i32
    %7 = arith.cmpi ne, %6, %c0_i32_4 : i32
    scf.if %7 {
      %cst_14 = arith.constant 0.000000e+00 : f32
      %24 = vector.broadcast %cst_14 : f32 to vector<1x128xf32>
      %c0_15 = arith.constant 0 : index
      %c0_16 = arith.constant 0 : index
      %25 = vector.load %arg9[%c0_15, %c0_16] : memref<1x128xf32, #tpu.memory_space<vmem>>, vector<1x128xf32>
      tpu.vector_store %arg9[%c0_15, %c0_16], %24 {strides = array<i32>} : memref<1x128xf32, #tpu.memory_space<vmem>>, vector<1x128xf32>,
      %cst_17 = arith.constant 0.000000e+00 : f32
      %26 = vector.broadcast %cst_17 : f32 to vector<1x128xf32>
      %c0_18 = arith.constant 0 : index
      %c0_19 = arith.constant 0 : index
      %27 = vector.load %arg10[%c0_18, %c0_19] : memref<1x128xf32, #tpu.memory_space<vmem>>, vector<1x128xf32>
      tpu.vector_store %arg10[%c0_18, %c0_19], %26 {strides = array<i32>} : memref<1x128xf32, #tpu.memory_space<vmem>>, vector<1x128xf32>,
    } else {
    }
    %c0_i32_5 = arith.constant 0 : i32
    %8 = arith.cmpi eq, %arg0, %c0_i32_5 : i32
    %9 = arith.extui %8 : i1 to i32
    %c0_i32_6 = arith.constant 0 : i32
    %10 = arith.cmpi ne, %9, %c0_i32_6 : i32
    scf.if %10 {
      %c0_14 = arith.constant 0 : index
      %c0_15 = arith.constant 0 : index
      %24 = vector.load %arg9[%c0_14, %c0_15] : memref<1x128xf32, #tpu.memory_space<vmem>>, vector<1x128xf32>
      %cst_16 = arith.constant dense<0.000000e+00> : vector<128xf32>
      %25 = vector.multi_reduction <add>, %2, %cst_16 [0] : vector<64x128xf32> to vector<128xf32>
      %26 = vector.shape_cast %25 : vector<128xf32> to vector<1x128xf32>
      %27 = arith.addf %24, %26 : vector<1x128xf32>
      %c0_17 = arith.constant 0 : index
      %c0_18 = arith.constant 0 : index
      %28 = vector.load %arg9[%c0_17, %c0_18] : memref<1x128xf32, #tpu.memory_space<vmem>>, vector<1x128xf32>
      tpu.vector_store %arg9[%c0_17, %c0_18], %27 {strides = array<i32>} : memref<1x128xf32, #tpu.memory_space<vmem>>, vector<1x128xf32>,
      %c0_19 = arith.constant 0 : index
      %c0_20 = arith.constant 0 : index
      %29 = vector.load %arg10[%c0_19, %c0_20] : memref<1x128xf32, #tpu.memory_space<vmem>>, vector<1x128xf32>
      %30 = arith.mulf %2, %2 : vector<64x128xf32>
      %cst_21 = arith.constant dense<0.000000e+00> : vector<128xf32>
      %31 = vector.multi_reduction <add>, %30, %cst_21 [0] : vector<64x128xf32> to vector<128xf32>
      %32 = vector.shape_cast %31 : vector<128xf32> to vector<1x128xf32>
      %33 = arith.addf %29, %32 : vector<1x128xf32>
      %c0_22 = arith.constant 0 : index
      %c0_23 = arith.constant 0 : index
      %34 = vector.load %arg10[%c0_22, %c0_23] : memref<1x128xf32, #tpu.memory_space<vmem>>, vector<1x128xf32>
      tpu.vector_store %arg10[%c0_22, %c0_23], %33 {strides = array<i32>} : memref<1x128xf32, #tpu.memory_space<vmem>>, vector<1x128xf32>,
    } else {
    }
    %c0_i32_7 = arith.constant 0 : i32
    %11 = arith.cmpi eq, %arg0, %c0_i32_7 : i32
    %c1_i32 = arith.constant 1 : i32
    %12 = arith.cmpi eq, %arg1, %c1_i32 : i32
    %13 = arith.andi %11, %12 : i1
    %14 = arith.extui %13 : i1 to i32
    %c0_i32_8 = arith.constant 0 : i32
    %15 = arith.cmpi ne, %14, %c0_i32_8 : i32
    scf.if %15 {
      %c0_14 = arith.constant 0 : index
      %c0_15 = arith.constant 0 : index
      %24 = vector.load %arg9[%c0_14, %c0_15] : memref<1x128xf32, #tpu.memory_space<vmem>>, vector<1x128xf32>
      %cst_16 = arith.constant 7.812500e-03 : f32
      %25 = vector.broadcast %cst_16 : f32 to vector<1x128xf32>
      %26 = arith.mulf %24, %25 : vector<1x128xf32>
      %c0_17 = arith.constant 0 : index
      %c0_18 = arith.constant 0 : index
      %27 = vector.load %arg10[%c0_17, %c0_18] : memref<1x128xf32, #tpu.memory_space<vmem>>, vector<1x128xf32>
      %cst_19 = arith.constant 7.812500e-03 : f32
      %28 = vector.broadcast %cst_19 : f32 to vector<1x128xf32>
      %29 = arith.mulf %27, %28 : vector<1x128xf32>
      %30 = arith.mulf %26, %26 : vector<1x128xf32>
      %31 = arith.subf %29, %30 : vector<1x128xf32>
      %cst_20 = arith.constant 0.000000e+00 : f32
      %32 = vector.broadcast %cst_20 : f32 to vector<1x128xf32>
      %33 = arith.maximumf %31, %32 : vector<1x128xf32>
      %c0_21 = arith.constant 0 : index
      %c0_22 = arith.constant 0 : index
      %34 = vector.load %arg5[%c0_21, %c0_22] : memref<1x128xf32, #tpu.memory_space<vmem>>, vector<1x128xf32>
      %cst_23 = arith.constant 9.99999974E-6 : f32
      %35 = vector.broadcast %cst_23 : f32 to vector<1x128xf32>
      %36 = arith.addf %33, %35 : vector<1x128xf32>
      %37 = math.rsqrt %36 : vector<1x128xf32>
      %38 = arith.mulf %34, %37 : vector<1x128xf32>
      %c0_24 = arith.constant 0 : index
      %c0_25 = arith.constant 0 : index
      %39 = vector.load %arg11[%c0_24, %c0_25] : memref<1x128xf32, #tpu.memory_space<vmem>>, vector<1x128xf32>
      tpu.vector_store %arg11[%c0_24, %c0_25], %38 {strides = array<i32>} : memref<1x128xf32, #tpu.memory_space<vmem>>, vector<1x128xf32>,
      %c0_26 = arith.constant 0 : index
      %c0_27 = arith.constant 0 : index
      %40 = vector.load %arg6[%c0_26, %c0_27] : memref<1x128xf32, #tpu.memory_space<vmem>>, vector<1x128xf32>
      %41 = arith.mulf %26, %38 : vector<1x128xf32>
      %42 = arith.subf %40, %41 : vector<1x128xf32>
      %c0_28 = arith.constant 0 : index
      %c0_29 = arith.constant 0 : index
      %43 = vector.load %arg12[%c0_28, %c0_29] : memref<1x128xf32, #tpu.memory_space<vmem>>, vector<1x128xf32>
      tpu.vector_store %arg12[%c0_28, %c0_29], %42 {strides = array<i32>} : memref<1x128xf32, #tpu.memory_space<vmem>>, vector<1x128xf32>,
    } else {
    }
    %c1_i32_9 = arith.constant 1 : i32
    %16 = arith.cmpi eq, %arg0, %c1_i32_9 : i32
    %c0_i32_10 = arith.constant 0 : i32
    %17 = arith.cmpi eq, %arg1, %c0_i32_10 : i32
    %18 = arith.andi %16, %17 : i1
    %19 = arith.extui %18 : i1 to i32
    %c0_i32_11 = arith.constant 0 : i32
    %20 = arith.cmpi ne, %19, %c0_i32_11 : i32
    scf.if %20 {
      %cst_14 = arith.constant 0.000000e+00 : f32
      %24 = vector.broadcast %cst_14 : f32 to vector<1x128xf32>
      %c0_15 = arith.constant 0 : index
      %c0_16 = arith.constant 0 : index
      %25 = vector.load %arg7[%c0_15, %c0_16] : memref<1x128xf32, #tpu.memory_space<vmem>>, vector<1x128xf32>
      tpu.vector_store %arg7[%c0_15, %c0_16], %24 {strides = array<i32>} : memref<1x128xf32, #tpu.memory_space<vmem>>, vector<1x128xf32>,
      %cst_17 = arith.constant 0.000000e+00 : f32
      %26 = vector.broadcast %cst_17 : f32 to vector<1x128xf32>
      %c0_18 = arith.constant 0 : index
      %c0_19 = arith.constant 0 : index
      %27 = vector.load %arg8[%c0_18, %c0_19] : memref<1x128xf32, #tpu.memory_space<vmem>>, vector<1x128xf32>
      tpu.vector_store %arg8[%c0_18, %c0_19], %26 {strides = array<i32>} : memref<1x128xf32, #tpu.memory_space<vmem>>, vector<1x128xf32>,
    } else {
    }
    %c1_i32_12 = arith.constant 1 : i32
    %21 = arith.cmpi eq, %arg0, %c1_i32_12 : i32
    %22 = arith.extui %21 : i1 to i32
    %c0_i32_13 = arith.constant 0 : i32
    %23 = arith.cmpi ne, %22, %c0_i32_13 : i32
    scf.if %23 {
      %c0_14 = arith.constant 0 : index
      %c0_15 = arith.constant 0 : index
      %24 = vector.load %arg11[%c0_14, %c0_15] : memref<1x128xf32, #tpu.memory_space<vmem>>, vector<1x128xf32>
      %25 = vector.broadcast %24 : vector<1x128xf32> to vector<64x128xf32>
      %26 = arith.mulf %2, %25 : vector<64x128xf32>
      %c0_16 = arith.constant 0 : index
      %c0_17 = arith.constant 0 : index
      %27 = vector.load %arg12[%c0_16, %c0_17] : memref<1x128xf32, #tpu.memory_space<vmem>>, vector<1x128xf32>
      %28 = vector.broadcast %27 : vector<1x128xf32> to vector<64x128xf32>
      %29 = arith.addf %26, %28 : vector<64x128xf32>
      %c0_18 = arith.constant 0 : index
      %c0_19 = arith.constant 0 : index
      %30 = vector.load %arg3[%c0_18, %c0_19] : memref<64x128xbf16, #tpu.memory_space<vmem>>, vector<64x128xbf16>
      %31 = arith.extf %30 : vector<64x128xbf16> to vector<64x128xf32>
      %32 = tpu.iota {dimensions = array<i32: 1>} : vector<64x128xi32>
      %c16_i32 = arith.constant 16 : i32
      %33 = vector.broadcast %c16_i32 : i32 to vector<64x128xi32>
      %34 = arith.cmpi slt, %32, %33 : vector<64x128xi32>
      %cst_20 = arith.constant 0.000000e+00 : f32
      %35 = vector.broadcast %cst_20 : f32 to vector<64x128xf32>
      %36 = arith.cmpf ogt, %31, %35 : vector<64x128xf32>
      %cst_21 = arith.constant -1.000000e+00 : f32
      %37 = vector.broadcast %cst_21 : f32 to vector<64x128xf32>
      %38 = arith.cmpf ogt, %29, %37 : vector<64x128xf32>
      %39 = arith.andi %34, %38 : vector<64x128xi1>
      %cst_22 = arith.constant dense<true> : vector<64x128xi1>
      %40 = arith.xori %36, %cst_22 : vector<64x128xi1>
      %41 = arith.andi %39, %40 : vector<64x128xi1>
      %cst_23 = arith.constant 1.000000e+00 : f32
      %42 = vector.broadcast %cst_23 : f32 to vector<64x128xf32>
      %43 = arith.addf %29, %42 : vector<64x128xf32>
      %44 = arith.mulf %43, %43 : vector<64x128xf32>
      %cst_24 = arith.constant 0.000000e+00 : f32
      %45 = vector.broadcast %cst_24 : f32 to vector<64x128xf32>
      %46 = arith.select %41, %44, %45 : vector<64x128xi1>, vector<64x128xf32>
      %cst_25 = arith.constant 1.000000e+00 : f32
      %47 = vector.broadcast %cst_25 : f32 to vector<64x128xf32>
      %48 = arith.cmpf ole, %29, %47 : vector<64x128xf32>
      %49 = arith.andi %34, %48 : vector<64x128xi1>
      %50 = arith.andi %49, %36 : vector<64x128xi1>
      %cst_26 = arith.constant 1.000000e+00 : f32
      %51 = vector.broadcast %cst_26 : f32 to vector<64x128xf32>
      %52 = arith.subf %29, %51 : vector<64x128xf32>
      %53 = arith.mulf %52, %52 : vector<64x128xf32>
      %cst_27 = arith.constant 0.000000e+00 : f32
      %54 = vector.broadcast %cst_27 : f32 to vector<64x128xf32>
      %55 = arith.select %50, %53, %54 : vector<64x128xi1>, vector<64x128xf32>
      %56 = arith.addf %46, %55 : vector<64x128xf32>
      %cst_28 = arith.constant 0.000000e+00 : f32
      %57 = vector.broadcast %cst_28 : f32 to vector<64x128xf32>
      %58 = arith.cmpf ogt, %29, %57 : vector<64x128xf32>
      %59 = arith.xori %58, %36 : vector<64x128xi1>
      %60 = arith.andi %34, %59 : vector<64x128xi1>
      %cst_29 = arith.constant 1.000000e+00 : f32
      %cst_30 = arith.constant 0.000000e+00 : f32
      %61 = vector.broadcast %cst_29 : f32 to vector<64x128xf32>
      %62 = vector.broadcast %cst_30 : f32 to vector<64x128xf32>
      %63 = arith.select %60, %61, %62 : vector<64x128xi1>, vector<64x128xf32>
      %c0_31 = arith.constant 0 : index
      %c0_32 = arith.constant 0 : index
      %64 = vector.load %arg7[%c0_31, %c0_32] : memref<1x128xf32, #tpu.memory_space<vmem>>, vector<1x128xf32>
      %cst_33 = arith.constant dense<0.000000e+00> : vector<128xf32>
      %65 = vector.multi_reduction <add>, %56, %cst_33 [0] : vector<64x128xf32> to vector<128xf32>
      %66 = vector.shape_cast %65 : vector<128xf32> to vector<1x128xf32>
      %cst_34 = arith.constant 9.765625E-4 : f32
      %67 = vector.broadcast %cst_34 : f32 to vector<1x128xf32>
      %68 = arith.mulf %66, %67 : vector<1x128xf32>
      %69 = arith.addf %64, %68 : vector<1x128xf32>
      %c0_35 = arith.constant 0 : index
      %c0_36 = arith.constant 0 : index
      %70 = vector.load %arg7[%c0_35, %c0_36] : memref<1x128xf32, #tpu.memory_space<vmem>>, vector<1x128xf32>
      tpu.vector_store %arg7[%c0_35, %c0_36], %69 {strides = array<i32>} : memref<1x128xf32, #tpu.memory_space<vmem>>, vector<1x128xf32>,
      %c0_37 = arith.constant 0 : index
      %c0_38 = arith.constant 0 : index
      %71 = vector.load %arg8[%c0_37, %c0_38] : memref<1x128xf32, #tpu.memory_space<vmem>>, vector<1x128xf32>
      %cst_39 = arith.constant dense<0.000000e+00> : vector<128xf32>
      %72 = vector.multi_reduction <add>, %63, %cst_39 [0] : vector<64x128xf32> to vector<128xf32>
      %73 = vector.shape_cast %72 : vector<128xf32> to vector<1x128xf32>
      %cst_40 = arith.constant 4.8828125E-4 : f32
      %74 = vector.broadcast %cst_40 : f32 to vector<1x128xf32>
      %75 = arith.mulf %73, %74 : vector<1x128xf32>
      %76 = arith.addf %71, %75 : vector<1x128xf32>
      %c0_41 = arith.constant 0 : index
      %c0_42 = arith.constant 0 : index
      %77 = vector.load %arg8[%c0_41, %c0_42] : memref<1x128xf32, #tpu.memory_space<vmem>>, vector<1x128xf32>
      tpu.vector_store %arg8[%c0_41, %c0_42], %76 {strides = array<i32>} : memref<1x128xf32, #tpu.memory_space<vmem>>, vector<1x128xf32>,
    } else {
    }
    return
  }
  func.func @transform_0(%arg0: i32, %arg1: i32) -> (i32, i32) {
    %c0_i32 = arith.constant 0 : i32
    %c0_i32_0 = arith.constant 0 : i32
    return %arg1, %c0_i32 : i32, i32
  }
  func.func @transform_1(%arg0: i32, %arg1: i32) -> (i32, i32) {
    %0 = arith.muli %arg0, %arg1 : i32
    %c0_i32 = arith.constant 0 : i32
    %c0_i32_0 = arith.constant 0 : i32
    return %0, %c0_i32 : i32, i32
  }
  func.func @transform_2(%arg0: i32, %arg1: i32) -> (i32, i32) {
    %c0_i32 = arith.constant 0 : i32
    %c0_i32_0 = arith.constant 0 : i32
    %c0_i32_1 = arith.constant 0 : i32
    return %c0_i32, %c0_i32_0 : i32, i32
  }
  func.func @transform_3(%arg0: i32, %arg1: i32) -> (i32, i32) {
    %c0_i32 = arith.constant 0 : i32
    %c0_i32_0 = arith.constant 0 : i32
    %c0_i32_1 = arith.constant 0 : i32
    return %c0_i32, %c0_i32_0 : i32, i32
  }
  func.func @transform_4(%arg0: i32, %arg1: i32) -> (i32, i32) {
    %c0_i32 = arith.constant 0 : i32
    %c0_i32_0 = arith.constant 0 : i32
    %c0_i32_1 = arith.constant 0 : i32
    return %c0_i32, %c0_i32_0 : i32, i32
  }
  func.func @transform_5(%arg0: i32, %arg1: i32) -> (i32, i32) {
    %c0_i32 = arith.constant 0 : i32
    %c0_i32_0 = arith.constant 0 : i32
    %c0_i32_1 = arith.constant 0 : i32
    return %c0_i32, %c0_i32_0 : i32, i32
  }
  func.func @transform_6(%arg0: i32, %arg1: i32) -> (i32, i32) {
    %c0_i32 = arith.constant 0 : i32
    %c0_i32_0 = arith.constant 0 : i32
    %c0_i32_1 = arith.constant 0 : i32
    return %c0_i32, %c0_i32_0 : i32, i32
  }
}

module attributes {stable_mosaic.version = 11 : i64} {
  func.func @_connector_loss_kernel(%arg0: i32, %arg1: i32, %arg2: memref<32x128xbf16, #tpu.memory_space<vmem>>, %arg3: memref<32x128xbf16, #tpu.memory_space<vmem>>, %arg4: memref<128x128xbf16, #tpu.memory_space<vmem>>, %arg5: memref<1x128xf32, #tpu.memory_space<vmem>>, %arg6: memref<1x128xf32, #tpu.memory_space<vmem>>, %arg7: memref<1x128xf32, #tpu.memory_space<vmem>>, %arg8: memref<1x128xf32, #tpu.memory_space<vmem>>, %arg9: memref<1x128xf32, #tpu.memory_space<vmem>>, %arg10: memref<1x128xf32, #tpu.memory_space<vmem>>, %arg11: memref<1x128xf32, #tpu.memory_space<vmem>>, %arg12: memref<1x128xf32, #tpu.memory_space<vmem>>) attributes {dimension_semantics = [#tpu.dimension_semantics<arbitrary>, #tpu.dimension_semantics<arbitrary>], iteration_bounds = array<i64: 2, 1>, scalar_prefetch = 0 : i64, scratch_operands = 4 : i64, tpu.core_type = #tpu.core_type<tc>, window_params = [{transform_indices = @transform_0, window_bounds = array<i64: 32, 128>}, {transform_indices = @transform_1, window_bounds = array<i64: 32, 128>}, {pipeline_mode = #tpu.pipeline_mode<synchronous>, transform_indices = @transform_2, window_bounds = array<i64: 128, 128>}, {pipeline_mode = #tpu.pipeline_mode<synchronous>, transform_indices = @transform_3, window_bounds = array<i64: 1, 128>}, {pipeline_mode = #tpu.pipeline_mode<synchronous>, transform_indices = @transform_4, window_bounds = array<i64: 1, 128>}, {pipeline_mode = #tpu.pipeline_mode<synchronous>, transform_indices = @transform_5, window_bounds = array<i64: 1, 128>}, {pipeline_mode = #tpu.pipeline_mode<synchronous>, transform_indices = @transform_6, window_bounds = array<i64: 1, 128>}]} {
    %c0 = arith.constant 0 : index
    %c0_0 = arith.constant 0 : index
    %0 = vector.load %arg2[%c0, %c0_0] : memref<32x128xbf16, #tpu.memory_space<vmem>>, vector<32x128xbf16>
    %c0_1 = arith.constant 0 : index
    %c0_2 = arith.constant 0 : index
    %1 = vector.load %arg4[%c0_1, %c0_2] : memref<128x128xbf16, #tpu.memory_space<vmem>>, vector<128x128xbf16>
    %cst = arith.constant dense<0.000000e+00> : vector<32x128xf32>
    %2 = tpu.matmul %0, %1, %cst {dimension_numbers = #tpu.dot_dimension_numbers<[1], [0], [0], [1], [0, 0, 1, 1], [], []>} : vector<32x128xbf16>, vector<128x128xbf16>, vector<32x128xf32> -> vector<32x128xf32>
    %c0_i32 = arith.constant 0 : i32
    %3 = arith.cmpi eq, %arg0, %c0_i32 : i32
    %c0_i32_3 = arith.constant 0 : i32
    %4 = arith.cmpi eq, %arg1, %c0_i32_3 : i32
    %5 = arith.andi %3, %4 : i1
    %6 = arith.extui %5 : i1 to i32
    %c0_i32_4 = arith.constant 0 : i32
    %7 = arith.cmpi ne, %6, %c0_i32_4 : i32
    scf.if %7 {
      %cst_14 = arith.constant 0.000000e+00 : f32
      %24 = vector.broadcast %cst_14 : f32 to vector<1x128xf32>
      %c0_15 = arith.constant 0 : index
      %c0_16 = arith.constant 0 : index
      %25 = vector.load %arg9[%c0_15, %c0_16] : memref<1x128xf32, #tpu.memory_space<vmem>>, vector<1x128xf32>
      tpu.vector_store %arg9[%c0_15, %c0_16], %24 {strides = array<i32>} : memref<1x128xf32, #tpu.memory_space<vmem>>, vector<1x128xf32>,
      %cst_17 = arith.constant 0.000000e+00 : f32
      %26 = vector.broadcast %cst_17 : f32 to vector<1x128xf32>
      %c0_18 = arith.constant 0 : index
      %c0_19 = arith.constant 0 : index
      %27 = vector.load %arg10[%c0_18, %c0_19] : memref<1x128xf32, #tpu.memory_space<vmem>>, vector<1x128xf32>
      tpu.vector_store %arg10[%c0_18, %c0_19], %26 {strides = array<i32>} : memref<1x128xf32, #tpu.memory_space<vmem>>, vector<1x128xf32>,
    } else {
    }
    %c0_i32_5 = arith.constant 0 : i32
    %8 = arith.cmpi eq, %arg0, %c0_i32_5 : i32
    %9 = arith.extui %8 : i1 to i32
    %c0_i32_6 = arith.constant 0 : i32
    %10 = arith.cmpi ne, %9, %c0_i32_6 : i32
    scf.if %10 {
      %c0_14 = arith.constant 0 : index
      %c0_15 = arith.constant 0 : index
      %24 = vector.load %arg9[%c0_14, %c0_15] : memref<1x128xf32, #tpu.memory_space<vmem>>, vector<1x128xf32>
      %cst_16 = arith.constant dense<0.000000e+00> : vector<128xf32>
      %25 = vector.multi_reduction <add>, %2, %cst_16 [0] : vector<32x128xf32> to vector<128xf32>
      %26 = vector.shape_cast %25 : vector<128xf32> to vector<1x128xf32>
      %27 = arith.addf %24, %26 : vector<1x128xf32>
      %c0_17 = arith.constant 0 : index
      %c0_18 = arith.constant 0 : index
      %28 = vector.load %arg9[%c0_17, %c0_18] : memref<1x128xf32, #tpu.memory_space<vmem>>, vector<1x128xf32>
      tpu.vector_store %arg9[%c0_17, %c0_18], %27 {strides = array<i32>} : memref<1x128xf32, #tpu.memory_space<vmem>>, vector<1x128xf32>,
      %c0_19 = arith.constant 0 : index
      %c0_20 = arith.constant 0 : index
      %29 = vector.load %arg10[%c0_19, %c0_20] : memref<1x128xf32, #tpu.memory_space<vmem>>, vector<1x128xf32>
      %30 = arith.mulf %2, %2 : vector<32x128xf32>
      %cst_21 = arith.constant dense<0.000000e+00> : vector<128xf32>
      %31 = vector.multi_reduction <add>, %30, %cst_21 [0] : vector<32x128xf32> to vector<128xf32>
      %32 = vector.shape_cast %31 : vector<128xf32> to vector<1x128xf32>
      %33 = arith.addf %29, %32 : vector<1x128xf32>
      %c0_22 = arith.constant 0 : index
      %c0_23 = arith.constant 0 : index
      %34 = vector.load %arg10[%c0_22, %c0_23] : memref<1x128xf32, #tpu.memory_space<vmem>>, vector<1x128xf32>
      tpu.vector_store %arg10[%c0_22, %c0_23], %33 {strides = array<i32>} : memref<1x128xf32, #tpu.memory_space<vmem>>, vector<1x128xf32>,
    } else {
    }
    %c0_i32_7 = arith.constant 0 : i32
    %11 = arith.cmpi eq, %arg0, %c0_i32_7 : i32
    %c0_i32_8 = arith.constant 0 : i32
    %12 = arith.cmpi eq, %arg1, %c0_i32_8 : i32
    %13 = arith.andi %11, %12 : i1
    %14 = arith.extui %13 : i1 to i32
    %c0_i32_9 = arith.constant 0 : i32
    %15 = arith.cmpi ne, %14, %c0_i32_9 : i32
    scf.if %15 {
      %c0_14 = arith.constant 0 : index
      %c0_15 = arith.constant 0 : index
      %24 = vector.load %arg9[%c0_14, %c0_15] : memref<1x128xf32, #tpu.memory_space<vmem>>, vector<1x128xf32>
      %cst_16 = arith.constant 3.125000e-02 : f32
      %25 = vector.broadcast %cst_16 : f32 to vector<1x128xf32>
      %26 = arith.mulf %24, %25 : vector<1x128xf32>
      %c0_17 = arith.constant 0 : index
      %c0_18 = arith.constant 0 : index
      %27 = vector.load %arg10[%c0_17, %c0_18] : memref<1x128xf32, #tpu.memory_space<vmem>>, vector<1x128xf32>
      %cst_19 = arith.constant 3.125000e-02 : f32
      %28 = vector.broadcast %cst_19 : f32 to vector<1x128xf32>
      %29 = arith.mulf %27, %28 : vector<1x128xf32>
      %30 = arith.mulf %26, %26 : vector<1x128xf32>
      %31 = arith.subf %29, %30 : vector<1x128xf32>
      %cst_20 = arith.constant 0.000000e+00 : f32
      %32 = vector.broadcast %cst_20 : f32 to vector<1x128xf32>
      %33 = arith.maximumf %31, %32 : vector<1x128xf32>
      %c0_21 = arith.constant 0 : index
      %c0_22 = arith.constant 0 : index
      %34 = vector.load %arg5[%c0_21, %c0_22] : memref<1x128xf32, #tpu.memory_space<vmem>>, vector<1x128xf32>
      %cst_23 = arith.constant 9.99999974E-6 : f32
      %35 = vector.broadcast %cst_23 : f32 to vector<1x128xf32>
      %36 = arith.addf %33, %35 : vector<1x128xf32>
      %37 = math.rsqrt %36 : vector<1x128xf32>
      %38 = arith.mulf %34, %37 : vector<1x128xf32>
      %c0_24 = arith.constant 0 : index
      %c0_25 = arith.constant 0 : index
      %39 = vector.load %arg11[%c0_24, %c0_25] : memref<1x128xf32, #tpu.memory_space<vmem>>, vector<1x128xf32>
      tpu.vector_store %arg11[%c0_24, %c0_25], %38 {strides = array<i32>} : memref<1x128xf32, #tpu.memory_space<vmem>>, vector<1x128xf32>,
      %c0_26 = arith.constant 0 : index
      %c0_27 = arith.constant 0 : index
      %40 = vector.load %arg6[%c0_26, %c0_27] : memref<1x128xf32, #tpu.memory_space<vmem>>, vector<1x128xf32>
      %41 = arith.mulf %26, %38 : vector<1x128xf32>
      %42 = arith.subf %40, %41 : vector<1x128xf32>
      %c0_28 = arith.constant 0 : index
      %c0_29 = arith.constant 0 : index
      %43 = vector.load %arg12[%c0_28, %c0_29] : memref<1x128xf32, #tpu.memory_space<vmem>>, vector<1x128xf32>
      tpu.vector_store %arg12[%c0_28, %c0_29], %42 {strides = array<i32>} : memref<1x128xf32, #tpu.memory_space<vmem>>, vector<1x128xf32>,
    } else {
    }
    %c1_i32 = arith.constant 1 : i32
    %16 = arith.cmpi eq, %arg0, %c1_i32 : i32
    %c0_i32_10 = arith.constant 0 : i32
    %17 = arith.cmpi eq, %arg1, %c0_i32_10 : i32
    %18 = arith.andi %16, %17 : i1
    %19 = arith.extui %18 : i1 to i32
    %c0_i32_11 = arith.constant 0 : i32
    %20 = arith.cmpi ne, %19, %c0_i32_11 : i32
    scf.if %20 {
      %cst_14 = arith.constant 0.000000e+00 : f32
      %24 = vector.broadcast %cst_14 : f32 to vector<1x128xf32>
      %c0_15 = arith.constant 0 : index
      %c0_16 = arith.constant 0 : index
      %25 = vector.load %arg7[%c0_15, %c0_16] : memref<1x128xf32, #tpu.memory_space<vmem>>, vector<1x128xf32>
      tpu.vector_store %arg7[%c0_15, %c0_16], %24 {strides = array<i32>} : memref<1x128xf32, #tpu.memory_space<vmem>>, vector<1x128xf32>,
      %cst_17 = arith.constant 0.000000e+00 : f32
      %26 = vector.broadcast %cst_17 : f32 to vector<1x128xf32>
      %c0_18 = arith.constant 0 : index
      %c0_19 = arith.constant 0 : index
      %27 = vector.load %arg8[%c0_18, %c0_19] : memref<1x128xf32, #tpu.memory_space<vmem>>, vector<1x128xf32>
      tpu.vector_store %arg8[%c0_18, %c0_19], %26 {strides = array<i32>} : memref<1x128xf32, #tpu.memory_space<vmem>>, vector<1x128xf32>,
    } else {
    }
    %c1_i32_12 = arith.constant 1 : i32
    %21 = arith.cmpi eq, %arg0, %c1_i32_12 : i32
    %22 = arith.extui %21 : i1 to i32
    %c0_i32_13 = arith.constant 0 : i32
    %23 = arith.cmpi ne, %22, %c0_i32_13 : i32
    scf.if %23 {
      %c0_14 = arith.constant 0 : index
      %c0_15 = arith.constant 0 : index
      %24 = vector.load %arg11[%c0_14, %c0_15] : memref<1x128xf32, #tpu.memory_space<vmem>>, vector<1x128xf32>
      %25 = vector.broadcast %24 : vector<1x128xf32> to vector<32x128xf32>
      %26 = arith.mulf %2, %25 : vector<32x128xf32>
      %c0_16 = arith.constant 0 : index
      %c0_17 = arith.constant 0 : index
      %27 = vector.load %arg12[%c0_16, %c0_17] : memref<1x128xf32, #tpu.memory_space<vmem>>, vector<1x128xf32>
      %28 = vector.broadcast %27 : vector<1x128xf32> to vector<32x128xf32>
      %29 = arith.addf %26, %28 : vector<32x128xf32>
      %c0_18 = arith.constant 0 : index
      %c0_19 = arith.constant 0 : index
      %30 = vector.load %arg3[%c0_18, %c0_19] : memref<32x128xbf16, #tpu.memory_space<vmem>>, vector<32x128xbf16>
      %31 = arith.extf %30 : vector<32x128xbf16> to vector<32x128xf32>
      %32 = tpu.iota {dimensions = array<i32: 1>} : vector<32x128xi32>
      %c32_i32 = arith.constant 32 : i32
      %33 = vector.broadcast %c32_i32 : i32 to vector<32x128xi32>
      %34 = arith.cmpi slt, %32, %33 : vector<32x128xi32>
      %cst_20 = arith.constant 0.000000e+00 : f32
      %35 = vector.broadcast %cst_20 : f32 to vector<32x128xf32>
      %36 = arith.cmpf ogt, %31, %35 : vector<32x128xf32>
      %cst_21 = arith.constant -1.000000e+00 : f32
      %37 = vector.broadcast %cst_21 : f32 to vector<32x128xf32>
      %38 = arith.cmpf ogt, %29, %37 : vector<32x128xf32>
      %39 = arith.andi %34, %38 : vector<32x128xi1>
      %cst_22 = arith.constant dense<true> : vector<32x128xi1>
      %40 = arith.xori %36, %cst_22 : vector<32x128xi1>
      %41 = arith.andi %39, %40 : vector<32x128xi1>
      %cst_23 = arith.constant 1.000000e+00 : f32
      %42 = vector.broadcast %cst_23 : f32 to vector<32x128xf32>
      %43 = arith.addf %29, %42 : vector<32x128xf32>
      %44 = arith.mulf %43, %43 : vector<32x128xf32>
      %cst_24 = arith.constant 0.000000e+00 : f32
      %45 = vector.broadcast %cst_24 : f32 to vector<32x128xf32>
      %46 = arith.select %41, %44, %45 : vector<32x128xi1>, vector<32x128xf32>
      %cst_25 = arith.constant 1.000000e+00 : f32
      %47 = vector.broadcast %cst_25 : f32 to vector<32x128xf32>
      %48 = arith.cmpf ole, %29, %47 : vector<32x128xf32>
      %49 = arith.andi %34, %48 : vector<32x128xi1>
      %50 = arith.andi %49, %36 : vector<32x128xi1>
      %cst_26 = arith.constant 1.000000e+00 : f32
      %51 = vector.broadcast %cst_26 : f32 to vector<32x128xf32>
      %52 = arith.subf %29, %51 : vector<32x128xf32>
      %53 = arith.mulf %52, %52 : vector<32x128xf32>
      %cst_27 = arith.constant 0.000000e+00 : f32
      %54 = vector.broadcast %cst_27 : f32 to vector<32x128xf32>
      %55 = arith.select %50, %53, %54 : vector<32x128xi1>, vector<32x128xf32>
      %56 = arith.addf %46, %55 : vector<32x128xf32>
      %cst_28 = arith.constant 0.000000e+00 : f32
      %57 = vector.broadcast %cst_28 : f32 to vector<32x128xf32>
      %58 = arith.cmpf ogt, %29, %57 : vector<32x128xf32>
      %59 = arith.xori %58, %36 : vector<32x128xi1>
      %60 = arith.andi %34, %59 : vector<32x128xi1>
      %cst_29 = arith.constant 1.000000e+00 : f32
      %cst_30 = arith.constant 0.000000e+00 : f32
      %61 = vector.broadcast %cst_29 : f32 to vector<32x128xf32>
      %62 = vector.broadcast %cst_30 : f32 to vector<32x128xf32>
      %63 = arith.select %60, %61, %62 : vector<32x128xi1>, vector<32x128xf32>
      %c0_31 = arith.constant 0 : index
      %c0_32 = arith.constant 0 : index
      %64 = vector.load %arg7[%c0_31, %c0_32] : memref<1x128xf32, #tpu.memory_space<vmem>>, vector<1x128xf32>
      %cst_33 = arith.constant dense<0.000000e+00> : vector<128xf32>
      %65 = vector.multi_reduction <add>, %56, %cst_33 [0] : vector<32x128xf32> to vector<128xf32>
      %66 = vector.shape_cast %65 : vector<128xf32> to vector<1x128xf32>
      %cst_34 = arith.constant 0.001953125 : f32
      %67 = vector.broadcast %cst_34 : f32 to vector<1x128xf32>
      %68 = arith.mulf %66, %67 : vector<1x128xf32>
      %69 = arith.addf %64, %68 : vector<1x128xf32>
      %c0_35 = arith.constant 0 : index
      %c0_36 = arith.constant 0 : index
      %70 = vector.load %arg7[%c0_35, %c0_36] : memref<1x128xf32, #tpu.memory_space<vmem>>, vector<1x128xf32>
      tpu.vector_store %arg7[%c0_35, %c0_36], %69 {strides = array<i32>} : memref<1x128xf32, #tpu.memory_space<vmem>>, vector<1x128xf32>,
      %c0_37 = arith.constant 0 : index
      %c0_38 = arith.constant 0 : index
      %71 = vector.load %arg8[%c0_37, %c0_38] : memref<1x128xf32, #tpu.memory_space<vmem>>, vector<1x128xf32>
      %cst_39 = arith.constant dense<0.000000e+00> : vector<128xf32>
      %72 = vector.multi_reduction <add>, %63, %cst_39 [0] : vector<32x128xf32> to vector<128xf32>
      %73 = vector.shape_cast %72 : vector<128xf32> to vector<1x128xf32>
      %cst_40 = arith.constant 9.765625E-4 : f32
      %74 = vector.broadcast %cst_40 : f32 to vector<1x128xf32>
      %75 = arith.mulf %73, %74 : vector<1x128xf32>
      %76 = arith.addf %71, %75 : vector<1x128xf32>
      %c0_41 = arith.constant 0 : index
      %c0_42 = arith.constant 0 : index
      %77 = vector.load %arg8[%c0_41, %c0_42] : memref<1x128xf32, #tpu.memory_space<vmem>>, vector<1x128xf32>
      tpu.vector_store %arg8[%c0_41, %c0_42], %76 {strides = array<i32>} : memref<1x128xf32, #tpu.memory_space<vmem>>, vector<1x128xf32>,
    } else {
    }
    return
  }
  func.func @transform_0(%arg0: i32, %arg1: i32) -> (i32, i32) {
    %c0_i32 = arith.constant 0 : i32
    %c0_i32_0 = arith.constant 0 : i32
    return %arg1, %c0_i32 : i32, i32
  }
  func.func @transform_1(%arg0: i32, %arg1: i32) -> (i32, i32) {
    %0 = arith.muli %arg0, %arg1 : i32
    %c0_i32 = arith.constant 0 : i32
    %c0_i32_0 = arith.constant 0 : i32
    return %0, %c0_i32 : i32, i32
  }
  func.func @transform_2(%arg0: i32, %arg1: i32) -> (i32, i32) {
    %c0_i32 = arith.constant 0 : i32
    %c0_i32_0 = arith.constant 0 : i32
    %c0_i32_1 = arith.constant 0 : i32
    return %c0_i32, %c0_i32_0 : i32, i32
  }
  func.func @transform_3(%arg0: i32, %arg1: i32) -> (i32, i32) {
    %c0_i32 = arith.constant 0 : i32
    %c0_i32_0 = arith.constant 0 : i32
    %c0_i32_1 = arith.constant 0 : i32
    return %c0_i32, %c0_i32_0 : i32, i32
  }
  func.func @transform_4(%arg0: i32, %arg1: i32) -> (i32, i32) {
    %c0_i32 = arith.constant 0 : i32
    %c0_i32_0 = arith.constant 0 : i32
    %c0_i32_1 = arith.constant 0 : i32
    return %c0_i32, %c0_i32_0 : i32, i32
  }
  func.func @transform_5(%arg0: i32, %arg1: i32) -> (i32, i32) {
    %c0_i32 = arith.constant 0 : i32
    %c0_i32_0 = arith.constant 0 : i32
    %c0_i32_1 = arith.constant 0 : i32
    return %c0_i32, %c0_i32_0 : i32, i32
  }
  func.func @transform_6(%arg0: i32, %arg1: i32) -> (i32, i32) {
    %c0_i32 = arith.constant 0 : i32
    %c0_i32_0 = arith.constant 0 : i32
    %c0_i32_1 = arith.constant 0 : i32
    return %c0_i32, %c0_i32_0 : i32, i32
  }
}

module attributes {stable_mosaic.version = 11 : i64} {
  func.func @_head_kernel(%arg0: memref<2x32xbf16, #tpu.memory_space<vmem>>, %arg1: memref<2x32xbf16, #tpu.memory_space<vmem>>, %arg2: memref<32x128xbf16, #tpu.memory_space<vmem>>, %arg3: memref<1x128xf32, #tpu.memory_space<vmem>>, %arg4: memref<2x1xi32, #tpu.memory_space<vmem>>, %arg5: memref<1x1xf32, #tpu.memory_space<smem>>, %arg6: memref<1x1xf32, #tpu.memory_space<smem>>) attributes {dimension_semantics = [], scalar_prefetch = 0 : i64, scratch_operands = 0 : i64, tpu.core_type = #tpu.core_type<tc>} {
    %c0 = arith.constant 0 : index
    %c0_0 = arith.constant 0 : index
    %0 = vector.load %arg0[%c0, %c0_0] : memref<2x32xbf16, #tpu.memory_space<vmem>>, vector<2x32xbf16>
    %c0_1 = arith.constant 0 : index
    %c0_2 = arith.constant 0 : index
    %1 = vector.load %arg2[%c0_1, %c0_2] : memref<32x128xbf16, #tpu.memory_space<vmem>>, vector<32x128xbf16>
    %cst = arith.constant dense<0.000000e+00> : vector<2x128xf32>
    %2 = tpu.matmul %0, %1, %cst {dimension_numbers = #tpu.dot_dimension_numbers<[1], [0], [0], [1], [0, 0, 1, 1], [], []>} : vector<2x32xbf16>, vector<32x128xbf16>, vector<2x128xf32> -> vector<2x128xf32>
    %c0_3 = arith.constant 0 : index
    %c0_4 = arith.constant 0 : index
    %3 = vector.load %arg3[%c0_3, %c0_4] : memref<1x128xf32, #tpu.memory_space<vmem>>, vector<1x128xf32>
    %4 = vector.broadcast %3 : vector<1x128xf32> to vector<2x128xf32>
    %5 = arith.addf %2, %4 : vector<2x128xf32>
    %6 = tpu.iota {dimensions = array<i32: 1>} : vector<2x128xi32>
    %c10_i32 = arith.constant 10 : i32
    %7 = vector.broadcast %c10_i32 : i32 to vector<2x128xi32>
    %8 = arith.cmpi slt, %6, %7 : vector<2x128xi32>
    %cst_5 = arith.constant -1.000000e+30 : f32
    %9 = vector.broadcast %cst_5 : f32 to vector<2x128xf32>
    %10 = arith.select %8, %5, %9 : vector<2x128xi1>, vector<2x128xf32>
    %cst_6 = arith.constant dense<0xFF800000> : vector<2xf32>
    %11 = vector.multi_reduction <maximumf>, %10, %cst_6 [1] : vector<2x128xf32> to vector<2xf32>
    %12 = vector.shape_cast %11 : vector<2xf32> to vector<2x1xf32>
    %13 = vector.broadcast %12 : vector<2x1xf32> to vector<2x128xf32>
    %14 = arith.subf %10, %13 : vector<2x128xf32>
    %15 = math.exp %14 : vector<2x128xf32>
    %cst_7 = arith.constant 0.000000e+00 : f32
    %16 = vector.broadcast %cst_7 : f32 to vector<2x128xf32>
    %17 = arith.select %8, %15, %16 : vector<2x128xi1>, vector<2x128xf32>
    %cst_8 = arith.constant dense<0.000000e+00> : vector<2xf32>
    %18 = vector.multi_reduction <add>, %17, %cst_8 [1] : vector<2x128xf32> to vector<2xf32>
    %19 = vector.shape_cast %18 : vector<2xf32> to vector<2x1xf32>
    %20 = math.log %19 : vector<2x1xf32>
    %21 = arith.addf %12, %20 : vector<2x1xf32>
    %c0_9 = arith.constant 0 : index
    %c0_10 = arith.constant 0 : index
    %22 = vector.load %arg4[%c0_9, %c0_10] : memref<2x1xi32, #tpu.memory_space<vmem>>, vector<2x1xi32>
    %23 = vector.broadcast %22 : vector<2x1xi32> to vector<2x128xi32>
    %24 = arith.cmpi eq, %6, %23 : vector<2x128xi32>
    %25 = vector.broadcast %21 : vector<2x1xf32> to vector<2x128xf32>
    %26 = arith.subf %25, %10 : vector<2x128xf32>
    %cst_11 = arith.constant 0.000000e+00 : f32
    %27 = vector.broadcast %cst_11 : f32 to vector<2x128xf32>
    %28 = arith.select %24, %26, %27 : vector<2x128xi1>, vector<2x128xf32>
    %cst_12 = arith.constant dense<0.000000e+00> : vector<2xf32>
    %29 = vector.multi_reduction <add>, %28, %cst_12 [1] : vector<2x128xf32> to vector<2xf32>
    %30 = vector.shape_cast %29 : vector<2xf32> to vector<2x1xf32>
    %31 = vector.shape_cast %30 : vector<2x1xf32> to vector<1x2x1xf32>
    %cst_13 = arith.constant dense<0.000000e+00> : vector<1xf32>
    %32 = vector.multi_reduction <add>, %31, %cst_13 [1, 2] : vector<1x2x1xf32> to vector<1xf32>
    %33 = vector.shape_cast %32 : vector<1xf32> to vector<1x1x1xf32>
    %34 = vector.extract %33[0, 0, 0] : f32 from vector<1x1x1xf32>
    %cst_14 = arith.constant 2.000000e+00 : f32
    %35 = arith.divf %34, %cst_14 : f32
    %c0_15 = arith.constant 0 : index
    %c0_16 = arith.constant 0 : index
    %36 = memref.load %arg5[%c0_15, %c0_16] : memref<1x1xf32, #tpu.memory_space<smem>>
    memref.store %35, %arg5[%c0_15, %c0_16] : memref<1x1xf32, #tpu.memory_space<smem>>
    %c0_17 = arith.constant 0 : index
    %c0_18 = arith.constant 0 : index
    %37 = vector.load %arg0[%c0_17, %c0_18] : memref<2x32xbf16, #tpu.memory_space<vmem>>, vector<2x32xbf16>
    %38 = arith.extf %37 : vector<2x32xbf16> to vector<2x32xf32>
    %c0_19 = arith.constant 0 : index
    %c0_20 = arith.constant 0 : index
    %39 = vector.load %arg1[%c0_19, %c0_20] : memref<2x32xbf16, #tpu.memory_space<vmem>>, vector<2x32xbf16>
    %40 = arith.extf %39 : vector<2x32xbf16> to vector<2x32xf32>
    %cst_21 = arith.constant dense<0.000000e+00> : vector<2xf32>
    %41 = vector.multi_reduction <add>, %38, %cst_21 [1] : vector<2x32xf32> to vector<2xf32>
    %42 = vector.shape_cast %41 : vector<2xf32> to vector<2x1xf32>
    %cst_22 = arith.constant 3.200000e+01 : f32
    %43 = vector.broadcast %cst_22 : f32 to vector<2x1xf32>
    %44 = arith.divf %42, %43 : vector<2x1xf32>
    %45 = vector.broadcast %44 : vector<2x1xf32> to vector<2x32xf32>
    %46 = arith.subf %38, %45 : vector<2x32xf32>
    %cst_23 = arith.constant dense<0.000000e+00> : vector<2xf32>
    %47 = vector.multi_reduction <add>, %40, %cst_23 [1] : vector<2x32xf32> to vector<2xf32>
    %48 = vector.shape_cast %47 : vector<2xf32> to vector<2x1xf32>
    %cst_24 = arith.constant 3.200000e+01 : f32
    %49 = vector.broadcast %cst_24 : f32 to vector<2x1xf32>
    %50 = arith.divf %48, %49 : vector<2x1xf32>
    %51 = vector.broadcast %50 : vector<2x1xf32> to vector<2x32xf32>
    %52 = arith.subf %40, %51 : vector<2x32xf32>
    %53 = arith.subf %52, %46 : vector<2x32xf32>
    %54 = arith.mulf %53, %53 : vector<2x32xf32>
    %55 = vector.shape_cast %54 : vector<2x32xf32> to vector<1x2x32xf32>
    %cst_25 = arith.constant dense<0.000000e+00> : vector<1xf32>
    %56 = vector.multi_reduction <add>, %55, %cst_25 [1, 2] : vector<1x2x32xf32> to vector<1xf32>
    %57 = vector.shape_cast %56 : vector<1xf32> to vector<1x1x1xf32>
    %58 = vector.extract %57[0, 0, 0] : f32 from vector<1x1x1xf32>
    %cst_26 = arith.constant 6.400000e+01 : f32
    %59 = arith.divf %58, %cst_26 : f32
    %cst_27 = arith.constant 3.000000e+00 : f32
    %60 = arith.mulf %59, %cst_27 : f32
    %c0_28 = arith.constant 0 : index
    %c0_29 = arith.constant 0 : index
    %61 = memref.load %arg6[%c0_28, %c0_29] : memref<1x1xf32, #tpu.memory_space<smem>>
    memref.store %60, %arg6[%c0_28, %c0_29] : memref<1x1xf32, #tpu.memory_space<smem>>
    return
  }
}

</mosaic_0001>

<llo_original>
// kernel: ab_distill_forward.5
$region0: #{ab_distill_forward.5}
  #allocation0 [shape = 'u32[]', space=smem, size = 0x4, offset = 0x4, fixed_abs, tag = 'smem constant byte address 0x4 - core index']
  #allocation1 [shape = 'u32[72,128]{1,0:T(1,128)}', space=vmem, size = 0x9000, scoped, tag = 'internal scratch']
  #allocation2 [shape = 'f32[1,128]{1,0:T(1,128)}', space=vmem, size = 0x200, scoped, tag = 'scratch operand']
  #allocation3 [shape = 'f32[1,128]{1,0:T(1,128)}', space=vmem, size = 0x200, scoped, tag = 'scratch operand']
  #allocation4 [shape = 'f32[1,128]{1,0:T(1,128)}', space=vmem, size = 0x200, scoped, tag = 'scratch operand']
  #allocation5 [shape = 'f32[1,128]{1,0:T(1,128)}', space=vmem, size = 0x200, scoped, tag = 'scratch operand']
  %s0 = inlined_call_operand.vmem [shape: bf16[128,128], index: 0, kind: input, shape index: {}]
  %s1 = inlined_call_operand.vmem [shape: bf16[128,128], index: 1, kind: input, shape index: {}]
  %s2 = inlined_call_operand.vmem [shape: bf16[128,128], index: 2, kind: input, shape index: {}]
  %s3 = inlined_call_operand.vmem [shape: f32[1,128], index: 3, kind: input, shape index: {}]
  %s4 = inlined_call_operand.vmem [shape: f32[1,128], index: 4, kind: input, shape index: {}]
  %s5 = inlined_call_operand.vmem [shape: f32[1,128], index: 5, kind: output, shape index: {0}]
  %s6 = inlined_call_operand.vmem [shape: f32[1,128], index: 6, kind: output, shape index: {1}]
  %7 = xla_tuple %s5, %s6
  %s8 = sld [smem:[#allocation0]]
  $region81: #{ab_distill_forward.5} parent=0
    _
  %s10 = ssub.s32 1, %s8
  %s11 = scalar_select 0, %s10, %s8
  loop: start=0, step=1, limit=6
  $region2: #{ab_distill_forward.5} parent=0 // loop_pre_header
    _
  $region3: #{ab_distill_forward.5} parent=0 // loop_header
    %s13 = sphi 0, %s17
    %p14 = scmp.ge.s32.totalorder %s13, 6
    %s20 = sphi 0, %s32
    %s21 = sphi 0, %s28
    %s22 = sphi 0, %s20
    %s23 = sphi 0, %s21
    %s24 = sphi 0, %s22
    %s25 = sphi 0, %s23
    %s35 = sphi 0, %s37
    %s38 = sphi 0, %s35
    %s39 = sphi 0, %s38
    %s55 = sphi 0, %s39
    %s63 = sphi 0, %s65
    %s66 = sphi 0, %s63
    %s67 = sphi 0, %s66
    %s83 = sphi 0, %s67
    %s87 = sphi 0, %s87
    %s89 = sphi 0, %s87
    %s90 = sphi 0, %s89
    %s104 = sphi 0, %s90
    %s108 = sphi 0, %s108
    %s110 = sphi 0, %s108
    %s111 = sphi 0, %s110
    %s125 = sphi 0, %s111
    %s129 = sphi 0, %s129
    %s131 = sphi 0, %s129
    %s132 = sphi 0, %s131
    %s146 = sphi 0, %s132
    %s150 = sphi 0, %s150
    %s152 = sphi 0, %s150
    %s153 = sphi 0, %s152
    %s167 = sphi 0, %s153
    %s171 = sphi 0, %s171
    %s173 = sphi 0, %s171
    %s174 = sphi 0, %s173
    %s188 = sphi 0, %s174
  $region4: #{ab_distill_forward.5} parent=0 // loop_header_branch
    %16 = sbr.rel (%p14) target = $region8
  $region5: #{ab_distill_forward.5} parent=0 // loop_body
    %s18 = ssub.s32 %s13, 1
    %s19 = ssub.s32 %s13, 2
    %s26 = sadd.s32 1, %s21
    %p27 = scmp.ge.s32.totalorder %s26, 2
    %s28 = scalar_select %p27, 0, %s26
    %s29 = sadd.s32 1, %s20
    %s30 = scalar_select %p27, %s29, %s20
    %p31 = scmp.ge.s32.totalorder %s30, 2
    %s32 = scalar_select %p31, 0, %s30
    %s33 = ssub.s32 %s21, %s28
    %p34 = scmp.eq.s32.totalorder %s33, 0
    %s36 = sadd.s32 %s35, 1
    %s37 = scalar_select %p34, %s35, %s36
    %p40 = pneg %p34
    %p41 = scmp.eq.s32.totalorder %s13, 3
    %p42 = por %p40, %p41
    %p43 = scmp.ne.s32.totalorder %s35, %s38
    %p44 = scmp.eq.s32.totalorder %s13, 0
    %p45 = por %p43, %p44
    %p46 = scmp.ne.s32.totalorder %s35, %s38
    %p47 = scmp.eq.s32.totalorder %s18, 3
    %p48 = por %p46, %p47
    %p49 = scmp.ne.s32.totalorder %s38, %s39
    %p50 = scmp.eq.s32.totalorder %s18, 0
    %p51 = por %p49, %p50
    %p52 = scmp.ne.s32.totalorder %s38, %s39
    %p53 = scmp.eq.s32.totalorder %s19, 3
    %p54 = por %p52, %p53
    %p56 = scmp.ne.s32.totalorder %s39, %s55
    %p57 = scmp.eq.s32.totalorder %s19, 0
    %p58 = por %p56, %p57
    %s59 = smul.u32 %s20, %s21
    %s60 = smul.u32 %s32, %s28
    %s61 = ssub.s32 %s59, %s60
    %p62 = scmp.eq.s32.totalorder %s61, 0
    %s64 = sadd.s32 %s63, 1
    %s65 = scalar_select %p62, %s63, %s64
    %p68 = pneg %p62
    %p69 = scmp.eq.s32.totalorder %s13, 3
    %p70 = por %p68, %p69
    %p71 = scmp.ne.s32.totalorder %s63, %s66
    %p72 = scmp.eq.s32.totalorder %s13, 0
    %p73 = por %p71, %p72
    %p74 = scmp.ne.s32.totalorder %s63, %s66
    %p75 = scmp.eq.s32.totalorder %s18, 3
    %p76 = por %p74, %p75
    %p77 = scmp.ne.s32.totalorder %s66, %s67
    %p78 = scmp.eq.s32.totalorder %s18, 0
    %p79 = por %p77, %p78
    %p80 = scmp.ne.s32.totalorder %s66, %s67
    %p81 = scmp.eq.s32.totalorder %s19, 3
    %p82 = por %p80, %p81
    %p84 = scmp.ne.s32.totalorder %s67, %s83
    %p85 = scmp.eq.s32.totalorder %s19, 0
    %p86 = por %p84, %p85
    %s88 = sadd.s32 %s87, 1
    %p91 = scmp.eq.s32.totalorder %s13, 3
    %p92 = scmp.ne.s32.totalorder %s87, %s89
    %p93 = scmp.eq.s32.totalorder %s13, 0
    %p94 = por %p92, %p93
    %p95 = scmp.ne.s32.totalorder %s87, %s89
    %p96 = scmp.eq.s32.totalorder %s18, 3
    %p97 = por %p95, %p96
    %p98 = scmp.ne.s32.totalorder %s89, %s90
    %p99 = scmp.eq.s32.totalorder %s18, 0
    %p100 = por %p98, %p99
    %p101 = scmp.ne.s32.totalorder %s89, %s90
    %p102 = scmp.eq.s32.totalorder %s19, 3
    %p103 = por %p101, %p102
    %p105 = scmp.ne.s32.totalorder %s90, %s104
    %p106 = scmp.eq.s32.totalorder %s19, 0
    %p107 = por %p105, %p106
    %s109 = sadd.s32 %s108, 1
    %p112 = scmp.eq.s32.totalorder %s13, 3
    %p113 = scmp.ne.s32.totalorder %s108, %s110
    %p114 = scmp.eq.s32.totalorder %s13, 0
    %p115 = por %p113, %p114
    %p116 = scmp.ne.s32.totalorder %s108, %s110
    %p117 = scmp.eq.s32.totalorder %s18, 3
    %p118 = por %p116, %p117
    %p119 = scmp.ne.s32.totalorder %s110, %s111
    %p120 = scmp.eq.s32.totalorder %s18, 0
    %p121 = por %p119, %p120
    %p122 = scmp.ne.s32.totalorder %s110, %s111
    %p123 = scmp.eq.s32.totalorder %s19, 3
    %p124 = por %p122, %p123
    %p126 = scmp.ne.s32.totalorder %s111, %s125
    %p127 = scmp.eq.s32.totalorder %s19, 0
    %p128 = por %p126, %p127
    %s130 = sadd.s32 %s129, 1
    %p133 = scmp.eq.s32.totalorder %s13, 3
    %p134 = scmp.ne.s32.totalorder %s129, %s131
    %p135 = scmp.eq.s32.totalorder %s13, 0
    %p136 = por %p134, %p135
    %p137 = scmp.ne.s32.totalorder %s129, %s131
    %p138 = scmp.eq.s32.totalorder %s18, 3
    %p139 = por %p137, %p138
    %p140 = scmp.ne.s32.totalorder %s131, %s132
    %p141 = scmp.eq.s32.totalorder %s18, 0
    %p142 = por %p140, %p141
    %p143 = scmp.ne.s32.totalorder %s131, %s132
    %p144 = scmp.eq.s32.totalorder %s19, 3
    %p145 = por %p143, %p144
    %p147 = scmp.ne.s32.totalorder %s132, %s146
    %p148 = scmp.eq.s32.totalorder %s19, 0
    %p149 = por %p147, %p148
    %s151 = sadd.s32 %s150, 1
    %p154 = scmp.eq.s32.totalorder %s13, 3
    %p155 = scmp.ne.s32.totalorder %s150, %s152
    %p156 = scmp.eq.s32.totalorder %s13, 0
    %p157 = por %p155, %p156
    %p158 = scmp.ne.s32.totalorder %s150, %s152
    %p159 = scmp.eq.s32.totalorder %s18, 3
    %p160 = por %p158, %p159
    %p161 = scmp.ne.s32.totalorder %s152, %s153
    %p162 = scmp.eq.s32.totalorder %s18, 0
    %p163 = por %p161, %p162
    %p164 = scmp.ne.s32.totalorder %s152, %s153
    %p165 = scmp.eq.s32.totalorder %s19, 3
    %p166 = por %p164, %p165
    %p168 = scmp.ne.s32.totalorder %s153, %s167
    %p169 = scmp.eq.s32.totalorder %s19, 0
    %p170 = por %p168, %p169
    %s172 = sadd.s32 %s171, 1
    %p175 = scmp.eq.s32.totalorder %s13, 3
    %p176 = scmp.ne.s32.totalorder %s171, %s173
    %p177 = scmp.eq.s32.totalorder %s13, 0
    %p178 = por %p176, %p177
    %p179 = scmp.ne.s32.totalorder %s171, %s173
    %p180 = scmp.eq.s32.totalorder %s18, 3
    %p181 = por %p179, %p180
    %p182 = scmp.ne.s32.totalorder %s173, %s174
    %p183 = scmp.eq.s32.totalorder %s18, 0
    %p184 = por %p182, %p183
    %p185 = scmp.ne.s32.totalorder %s173, %s174
    %p186 = scmp.eq.s32.totalorder %s19, 3
    %p187 = por %p185, %p186
    %p189 = scmp.ne.s32.totalorder %s174, %s188
    %p190 = scmp.eq.s32.totalorder %s19, 0
    %p191 = por %p189, %p190
    %p192 = scmp.le.s32.totalorder 1, %s13
    %p193 = scmp.lt.s32.totalorder %s13, 5
    %p194 = pnand %p192, %p193
    %p195 = pneg %p194
    // Predicated region
    $region9: #{ab_distill_forward.5} parent=5 // pred_check
      _
    $region10: #{ab_distill_forward.5} parent=5 // pred_check_branch
      %197 = sbr.rel (%p194) target = $region12
    $region11: #{ab_distill_forward.5} parent=5 // pred_region
      %s198 = ssub.s32 %s13, 1
      // Predicated region
      $region13: #{ab_distill_forward.5} parent=11 // pred_check
        %p199 = pneg %p100
      $region14: #{ab_distill_forward.5} parent=11 // pred_check_branch
        %201 = sbr.rel (%p199) target = $region16
      $region15: #{ab_distill_forward.5} parent=11 // pred_region
        _
      $region16: #{ab_distill_forward.5} parent=11 // pred_fallthru
        _
      // Predicated region
      $region17: #{ab_distill_forward.5} parent=11 // pred_check
        %p202 = pneg %p121
      $region18: #{ab_distill_forward.5} parent=11 // pred_check_branch
        %204 = sbr.rel (%p202) target = $region20
      $region19: #{ab_distill_forward.5} parent=11 // pred_region
        _
      $region20: #{ab_distill_forward.5} parent=11 // pred_fallthru
        _
      // Predicated region
      $region21: #{ab_distill_forward.5} parent=11 // pred_check
        %p205 = pneg %p142
      $region22: #{ab_distill_forward.5} parent=11 // pred_check_branch
        %207 = sbr.rel (%p205) target = $region24
      $region23: #{ab_distill_forward.5} parent=11 // pred_region
        _
      $region24: #{ab_distill_forward.5} parent=11 // pred_fallthru
        _
    $region12: #{ab_distill_forward.5} parent=5 // pred_fallthru
      _
    %p208 = scmp.lt.s32.totalorder %s13, 4
    // Predicated region
    $region25: #{ab_distill_forward.5} parent=5 // pred_check
      %p209 = pneg %p208
    $region26: #{ab_distill_forward.5} parent=5 // pred_check_branch
      %211 = sbr.rel (%p209) target = $region28
    $region27: #{ab_distill_forward.5} parent=5 // pred_region
      // Predicated region
      $region29: #{ab_distill_forward.5} parent=27 // pred_check
        %p212 = pneg %p45
      $region30: #{ab_distill_forward.5} parent=27 // pred_check_branch
        %214 = sbr.rel (%p212) target = $region32
      $region31: #{ab_distill_forward.5} parent=27 // pred_region
        %s215 = smul.u32 8, %s21
        %p216 = scmp.lt.s32.totalorder %s215, 15
        %s217 = scalar_select %p216, %s215, 15
        %s218 = smul.addr %s217, 4
        %s219 = scalar_lea.vmem %s0, %s218
        %s220 = smul.u32 8, %s21
      $region32: #{ab_distill_forward.5} parent=27 // pred_fallthru
        _
      // Predicated region
      $region33: #{ab_distill_forward.5} parent=27 // pred_check
        %p221 = pneg %p73
      $region34: #{ab_distill_forward.5} parent=27 // pred_check_branch
        %223 = sbr.rel (%p221) target = $region36
      $region35: #{ab_distill_forward.5} parent=27 // pred_region
        %s224 = smul.u32 %s20, %s21
        %s225 = smul.u32 8, %s224
        %p226 = scmp.lt.s32.totalorder %s225, 15
        %s227 = scalar_select %p226, %s225, 15
        %s228 = smul.addr %s227, 4
        %s229 = scalar_lea.vmem %s1, %s228
        %s230 = smul.u32 %s20, %s21
        %s231 = smul.u32 8, %s230
      $region36: #{ab_distill_forward.5} parent=27 // pred_fallthru
        _
    $region28: #{ab_distill_forward.5} parent=5 // pred_fallthru
      _
    %p232 = scmp.le.s32.totalorder 1, %s13
    %p233 = scmp.lt.s32.totalorder %s13, 5
    %p234 = pnand %p232, %p233
    %p235 = pneg %p234
    // Predicated region
    $region37: #{ab_distill_forward.5} parent=5 // pred_check
      _
    $region38: #{ab_distill_forward.5} parent=5 // pred_check_branch
      %237 = sbr.rel (%p234) target = $region40
    $region39: #{ab_distill_forward.5} parent=5 // pred_region
      %s238 = ssub.s32 %s13, 1
      %s239 = smul.u32 8, %s23
      %p240 = scmp.lt.s32.totalorder %s239, 15
      %s241 = scalar_select %p240, %s239, 15
      %s242 = smul.addr %s241, 4
      %s243 = scalar_lea.vmem %s0, %s242
      %p244 = pneg %p51
      %p245 = pneg %p48
      %s246 = smul.u32 %s22, %s23
      %s247 = smul.u32 8, %s246
      %p248 = scmp.lt.s32.totalorder %s247, 15
      %s249 = scalar_select %p248, %s247, 15
      %s250 = smul.addr %s249, 4
      %s251 = scalar_lea.vmem %s1, %s250
      %p252 = pneg %p79
      %p253 = pneg %p76
      %p254 = pneg %p100
      %p255 = pneg %p97
      %p256 = pneg %p121
      %p257 = pneg %p118
      %p258 = pneg %p142
      %p259 = pneg %p139
      %p260 = pneg %p163
      %p261 = pneg %p160
      %p262 = pneg %p184
      %p263 = pneg %p181
      %s264 = smul.u32 8, %s23
      %p265 = scmp.lt.s32.totalorder %s264, 15
      %s266 = scalar_select %p265, %s264, 15
      %s267 = smul.addr %s266, 4
      %s268 = scalar_lea.vmem %s0, %s267
      %s269 = smul.u32 8, %s23
      %s270 = smul.u32 %s22, %s23
      %s271 = smul.u32 8, %s270
      %p272 = scmp.lt.s32.totalorder %s271, 15
      %s273 = scalar_select %p272, %s271, 15
      %s274 = smul.addr %s273, 4
      %s275 = scalar_lea.vmem %s1, %s274
      %s276 = smul.u32 %s22, %s23
      %s277 = smul.u32 8, %s276
      %v278 = vld [vmem:[%s268] sm:$0xf]
      %v279 = vld [vmem:[%s268 + $0x4] sm:$0xf]
      %v280 = vld [vmem:[%s268 + $0x8] sm:$0xf]
      %v281 = vld [vmem:[%s268 + $0xc] sm:$0xf]
      %v282 = vld [vmem:[%s268 + $0x10] sm:$0xf]
      %v283 = vld [vmem:[%s268 + $0x14] sm:$0xf]
      %v284 = vld [vmem:[%s268 + $0x18] sm:$0xf]
      %v285 = vld [vmem:[%s268 + $0x1c] sm:$0xf]
      %v286 = vld [vmem:[%s2] sm:$0xf]
      %v287 = vld [vmem:[%s2 + $0x4] sm:$0xf]
      %v288 = vld [vmem:[%s2 + $0x8] sm:$0xf]
      %v289 = vld [vmem:[%s2 + $0xc] sm:$0xf]
      %v290 = vld [vmem:[%s2 + $0x10] sm:$0xf]
      %v291 = vld [vmem:[%s2 + $0x14] sm:$0xf]
      %v292 = vld [vmem:[%s2 + $0x18] sm:$0xf]
      %v293 = vld [vmem:[%s2 + $0x1c] sm:$0xf]
      %v294 = vld [vmem:[%s2 + $0x20] sm:$0xf]
      %v295 = vld [vmem:[%s2 + $0x24] sm:$0xf]
      %v296 = vld [vmem:[%s2 + $0x28] sm:$0xf]
      %v297 = vld [vmem:[%s2 + $0x2c] sm:$0xf]
      %v298 = vld [vmem:[%s2 + $0x30] sm:$0xf]
      %v299 = vld [vmem:[%s2 + $0x34] sm:$0xf]
      %v300 = vld [vmem:[%s2 + $0x38] sm:$0xf]
      %v301 = vld [vmem:[%s2 + $0x3c] sm:$0xf]
      %v310 = vunpack.c.l.b16 %v278
      %v311 = vunpack.c.l.b16 %v279
      %v312 = vunpack.c.l.b16 %v280
      %v313 = vunpack.c.l.b16 %v281
      %v314 = vunpack.c.l.b16 %v282
      %v315 = vunpack.c.l.b16 %v283
      %v316 = vunpack.c.l.b16 %v284
      %v317 = vunpack.c.l.b16 %v285
      %v318 = vpack.c.b16 %v311, %v310
      %v319 = vpack.c.b16 %v313, %v312
      %v320 = vpack.c.b16 %v315, %v314
      %v321 = vpack.c.b16 %v317, %v316
      %v342 = vunpack.c.l.b16 %v286
      %v343 = vunpack.c.l.b16 %v287
      %v344 = vunpack.c.l.b16 %v288
      %v345 = vunpack.c.l.b16 %v289
      %v346 = vunpack.c.l.b16 %v290
      %v347 = vunpack.c.l.b16 %v291
      %v348 = vunpack.c.l.b16 %v292
      %v349 = vunpack.c.l.b16 %v293
      %v350 = vunpack.c.l.b16 %v294
      %v351 = vunpack.c.l.b16 %v295
      %v352 = vunpack.c.l.b16 %v296
      %v353 = vunpack.c.l.b16 %v297
      %v354 = vunpack.c.l.b16 %v298
      %v355 = vunpack.c.l.b16 %v299
      %v356 = vunpack.c.l.b16 %v300
      %v357 = vunpack.c.l.b16 %v301
      %v358 = vpack.c.b16 %v343, %v342
      %v359 = vpack.c.b16 %v345, %v344
      %v360 = vpack.c.b16 %v347, %v346
      %v361 = vpack.c.b16 %v349, %v348
      %v362 = vpack.c.b16 %v351, %v350
      %v363 = vpack.c.b16 %v353, %v352
      %v364 = vpack.c.b16 %v355, %v354
      %v365 = vpack.c.b16 %v357, %v356
      %374 = vmatpush.bf16.msra.mxu0 %v365
      %375 = vmatpush.bf16.msra.mxu0 %v364
      %376 = vmatpush.bf16.msra.mxu0 %v363
      %377 = vmatpush.bf16.msra.mxu0 %v362
      %378 = vmatpush.bf16.msra.mxu0 %v361
      %379 = vmatpush.bf16.msra.mxu0 %v360
      %380 = vmatpush.bf16.msra.mxu0 %v359
      %381 = vmatpush.bf16.msra.mxu0 %v358
      %382 = vmatmul.bf16.gmra.mxu0 %v318
      %v383 = vpop.f32.mrf.mxu0
      %v384 = vadd.f32 0.0, %v383
      %v385 = vpop.f32.mrf.mxu0
      %v386 = vadd.f32 0.0, %v385
      %387 = vmatmul.bf16.gmra.mxu0 %v319
      %v388 = vpop.f32.mrf.mxu0
      %v389 = vadd.f32 0.0, %v388
      %v390 = vpop.f32.mrf.mxu0
      %v391 = vadd.f32 0.0, %v390
      %392 = vmatmul.bf16.gmra.mxu0 %v320
      %v393 = vpop.f32.mrf.mxu0
      %v394 = vadd.f32 0.0, %v393
      %v395 = vpop.f32.mrf.mxu0
      %v396 = vadd.f32 0.0, %v395
      %397 = vmatmul.bf16.gmra.mxu0 %v321
      %v398 = vpop.f32.mrf.mxu0
      %v399 = vadd.f32 0.0, %v398
      %v400 = vpop.f32.mrf.mxu0
      %v401 = vadd.f32 0.0, %v400
      %402 = vdwg.mxu0
      %p403 = scmp.eq.s32.totalorder %s22, 0
      %p404 = scmp.eq.s32.totalorder %s23, 0
      %p405 = pnand %p403, %p404
      %p406 = pneg %p405
      // Predicated region
      $region41: #{ab_distill_forward.5} parent=39 // pred_check
        _
      $region42: #{ab_distill_forward.5} parent=39 // pred_check_branch
        %408 = sbr.rel (%p405) target = $region44
      $region43: #{ab_distill_forward.5} parent=39 // pred_region
        %409 = vst [vmem:[#allocation2] sm:$0x1] 0.0
        %410 = vst [vmem:[#allocation3] sm:$0x1] 0.0
      $region44: #{ab_distill_forward.5} parent=39 // pred_fallthru
        _
      // Predicated region
      $region45: #{ab_distill_forward.5} parent=39 // pred_check
        %p411 = pneg %p403
      $region46: #{ab_distill_forward.5} parent=39 // pred_check_branch
        %413 = sbr.rel (%p411) target = $region48
      $region47: #{ab_distill_forward.5} parent=39 // pred_region
        %v414 = vld [vmem:[#allocation2] sm:$0x1]
        %v415 = vadd.f32 %v384, %v386
        %v416 = vadd.f32 %v415, %v389
        %v417 = vadd.f32 %v416, %v391
        %v418 = vadd.f32 %v417, %v394
        %v419 = vadd.f32 %v418, %v396
        %v420 = vadd.f32 %v419, %v399
        %v421 = vadd.f32 %v420, %v401
        %v422 = vrot.slane %v421, 4
        %v423 = vadd.f32 %v421, %v422
        %v424 = vrot.slane %v423, 2
        %v425 = vadd.f32 %v423, %v424
        %v426 = vrot.slane %v425, 1
        %v427 = vadd.f32 %v425, %v426
        %v428 = vadd.f32 %v414, %v427
        %429 = vst [vmem:[#allocation2] sm:$0x1] %v428
        %v430 = vld [vmem:[#allocation3] sm:$0x1]
        %v431 = vmul.f32 %v384, %v384
        %v432 = vmul.f32 %v386, %v386
        %v433 = vmul.f32 %v389, %v389
        %v434 = vmul.f32 %v391, %v391
        %v435 = vmul.f32 %v394, %v394
        %v436 = vmul.f32 %v396, %v396
        %v437 = vmul.f32 %v399, %v399
        %v438 = vmul.f32 %v401, %v401
        %v439 = vadd.f32 %v431, %v432
        %v440 = vadd.f32 %v439, %v433
        %v441 = vadd.f32 %v440, %v434
        %v442 = vadd.f32 %v441, %v435
        %v443 = vadd.f32 %v442, %v436
        %v444 = vadd.f32 %v443, %v437
        %v445 = vadd.f32 %v444, %v438
        %v446 = vrot.slane %v445, 4
        %v447 = vadd.f32 %v445, %v446
        %v448 = vrot.slane %v447, 2
        %v449 = vadd.f32 %v447, %v448
        %v450 = vrot.slane %v449, 1
        %v451 = vadd.f32 %v449, %v450
        %v452 = vadd.f32 %v430, %v451
        %453 = vst [vmem:[#allocation3] sm:$0x1] %v452
      $region48: #{ab_distill_forward.5} parent=39 // pred_fallthru
        _
      %p454 = scmp.eq.s32.totalorder %s23, 1
      %p455 = pnand %p403, %p454
      %p456 = pneg %p455
      // Predicated region
      $region49: #{ab_distill_forward.5} parent=39 // pred_check
        _
      $region50: #{ab_distill_forward.5} parent=39 // pred_check_branch
        %458 = sbr.rel (%p455) target = $region52
      $region51: #{ab_distill_forward.5} parent=39 // pred_region
        %v459 = vld [vmem:[#allocation2] sm:$0x1]
        %v460 = vmul.f32 %v459, 0.0078125
        %v461 = vld [vmem:[#allocation3] sm:$0x1]
        %v462 = vmul.f32 %v461, 0.0078125
        %v463 = vmul.f32 %v460, %v460
        %v464 = vsub.f32 %v462, %v463
        %v465 = vmax.f32 %v464, 0.0
        %v466 = vld [vmem:[%s3] sm:$0x1]
        %v467 = vadd.f32 %v465, 1e-05
        %v468 = vrsqrt.pop %v467
        %v469 = vmul.f32 %v468, %v467
        %v470 = vmul.f32 %v469, %v468
        %v471 = vmul.f32 0.5, %v470
        %v472 = vsub.f32 1.5, %v471
        %v473 = vmul.f32 %v468, %v472
        %vm474 = vweird.f32 %v467
        %vm475 = vweird.f32 %v468
        %vm476 = vmor %vm474, %vm475
        %v477 = vsel %vm476, %v468, %v473
        %v478 = vmul.f32 %v466, %v477
        %479 = vst [vmem:[#allocation4] sm:$0x1] %v478
        %v480 = vld [vmem:[%s4] sm:$0x1]
        %v481 = vmul.f32 %v460, %v478
        %v482 = vsub.f32 %v480, %v481
        %483 = vst [vmem:[#allocation5] sm:$0x1] %v482
      $region52: #{ab_distill_forward.5} parent=39 // pred_fallthru
        _
      %p484 = scmp.eq.s32.totalorder %s22, 1
      %p485 = pnand %p484, %p404
      %p486 = pneg %p485
      // Predicated region
      $region53: #{ab_distill_forward.5} parent=39 // pred_check
        _
      $region54: #{ab_distill_forward.5} parent=39 // pred_check_branch
        %488 = sbr.rel (%p485) target = $region56
      $region55: #{ab_distill_forward.5} parent=39 // pred_region
        %489 = vst [vmem:[%s5] sm:$0x1] 0.0
        %490 = vst [vmem:[%s6] sm:$0x1] 0.0
      $region56: #{ab_distill_forward.5} parent=39 // pred_fallthru
        _
      // Predicated region
      $region57: #{ab_distill_forward.5} parent=39 // pred_check
        %p491 = pneg %p484
      $region58: #{ab_distill_forward.5} parent=39 // pred_check_branch
        %493 = sbr.rel (%p491) target = $region60
      $region59: #{ab_distill_forward.5} parent=39 // pred_region
        %v494 = vld [vmem:[#allocation4] sm:$0x1]
        %v496 = vperm.slane %v494, 0
        %v498 = vmul.f32 %v384, %v496
        %v499 = vmul.f32 %v386, %v496
        %v500 = vmul.f32 %v389, %v496
        %v501 = vmul.f32 %v391, %v496
        %v502 = vmul.f32 %v394, %v496
        %v503 = vmul.f32 %v396, %v496
        %v504 = vmul.f32 %v399, %v496
        %v505 = vmul.f32 %v401, %v496
        %v506 = vld [vmem:[#allocation5] sm:$0x1]
        %v508 = vperm.slane %v506, 0
        %v510 = vadd.f32 %v498, %v508
        %v511 = vadd.f32 %v499, %v508
        %v512 = vadd.f32 %v500, %v508
        %v513 = vadd.f32 %v501, %v508
        %v514 = vadd.f32 %v502, %v508
        %v515 = vadd.f32 %v503, %v508
        %v516 = vadd.f32 %v504, %v508
        %v517 = vadd.f32 %v505, %v508
        %v518 = vld [vmem:[%s275] sm:$0xf]
        %v519 = vld [vmem:[%s275 + $0x4] sm:$0xf]
        %v520 = vld [vmem:[%s275 + $0x8] sm:$0xf]
        %v521 = vld [vmem:[%s275 + $0xc] sm:$0xf]
        %v522 = vld [vmem:[%s275 + $0x10] sm:$0xf]
        %v523 = vld [vmem:[%s275 + $0x14] sm:$0xf]
        %v524 = vld [vmem:[%s275 + $0x18] sm:$0xf]
        %v525 = vld [vmem:[%s275 + $0x1c] sm:$0xf]
        %v526 = vunpack.c.l.bf16 %v518
        %v527 = vunpack.c.l.bf16 %v519
        %v528 = vunpack.c.l.bf16 %v520
        %v529 = vunpack.c.l.bf16 %v521
        %v530 = vunpack.c.l.bf16 %v522
        %v531 = vunpack.c.l.bf16 %v523
        %v532 = vunpack.c.l.bf16 %v524
        %v533 = vunpack.c.l.bf16 %v525
        %v534 = vlaneseq
        %v535 = vand.u32 %v534, 127
        %vm536 = vcmp.lt.s32.totalorder %v535, 8
        %vm537 = vcmp.gt.f32.partialorder %v526, 0.0
        %vm538 = vcmp.gt.f32.partialorder %v527, 0.0
        %vm539 = vcmp.gt.f32.partialorder %v528, 0.0
        %vm540 = vcmp.gt.f32.partialorder %v529, 0.0
        %vm541 = vcmp.gt.f32.partialorder %v530, 0.0
        %vm542 = vcmp.gt.f32.partialorder %v531, 0.0
        %vm543 = vcmp.gt.f32.partialorder %v532, 0.0
        %vm544 = vcmp.gt.f32.partialorder %v533, 0.0
        %vm545 = vcmp.gt.f32.partialorder %v510, -1.0
        %vm546 = vcmp.gt.f32.partialorder %v511, -1.0
        %vm547 = vcmp.gt.f32.partialorder %v512, -1.0
        %vm548 = vcmp.gt.f32.partialorder %v513, -1.0
        %vm549 = vcmp.gt.f32.partialorder %v514, -1.0
        %vm550 = vcmp.gt.f32.partialorder %v515, -1.0
        %vm551 = vcmp.gt.f32.partialorder %v516, -1.0
        %vm552 = vcmp.gt.f32.partialorder %v517, -1.0
        %vm553 = vmand %vm536, %vm545
        %vm554 = vmand %vm536, %vm546
        %vm555 = vmand %vm536, %vm547
        %vm556 = vmand %vm536, %vm548
        %vm557 = vmand %vm536, %vm549
        %vm558 = vmand %vm536, %vm550
        %vm559 = vmand %vm536, %vm551
        %vm560 = vmand %vm536, %vm552
        %vm561 = vmxor %vm537, 1
        %vm562 = vmxor %vm538, 1
        %vm563 = vmxor %vm539, 1
        %vm564 = vmxor %vm540, 1
        %vm565 = vmxor %vm541, 1
        %vm566 = vmxor %vm542, 1
        %vm567 = vmxor %vm543, 1
        %vm568 = vmxor %vm544, 1
        %vm569 = vmand %vm553, %vm561
        %vm570 = vmand %vm554, %vm562
        %vm571 = vmand %vm555, %vm563
        %vm572 = vmand %vm556, %vm564
        %vm573 = vmand %vm557, %vm565
        %vm574 = vmand %vm558, %vm566
        %vm575 = vmand %vm559, %vm567
        %vm576 = vmand %vm560, %vm568
        %v577 = vadd.f32 %v510, 1.0
        %v578 = vadd.f32 %v511, 1.0
        %v579 = vadd.f32 %v512, 1.0
        %v580 = vadd.f32 %v513, 1.0
        %v581 = vadd.f32 %v514, 1.0
        %v582 = vadd.f32 %v515, 1.0
        %v583 = vadd.f32 %v516, 1.0
        %v584 = vadd.f32 %v517, 1.0
        %v585 = vmul.f32 %v577, %v577
        %v586 = vmul.f32 %v578, %v578
        %v587 = vmul.f32 %v579, %v579
        %v588 = vmul.f32 %v580, %v580
        %v589 = vmul.f32 %v581, %v581
        %v590 = vmul.f32 %v582, %v582
        %v591 = vmul.f32 %v583, %v583
        %v592 = vmul.f32 %v584, %v584
        %v593 = vsel %vm569, %v585, 0.0
        %v594 = vsel %vm570, %v586, 0.0
        %v595 = vsel %vm571, %v587, 0.0
        %v596 = vsel %vm572, %v588, 0.0
        %v597 = vsel %vm573, %v589, 0.0
        %v598 = vsel %vm574, %v590, 0.0
        %v599 = vsel %vm575, %v591, 0.0
        %v600 = vsel %vm576, %v592, 0.0
        %vm601 = vcmp.le.f32.partialorder %v510, 1.0
        %vm602 = vcmp.le.f32.partialorder %v511, 1.0
        %vm603 = vcmp.le.f32.partialorder %v512, 1.0
        %vm604 = vcmp.le.f32.partialorder %v513, 1.0
        %vm605 = vcmp.le.f32.partialorder %v514, 1.0
        %vm606 = vcmp.le.f32.partialorder %v515, 1.0
        %vm607 = vcmp.le.f32.partialorder %v516, 1.0
        %vm608 = vcmp.le.f32.partialorder %v517, 1.0
        %vm609 = vmand %vm536, %vm601
        %vm610 = vmand %vm536, %vm602
        %vm611 = vmand %vm536, %vm603
        %vm612 = vmand %vm536, %vm604
        %vm613 = vmand %vm536, %vm605
        %vm614 = vmand %vm536, %vm606
        %vm615 = vmand %vm536, %vm607
        %vm616 = vmand %vm536, %vm608
        %vm617 = vmand %vm609, %vm537
        %vm618 = vmand %vm610, %vm538
        %vm619 = vmand %vm611, %vm539
        %vm620 = vmand %vm612, %vm540
        %vm621 = vmand %vm613, %vm541
        %vm622 = vmand %vm614, %vm542
        %vm623 = vmand %vm615, %vm543
        %vm624 = vmand %vm616, %vm544
        %v625 = vsub.f32 %v510, 1.0
        %v626 = vsub.f32 %v511, 1.0
        %v627 = vsub.f32 %v512, 1.0
        %v628 = vsub.f32 %v513, 1.0
        %v629 = vsub.f32 %v514, 1.0
        %v630 = vsub.f32 %v515, 1.0
        %v631 = vsub.f32 %v516, 1.0
        %v632 = vsub.f32 %v517, 1.0
        %v633 = vmul.f32 %v625, %v625
        %v634 = vmul.f32 %v626, %v626
        %v635 = vmul.f32 %v627, %v627
        %v636 = vmul.f32 %v628, %v628
        %v637 = vmul.f32 %v629, %v629
        %v638 = vmul.f32 %v630, %v630
        %v639 = vmul.f32 %v631, %v631
        %v640 = vmul.f32 %v632, %v632
        %v641 = vsel %vm617, %v633, 0.0
        %v642 = vsel %vm618, %v634, 0.0
        %v643 = vsel %vm619, %v635, 0.0
        %v644 = vsel %vm620, %v636, 0.0
        %v645 = vsel %vm621, %v637, 0.0
        %v646 = vsel %vm622, %v638, 0.0
        %v647 = vsel %vm623, %v639, 0.0
        %v648 = vsel %vm624, %v640, 0.0
        %v649 = vadd.f32 %v593, %v641
        %v650 = vadd.f32 %v594, %v642
        %v651 = vadd.f32 %v595, %v643
        %v652 = vadd.f32 %v596, %v644
        %v653 = vadd.f32 %v597, %v645
        %v654 = vadd.f32 %v598, %v646
        %v655 = vadd.f32 %v599, %v647
        %v656 = vadd.f32 %v600, %v648
        %vm657 = vcmp.gt.f32.partialorder %v510, 0.0
        %vm658 = vcmp.gt.f32.partialorder %v511, 0.0
        %vm659 = vcmp.gt.f32.partialorder %v512, 0.0
        %vm660 = vcmp.gt.f32.partialorder %v513, 0.0
        %vm661 = vcmp.gt.f32.partialorder %v514, 0.0
        %vm662 = vcmp.gt.f32.partialorder %v515, 0.0
        %vm663 = vcmp.gt.f32.partialorder %v516, 0.0
        %vm664 = vcmp.gt.f32.partialorder %v517, 0.0
        %vm665 = vmxor %vm657, %vm537
        %vm666 = vmxor %vm658, %vm538
        %vm667 = vmxor %vm659, %vm539
        %vm668 = vmxor %vm660, %vm540
        %vm669 = vmxor %vm661, %vm541
        %vm670 = vmxor %vm662, %vm542
        %vm671 = vmxor %vm663, %vm543
        %vm672 = vmxor %vm664, %vm544
        %vm673 = vmand %vm536, %vm665
        %vm674 = vmand %vm536, %vm666
        %vm675 = vmand %vm536, %vm667
        %vm676 = vmand %vm536, %vm668
        %vm677 = vmand %vm536, %vm669
        %vm678 = vmand %vm536, %vm670
        %vm679 = vmand %vm536, %vm671
        %vm680 = vmand %vm536, %vm672
        %v681 = vsel %vm673, 1.0, 0.0
        %v682 = vsel %vm674, 1.0, 0.0
        %v683 = vsel %vm675, 1.0, 0.0
        %v684 = vsel %vm676, 1.0, 0.0
        %v685 = vsel %vm677, 1.0, 0.0
        %v686 = vsel %vm678, 1.0, 0.0
        %v687 = vsel %vm679, 1.0, 0.0
        %v688 = vsel %vm680, 1.0, 0.0
        %v689 = vld [vmem:[%s5] sm:$0x1]
        %v690 = vadd.f32 %v649, %v650
        %v691 = vadd.f32 %v690, %v651
        %v692 = vadd.f32 %v691, %v652
        %v693 = vadd.f32 %v692, %v653
        %v694 = vadd.f32 %v693, %v654
        %v695 = vadd.f32 %v694, %v655
        %v696 = vadd.f32 %v695, %v656
        %v697 = vrot.slane %v696, 4
        %v698 = vadd.f32 %v696, %v697
        %v699 = vrot.slane %v698, 2
        %v700 = vadd.f32 %v698, %v699
        %v701 = vrot.slane %v700, 1
        %v702 = vadd.f32 %v700, %v701
        %v703 = vmul.f32 %v702, 0.001953125
        %v704 = vadd.f32 %v689, %v703
        %705 = vst [vmem:[%s5] sm:$0x1] %v704
        %v706 = vld [vmem:[%s6] sm:$0x1]
        %v707 = vadd.f32 %v681, %v682
        %v708 = vadd.f32 %v707, %v683
        %v709 = vadd.f32 %v708, %v684
        %v710 = vadd.f32 %v709, %v685
        %v711 = vadd.f32 %v710, %v686
        %v712 = vadd.f32 %v711, %v687
        %v713 = vadd.f32 %v712, %v688
        %v714 = vrot.slane %v713, 4
        %v715 = vadd.f32 %v713, %v714
        %v716 = vrot.slane %v715, 2
        %v717 = vadd.f32 %v715, %v716
        %v718 = vrot.slane %v717, 1
        %v719 = vadd.f32 %v717, %v718
        %v720 = vmul.f32 %v719, 0.0009765625
        %v721 = vadd.f32 %v706, %v720
        %722 = vst [vmem:[%s6] sm:$0x1] %v721
      $region60: #{ab_distill_forward.5} parent=39 // pred_fallthru
        _
      // Predicated region
      $region61: #{ab_distill_forward.5} parent=39 // pred_check
        %p723 = pneg %p160
      $region62: #{ab_distill_forward.5} parent=39 // pred_check_branch
        %725 = sbr.rel (%p723) target = $region64
      $region63: #{ab_distill_forward.5} parent=39 // pred_region
        _
      $region64: #{ab_distill_forward.5} parent=39 // pred_fallthru
        _
      // Predicated region
      $region65: #{ab_distill_forward.5} parent=39 // pred_check
        %p726 = pneg %p181
      $region66: #{ab_distill_forward.5} parent=39 // pred_check_branch
        %728 = sbr.rel (%p726) target = $region68
      $region67: #{ab_distill_forward.5} parent=39 // pred_region
        _
      $region68: #{ab_distill_forward.5} parent=39 // pred_fallthru
        _
      // Predicated region
      $region69: #{ab_distill_forward.5} parent=39 // pred_check
        %p729 = pneg %p160
      $region70: #{ab_distill_forward.5} parent=39 // pred_check_branch
        %731 = sbr.rel (%p729) target = $region72
      $region71: #{ab_distill_forward.5} parent=39 // pred_region
        _
      $region72: #{ab_distill_forward.5} parent=39 // pred_fallthru
        _
      // Predicated region
      $region73: #{ab_distill_forward.5} parent=39 // pred_check
        %p732 = pneg %p181
      $region74: #{ab_distill_forward.5} parent=39 // pred_check_branch
        %734 = sbr.rel (%p732) target = $region76
      $region75: #{ab_distill_forward.5} parent=39 // pred_region
        _
      $region76: #{ab_distill_forward.5} parent=39 // pred_fallthru
        _
    $region40: #{ab_distill_forward.5} parent=5 // pred_fallthru
      _
    %p735 = scmp.le.s32.totalorder 2, %s13
    // Predicated region
    $region77: #{ab_distill_forward.5} parent=5 // pred_check
      %p736 = pneg %p735
    $region78: #{ab_distill_forward.5} parent=5 // pred_check_branch
      %738 = sbr.rel (%p736) target = $region80
    $region79: #{ab_distill_forward.5} parent=5 // pred_region
      %s739 = ssub.s32 %s13, 2
    $region80: #{ab_distill_forward.5} parent=5 // pred_fallthru
      _
  $region6: #{ab_distill_forward.5} parent=0 // loop_footer
    %s17 = sadd.s32 1, %s13
  $region7: #{ab_distill_forward.5} parent=0 // loop_footer_branch
    %12 = sbr.rel target = $region3
  $region8: #{ab_distill_forward.5} parent=0 // loop_exit
    _

// kernel: ab_distill_forward.6
$region0: #{ab_distill_forward.6}
  #allocation0 [shape = 'u32[]', space=smem, size = 0x4, offset = 0x4, fixed_abs, tag = 'smem constant byte address 0x4 - core index']
  #allocation1 [shape = 'u32[72,128]{1,0:T(1,128)}', space=vmem, size = 0x9000, scoped, tag = 'internal scratch']
  #allocation2 [shape = 'f32[1,128]{1,0:T(1,128)}', space=vmem, size = 0x200, scoped, tag = 'scratch operand']
  #allocation3 [shape = 'f32[1,128]{1,0:T(1,128)}', space=vmem, size = 0x200, scoped, tag = 'scratch operand']
  #allocation4 [shape = 'f32[1,128]{1,0:T(1,128)}', space=vmem, size = 0x200, scoped, tag = 'scratch operand']
  #allocation5 [shape = 'f32[1,128]{1,0:T(1,128)}', space=vmem, size = 0x200, scoped, tag = 'scratch operand']
  %s0 = inlined_call_operand.vmem [shape: bf16[128,128], index: 0, kind: input, shape index: {}]
  %s1 = inlined_call_operand.vmem [shape: bf16[128,128], index: 1, kind: input, shape index: {}]
  %s2 = inlined_call_operand.vmem [shape: bf16[128,128], index: 2, kind: input, shape index: {}]
  %s3 = inlined_call_operand.vmem [shape: f32[1,128], index: 3, kind: input, shape index: {}]
  %s4 = inlined_call_operand.vmem [shape: f32[1,128], index: 4, kind: input, shape index: {}]
  %s5 = inlined_call_operand.vmem [shape: f32[1,128], index: 5, kind: output, shape index: {0}]
  %s6 = inlined_call_operand.vmem [shape: f32[1,128], index: 6, kind: output, shape index: {1}]
  %7 = xla_tuple %s5, %s6
  %s8 = sld [smem:[#allocation0]]
  $region81: #{ab_distill_forward.6} parent=0
    _
  %s10 = ssub.s32 1, %s8
  %s11 = scalar_select 0, %s10, %s8
  loop: start=0, step=1, limit=6
  $region2: #{ab_distill_forward.6} parent=0 // loop_pre_header
    _
  $region3: #{ab_distill_forward.6} parent=0 // loop_header
    %s13 = sphi 0, %s17
    %p14 = scmp.ge.s32.totalorder %s13, 6
    %s20 = sphi 0, %s32
    %s21 = sphi 0, %s28
    %s22 = sphi 0, %s20
    %s23 = sphi 0, %s21
    %s24 = sphi 0, %s22
    %s25 = sphi 0, %s23
    %s35 = sphi 0, %s37
    %s38 = sphi 0, %s35
    %s39 = sphi 0, %s38
    %s55 = sphi 0, %s39
    %s63 = sphi 0, %s65
    %s66 = sphi 0, %s63
    %s67 = sphi 0, %s66
    %s83 = sphi 0, %s67
    %s87 = sphi 0, %s87
    %s89 = sphi 0, %s87
    %s90 = sphi 0, %s89
    %s104 = sphi 0, %s90
    %s108 = sphi 0, %s108
    %s110 = sphi 0, %s108
    %s111 = sphi 0, %s110
    %s125 = sphi 0, %s111
    %s129 = sphi 0, %s129
    %s131 = sphi 0, %s129
    %s132 = sphi 0, %s131
    %s146 = sphi 0, %s132
    %s150 = sphi 0, %s150
    %s152 = sphi 0, %s150
    %s153 = sphi 0, %s152
    %s167 = sphi 0, %s153
    %s171 = sphi 0, %s171
    %s173 = sphi 0, %s171
    %s174 = sphi 0, %s173
    %s188 = sphi 0, %s174
  $region4: #{ab_distill_forward.6} parent=0 // loop_header_branch
    %16 = sbr.rel (%p14) target = $region8
  $region5: #{ab_distill_forward.6} parent=0 // loop_body
    %s18 = ssub.s32 %s13, 1
    %s19 = ssub.s32 %s13, 2
    %s26 = sadd.s32 1, %s21
    %p27 = scmp.ge.s32.totalorder %s26, 2
    %s28 = scalar_select %p27, 0, %s26
    %s29 = sadd.s32 1, %s20
    %s30 = scalar_select %p27, %s29, %s20
    %p31 = scmp.ge.s32.totalorder %s30, 2
    %s32 = scalar_select %p31, 0, %s30
    %s33 = ssub.s32 %s21, %s28
    %p34 = scmp.eq.s32.totalorder %s33, 0
    %s36 = sadd.s32 %s35, 1
    %s37 = scalar_select %p34, %s35, %s36
    %p40 = pneg %p34
    %p41 = scmp.eq.s32.totalorder %s13, 3
    %p42 = por %p40, %p41
    %p43 = scmp.ne.s32.totalorder %s35, %s38
    %p44 = scmp.eq.s32.totalorder %s13, 0
    %p45 = por %p43, %p44
    %p46 = scmp.ne.s32.totalorder %s35, %s38
    %p47 = scmp.eq.s32.totalorder %s18, 3
    %p48 = por %p46, %p47
    %p49 = scmp.ne.s32.totalorder %s38, %s39
    %p50 = scmp.eq.s32.totalorder %s18, 0
    %p51 = por %p49, %p50
    %p52 = scmp.ne.s32.totalorder %s38, %s39
    %p53 = scmp.eq.s32.totalorder %s19, 3
    %p54 = por %p52, %p53
    %p56 = scmp.ne.s32.totalorder %s39, %s55
    %p57 = scmp.eq.s32.totalorder %s19, 0
    %p58 = por %p56, %p57
    %s59 = smul.u32 %s20, %s21
    %s60 = smul.u32 %s32, %s28
    %s61 = ssub.s32 %s59, %s60
    %p62 = scmp.eq.s32.totalorder %s61, 0
    %s64 = sadd.s32 %s63, 1
    %s65 = scalar_select %p62, %s63, %s64
    %p68 = pneg %p62
    %p69 = scmp.eq.s32.totalorder %s13, 3
    %p70 = por %p68, %p69
    %p71 = scmp.ne.s32.totalorder %s63, %s66
    %p72 = scmp.eq.s32.totalorder %s13, 0
    %p73 = por %p71, %p72
    %p74 = scmp.ne.s32.totalorder %s63, %s66
    %p75 = scmp.eq.s32.totalorder %s18, 3
    %p76 = por %p74, %p75
    %p77 = scmp.ne.s32.totalorder %s66, %s67
    %p78 = scmp.eq.s32.totalorder %s18, 0
    %p79 = por %p77, %p78
    %p80 = scmp.ne.s32.totalorder %s66, %s67
    %p81 = scmp.eq.s32.totalorder %s19, 3
    %p82 = por %p80, %p81
    %p84 = scmp.ne.s32.totalorder %s67, %s83
    %p85 = scmp.eq.s32.totalorder %s19, 0
    %p86 = por %p84, %p85
    %s88 = sadd.s32 %s87, 1
    %p91 = scmp.eq.s32.totalorder %s13, 3
    %p92 = scmp.ne.s32.totalorder %s87, %s89
    %p93 = scmp.eq.s32.totalorder %s13, 0
    %p94 = por %p92, %p93
    %p95 = scmp.ne.s32.totalorder %s87, %s89
    %p96 = scmp.eq.s32.totalorder %s18, 3
    %p97 = por %p95, %p96
    %p98 = scmp.ne.s32.totalorder %s89, %s90
    %p99 = scmp.eq.s32.totalorder %s18, 0
    %p100 = por %p98, %p99
    %p101 = scmp.ne.s32.totalorder %s89, %s90
    %p102 = scmp.eq.s32.totalorder %s19, 3
    %p103 = por %p101, %p102
    %p105 = scmp.ne.s32.totalorder %s90, %s104
    %p106 = scmp.eq.s32.totalorder %s19, 0
    %p107 = por %p105, %p106
    %s109 = sadd.s32 %s108, 1
    %p112 = scmp.eq.s32.totalorder %s13, 3
    %p113 = scmp.ne.s32.totalorder %s108, %s110
    %p114 = scmp.eq.s32.totalorder %s13, 0
    %p115 = por %p113, %p114
    %p116 = scmp.ne.s32.totalorder %s108, %s110
    %p117 = scmp.eq.s32.totalorder %s18, 3
    %p118 = por %p116, %p117
    %p119 = scmp.ne.s32.totalorder %s110, %s111
    %p120 = scmp.eq.s32.totalorder %s18, 0
    %p121 = por %p119, %p120
    %p122 = scmp.ne.s32.totalorder %s110, %s111
    %p123 = scmp.eq.s32.totalorder %s19, 3
    %p124 = por %p122, %p123
    %p126 = scmp.ne.s32.totalorder %s111, %s125
    %p127 = scmp.eq.s32.totalorder %s19, 0
    %p128 = por %p126, %p127
    %s130 = sadd.s32 %s129, 1
    %p133 = scmp.eq.s32.totalorder %s13, 3
    %p134 = scmp.ne.s32.totalorder %s129, %s131
    %p135 = scmp.eq.s32.totalorder %s13, 0
    %p136 = por %p134, %p135
    %p137 = scmp.ne.s32.totalorder %s129, %s131
    %p138 = scmp.eq.s32.totalorder %s18, 3
    %p139 = por %p137, %p138
    %p140 = scmp.ne.s32.totalorder %s131, %s132
    %p141 = scmp.eq.s32.totalorder %s18, 0
    %p142 = por %p140, %p141
    %p143 = scmp.ne.s32.totalorder %s131, %s132
    %p144 = scmp.eq.s32.totalorder %s19, 3
    %p145 = por %p143, %p144
    %p147 = scmp.ne.s32.totalorder %s132, %s146
    %p148 = scmp.eq.s32.totalorder %s19, 0
    %p149 = por %p147, %p148
    %s151 = sadd.s32 %s150, 1
    %p154 = scmp.eq.s32.totalorder %s13, 3
    %p155 = scmp.ne.s32.totalorder %s150, %s152
    %p156 = scmp.eq.s32.totalorder %s13, 0
    %p157 = por %p155, %p156
    %p158 = scmp.ne.s32.totalorder %s150, %s152
    %p159 = scmp.eq.s32.totalorder %s18, 3
    %p160 = por %p158, %p159
    %p161 = scmp.ne.s32.totalorder %s152, %s153
    %p162 = scmp.eq.s32.totalorder %s18, 0
    %p163 = por %p161, %p162
    %p164 = scmp.ne.s32.totalorder %s152, %s153
    %p165 = scmp.eq.s32.totalorder %s19, 3
    %p166 = por %p164, %p165
    %p168 = scmp.ne.s32.totalorder %s153, %s167
    %p169 = scmp.eq.s32.totalorder %s19, 0
    %p170 = por %p168, %p169
    %s172 = sadd.s32 %s171, 1
    %p175 = scmp.eq.s32.totalorder %s13, 3
    %p176 = scmp.ne.s32.totalorder %s171, %s173
    %p177 = scmp.eq.s32.totalorder %s13, 0
    %p178 = por %p176, %p177
    %p179 = scmp.ne.s32.totalorder %s171, %s173
    %p180 = scmp.eq.s32.totalorder %s18, 3
    %p181 = por %p179, %p180
    %p182 = scmp.ne.s32.totalorder %s173, %s174
    %p183 = scmp.eq.s32.totalorder %s18, 0
    %p184 = por %p182, %p183
    %p185 = scmp.ne.s32.totalorder %s173, %s174
    %p186 = scmp.eq.s32.totalorder %s19, 3
    %p187 = por %p185, %p186
    %p189 = scmp.ne.s32.totalorder %s174, %s188
    %p190 = scmp.eq.s32.totalorder %s19, 0
    %p191 = por %p189, %p190
    %p192 = scmp.le.s32.totalorder 1, %s13
    %p193 = scmp.lt.s32.totalorder %s13, 5
    %p194 = pnand %p192, %p193
    %p195 = pneg %p194
    // Predicated region
    $region9: #{ab_distill_forward.6} parent=5 // pred_check
      _
    $region10: #{ab_distill_forward.6} parent=5 // pred_check_branch
      %197 = sbr.rel (%p194) target = $region12
    $region11: #{ab_distill_forward.6} parent=5 // pred_region
      %s198 = ssub.s32 %s13, 1
      // Predicated region
      $region13: #{ab_distill_forward.6} parent=11 // pred_check
        %p199 = pneg %p100
      $region14: #{ab_distill_forward.6} parent=11 // pred_check_branch
        %201 = sbr.rel (%p199) target = $region16
      $region15: #{ab_distill_forward.6} parent=11 // pred_region
        _
      $region16: #{ab_distill_forward.6} parent=11 // pred_fallthru
        _
      // Predicated region
      $region17: #{ab_distill_forward.6} parent=11 // pred_check
        %p202 = pneg %p121
      $region18: #{ab_distill_forward.6} parent=11 // pred_check_branch
        %204 = sbr.rel (%p202) target = $region20
      $region19: #{ab_distill_forward.6} parent=11 // pred_region
        _
      $region20: #{ab_distill_forward.6} parent=11 // pred_fallthru
        _
      // Predicated region
      $region21: #{ab_distill_forward.6} parent=11 // pred_check
        %p205 = pneg %p142
      $region22: #{ab_distill_forward.6} parent=11 // pred_check_branch
        %207 = sbr.rel (%p205) target = $region24
      $region23: #{ab_distill_forward.6} parent=11 // pred_region
        _
      $region24: #{ab_distill_forward.6} parent=11 // pred_fallthru
        _
    $region12: #{ab_distill_forward.6} parent=5 // pred_fallthru
      _
    %p208 = scmp.lt.s32.totalorder %s13, 4
    // Predicated region
    $region25: #{ab_distill_forward.6} parent=5 // pred_check
      %p209 = pneg %p208
    $region26: #{ab_distill_forward.6} parent=5 // pred_check_branch
      %211 = sbr.rel (%p209) target = $region28
    $region27: #{ab_distill_forward.6} parent=5 // pred_region
      // Predicated region
      $region29: #{ab_distill_forward.6} parent=27 // pred_check
        %p212 = pneg %p45
      $region30: #{ab_distill_forward.6} parent=27 // pred_check_branch
        %214 = sbr.rel (%p212) target = $region32
      $region31: #{ab_distill_forward.6} parent=27 // pred_region
        %s215 = smul.u32 8, %s21
        %p216 = scmp.lt.s32.totalorder %s215, 15
        %s217 = scalar_select %p216, %s215, 15
        %s218 = smul.addr %s217, 4
        %s219 = scalar_lea.vmem %s0, %s218
        %s220 = smul.u32 8, %s21
      $region32: #{ab_distill_forward.6} parent=27 // pred_fallthru
        _
      // Predicated region
      $region33: #{ab_distill_forward.6} parent=27 // pred_check
        %p221 = pneg %p73
      $region34: #{ab_distill_forward.6} parent=27 // pred_check_branch
        %223 = sbr.rel (%p221) target = $region36
      $region35: #{ab_distill_forward.6} parent=27 // pred_region
        %s224 = smul.u32 %s20, %s21
        %s225 = smul.u32 8, %s224
        %p226 = scmp.lt.s32.totalorder %s225, 15
        %s227 = scalar_select %p226, %s225, 15
        %s228 = smul.addr %s227, 4
        %s229 = scalar_lea.vmem %s1, %s228
        %s230 = smul.u32 %s20, %s21
        %s231 = smul.u32 8, %s230
      $region36: #{ab_distill_forward.6} parent=27 // pred_fallthru
        _
    $region28: #{ab_distill_forward.6} parent=5 // pred_fallthru
      _
    %p232 = scmp.le.s32.totalorder 1, %s13
    %p233 = scmp.lt.s32.totalorder %s13, 5
    %p234 = pnand %p232, %p233
    %p235 = pneg %p234
    // Predicated region
    $region37: #{ab_distill_forward.6} parent=5 // pred_check
      _
    $region38: #{ab_distill_forward.6} parent=5 // pred_check_branch
      %237 = sbr.rel (%p234) target = $region40
    $region39: #{ab_distill_forward.6} parent=5 // pred_region
      %s238 = ssub.s32 %s13, 1
      %s239 = smul.u32 8, %s23
      %p240 = scmp.lt.s32.totalorder %s239, 15
      %s241 = scalar_select %p240, %s239, 15
      %s242 = smul.addr %s241, 4
      %s243 = scalar_lea.vmem %s0, %s242
      %p244 = pneg %p51
      %p245 = pneg %p48
      %s246 = smul.u32 %s22, %s23
      %s247 = smul.u32 8, %s246
      %p248 = scmp.lt.s32.totalorder %s247, 15
      %s249 = scalar_select %p248, %s247, 15
      %s250 = smul.addr %s249, 4
      %s251 = scalar_lea.vmem %s1, %s250
      %p252 = pneg %p79
      %p253 = pneg %p76
      %p254 = pneg %p100
      %p255 = pneg %p97
      %p256 = pneg %p121
      %p257 = pneg %p118
      %p258 = pneg %p142
      %p259 = pneg %p139
      %p260 = pneg %p163
      %p261 = pneg %p160
      %p262 = pneg %p184
      %p263 = pneg %p181
      %s264 = smul.u32 8, %s23
      %p265 = scmp.lt.s32.totalorder %s264, 15
      %s266 = scalar_select %p265, %s264, 15
      %s267 = smul.addr %s266, 4
      %s268 = scalar_lea.vmem %s0, %s267
      %s269 = smul.u32 8, %s23
      %s270 = smul.u32 %s22, %s23
      %s271 = smul.u32 8, %s270
      %p272 = scmp.lt.s32.totalorder %s271, 15
      %s273 = scalar_select %p272, %s271, 15
      %s274 = smul.addr %s273, 4
      %s275 = scalar_lea.vmem %s1, %s274
      %s276 = smul.u32 %s22, %s23
      %s277 = smul.u32 8, %s276
      %v278 = vld [vmem:[%s268] sm:$0xf]
      %v279 = vld [vmem:[%s268 + $0x4] sm:$0xf]
      %v280 = vld [vmem:[%s268 + $0x8] sm:$0xf]
      %v281 = vld [vmem:[%s268 + $0xc] sm:$0xf]
      %v282 = vld [vmem:[%s268 + $0x10] sm:$0xf]
      %v283 = vld [vmem:[%s268 + $0x14] sm:$0xf]
      %v284 = vld [vmem:[%s268 + $0x18] sm:$0xf]
      %v285 = vld [vmem:[%s268 + $0x1c] sm:$0xf]
      %v286 = vld [vmem:[%s2] sm:$0xf]
      %v287 = vld [vmem:[%s2 + $0x4] sm:$0xf]
      %v288 = vld [vmem:[%s2 + $0x8] sm:$0xf]
      %v289 = vld [vmem:[%s2 + $0xc] sm:$0xf]
      %v290 = vld [vmem:[%s2 + $0x10] sm:$0xf]
      %v291 = vld [vmem:[%s2 + $0x14] sm:$0xf]
      %v292 = vld [vmem:[%s2 + $0x18] sm:$0xf]
      %v293 = vld [vmem:[%s2 + $0x1c] sm:$0xf]
      %v294 = vld [vmem:[%s2 + $0x20] sm:$0xf]
      %v295 = vld [vmem:[%s2 + $0x24] sm:$0xf]
      %v296 = vld [vmem:[%s2 + $0x28] sm:$0xf]
      %v297 = vld [vmem:[%s2 + $0x2c] sm:$0xf]
      %v298 = vld [vmem:[%s2 + $0x30] sm:$0xf]
      %v299 = vld [vmem:[%s2 + $0x34] sm:$0xf]
      %v300 = vld [vmem:[%s2 + $0x38] sm:$0xf]
      %v301 = vld [vmem:[%s2 + $0x3c] sm:$0xf]
      %v310 = vunpack.c.l.b16 %v278
      %v311 = vunpack.c.l.b16 %v279
      %v312 = vunpack.c.l.b16 %v280
      %v313 = vunpack.c.l.b16 %v281
      %v314 = vunpack.c.l.b16 %v282
      %v315 = vunpack.c.l.b16 %v283
      %v316 = vunpack.c.l.b16 %v284
      %v317 = vunpack.c.l.b16 %v285
      %v318 = vpack.c.b16 %v311, %v310
      %v319 = vpack.c.b16 %v313, %v312
      %v320 = vpack.c.b16 %v315, %v314
      %v321 = vpack.c.b16 %v317, %v316
      %v342 = vunpack.c.l.b16 %v286
      %v343 = vunpack.c.l.b16 %v287
      %v344 = vunpack.c.l.b16 %v288
      %v345 = vunpack.c.l.b16 %v289
      %v346 = vunpack.c.l.b16 %v290
      %v347 = vunpack.c.l.b16 %v291
      %v348 = vunpack.c.l.b16 %v292
      %v349 = vunpack.c.l.b16 %v293
      %v350 = vunpack.c.l.b16 %v294
      %v351 = vunpack.c.l.b16 %v295
      %v352 = vunpack.c.l.b16 %v296
      %v353 = vunpack.c.l.b16 %v297
      %v354 = vunpack.c.l.b16 %v298
      %v355 = vunpack.c.l.b16 %v299
      %v356 = vunpack.c.l.b16 %v300
      %v357 = vunpack.c.l.b16 %v301
      %v358 = vpack.c.b16 %v343, %v342
      %v359 = vpack.c.b16 %v345, %v344
      %v360 = vpack.c.b16 %v347, %v346
      %v361 = vpack.c.b16 %v349, %v348
      %v362 = vpack.c.b16 %v351, %v350
      %v363 = vpack.c.b16 %v353, %v352
      %v364 = vpack.c.b16 %v355, %v354
      %v365 = vpack.c.b16 %v357, %v356
      %374 = vmatpush.bf16.msra.mxu0 %v365
      %375 = vmatpush.bf16.msra.mxu0 %v364
      %376 = vmatpush.bf16.msra.mxu0 %v363
      %377 = vmatpush.bf16.msra.mxu0 %v362
      %378 = vmatpush.bf16.msra.mxu0 %v361
      %379 = vmatpush.bf16.msra.mxu0 %v360
      %380 = vmatpush.bf16.msra.mxu0 %v359
      %381 = vmatpush.bf16.msra.mxu0 %v358
      %382 = vmatmul.bf16.gmra.mxu0 %v318
      %v383 = vpop.f32.mrf.mxu0
      %v384 = vadd.f32 0.0, %v383
      %v385 = vpop.f32.mrf.mxu0
      %v386 = vadd.f32 0.0, %v385
      %387 = vmatmul.bf16.gmra.mxu0 %v319
      %v388 = vpop.f32.mrf.mxu0
      %v389 = vadd.f32 0.0, %v388
      %v390 = vpop.f32.mrf.mxu0
      %v391 = vadd.f32 0.0, %v390
      %392 = vmatmul.bf16.gmra.mxu0 %v320
      %v393 = vpop.f32.mrf.mxu0
      %v394 = vadd.f32 0.0, %v393
      %v395 = vpop.f32.mrf.mxu0
      %v396 = vadd.f32 0.0, %v395
      %397 = vmatmul.bf16.gmra.mxu0 %v321
      %v398 = vpop.f32.mrf.mxu0
      %v399 = vadd.f32 0.0, %v398
      %v400 = vpop.f32.mrf.mxu0
      %v401 = vadd.f32 0.0, %v400
      %402 = vdwg.mxu0
      %p403 = scmp.eq.s32.totalorder %s22, 0
      %p404 = scmp.eq.s32.totalorder %s23, 0
      %p405 = pnand %p403, %p404
      %p406 = pneg %p405
      // Predicated region
      $region41: #{ab_distill_forward.6} parent=39 // pred_check
        _
      $region42: #{ab_distill_forward.6} parent=39 // pred_check_branch
        %408 = sbr.rel (%p405) target = $region44
      $region43: #{ab_distill_forward.6} parent=39 // pred_region
        %409 = vst [vmem:[#allocation2] sm:$0x1] 0.0
        %410 = vst [vmem:[#allocation3] sm:$0x1] 0.0
      $region44: #{ab_distill_forward.6} parent=39 // pred_fallthru
        _
      // Predicated region
      $region45: #{ab_distill_forward.6} parent=39 // pred_check
        %p411 = pneg %p403
      $region46: #{ab_distill_forward.6} parent=39 // pred_check_branch
        %413 = sbr.rel (%p411) target = $region48
      $region47: #{ab_distill_forward.6} parent=39 // pred_region
        %v414 = vld [vmem:[#allocation2] sm:$0x1]
        %v415 = vadd.f32 %v384, %v386
        %v416 = vadd.f32 %v415, %v389
        %v417 = vadd.f32 %v416, %v391
        %v418 = vadd.f32 %v417, %v394
        %v419 = vadd.f32 %v418, %v396
        %v420 = vadd.f32 %v419, %v399
        %v421 = vadd.f32 %v420, %v401
        %v422 = vrot.slane %v421, 4
        %v423 = vadd.f32 %v421, %v422
        %v424 = vrot.slane %v423, 2
        %v425 = vadd.f32 %v423, %v424
        %v426 = vrot.slane %v425, 1
        %v427 = vadd.f32 %v425, %v426
        %v428 = vadd.f32 %v414, %v427
        %429 = vst [vmem:[#allocation2] sm:$0x1] %v428
        %v430 = vld [vmem:[#allocation3] sm:$0x1]
        %v431 = vmul.f32 %v384, %v384
        %v432 = vmul.f32 %v386, %v386
        %v433 = vmul.f32 %v389, %v389
        %v434 = vmul.f32 %v391, %v391
        %v435 = vmul.f32 %v394, %v394
        %v436 = vmul.f32 %v396, %v396
        %v437 = vmul.f32 %v399, %v399
        %v438 = vmul.f32 %v401, %v401
        %v439 = vadd.f32 %v431, %v432
        %v440 = vadd.f32 %v439, %v433
        %v441 = vadd.f32 %v440, %v434
        %v442 = vadd.f32 %v441, %v435
        %v443 = vadd.f32 %v442, %v436
        %v444 = vadd.f32 %v443, %v437
        %v445 = vadd.f32 %v444, %v438
        %v446 = vrot.slane %v445, 4
        %v447 = vadd.f32 %v445, %v446
        %v448 = vrot.slane %v447, 2
        %v449 = vadd.f32 %v447, %v448
        %v450 = vrot.slane %v449, 1
        %v451 = vadd.f32 %v449, %v450
        %v452 = vadd.f32 %v430, %v451
        %453 = vst [vmem:[#allocation3] sm:$0x1] %v452
      $region48: #{ab_distill_forward.6} parent=39 // pred_fallthru
        _
      %p454 = scmp.eq.s32.totalorder %s23, 1
      %p455 = pnand %p403, %p454
      %p456 = pneg %p455
      // Predicated region
      $region49: #{ab_distill_forward.6} parent=39 // pred_check
        _
      $region50: #{ab_distill_forward.6} parent=39 // pred_check_branch
        %458 = sbr.rel (%p455) target = $region52
      $region51: #{ab_distill_forward.6} parent=39 // pred_region
        %v459 = vld [vmem:[#allocation2] sm:$0x1]
        %v460 = vmul.f32 %v459, 0.0078125
        %v461 = vld [vmem:[#allocation3] sm:$0x1]
        %v462 = vmul.f32 %v461, 0.0078125
        %v463 = vmul.f32 %v460, %v460
        %v464 = vsub.f32 %v462, %v463
        %v465 = vmax.f32 %v464, 0.0
        %v466 = vld [vmem:[%s3] sm:$0x1]
        %v467 = vadd.f32 %v465, 1e-05
        %v468 = vrsqrt.pop %v467
        %v469 = vmul.f32 %v468, %v467
        %v470 = vmul.f32 %v469, %v468
        %v471 = vmul.f32 0.5, %v470
        %v472 = vsub.f32 1.5, %v471
        %v473 = vmul.f32 %v468, %v472
        %vm474 = vweird.f32 %v467
        %vm475 = vweird.f32 %v468
        %vm476 = vmor %vm474, %vm475
        %v477 = vsel %vm476, %v468, %v473
        %v478 = vmul.f32 %v466, %v477
        %479 = vst [vmem:[#allocation4] sm:$0x1] %v478
        %v480 = vld [vmem:[%s4] sm:$0x1]
        %v481 = vmul.f32 %v460, %v478
        %v482 = vsub.f32 %v480, %v481
        %483 = vst [vmem:[#allocation5] sm:$0x1] %v482
      $region52: #{ab_distill_forward.6} parent=39 // pred_fallthru
        _
      %p484 = scmp.eq.s32.totalorder %s22, 1
      %p485 = pnand %p484, %p404
      %p486 = pneg %p485
      // Predicated region
      $region53: #{ab_distill_forward.6} parent=39 // pred_check
        _
      $region54: #{ab_distill_forward.6} parent=39 // pred_check_branch
        %488 = sbr.rel (%p485) target = $region56
      $region55: #{ab_distill_forward.6} parent=39 // pred_region
        %489 = vst [vmem:[%s5] sm:$0x1] 0.0
        %490 = vst [vmem:[%s6] sm:$0x1] 0.0
      $region56: #{ab_distill_forward.6} parent=39 // pred_fallthru
        _
      // Predicated region
      $region57: #{ab_distill_forward.6} parent=39 // pred_check
        %p491 = pneg %p484
      $region58: #{ab_distill_forward.6} parent=39 // pred_check_branch
        %493 = sbr.rel (%p491) target = $region60
      $region59: #{ab_distill_forward.6} parent=39 // pred_region
        %v494 = vld [vmem:[#allocation4] sm:$0x1]
        %v496 = vperm.slane %v494, 0
        %v498 = vmul.f32 %v384, %v496
        %v499 = vmul.f32 %v386, %v496
        %v500 = vmul.f32 %v389, %v496
        %v501 = vmul.f32 %v391, %v496
        %v502 = vmul.f32 %v394, %v496
        %v503 = vmul.f32 %v396, %v496
        %v504 = vmul.f32 %v399, %v496
        %v505 = vmul.f32 %v401, %v496
        %v506 = vld [vmem:[#allocation5] sm:$0x1]
        %v508 = vperm.slane %v506, 0
        %v510 = vadd.f32 %v498, %v508
        %v511 = vadd.f32 %v499, %v508
        %v512 = vadd.f32 %v500, %v508
        %v513 = vadd.f32 %v501, %v508
        %v514 = vadd.f32 %v502, %v508
        %v515 = vadd.f32 %v503, %v508
        %v516 = vadd.f32 %v504, %v508
        %v517 = vadd.f32 %v505, %v508
        %v518 = vld [vmem:[%s275] sm:$0xf]
        %v519 = vld [vmem:[%s275 + $0x4] sm:$0xf]
        %v520 = vld [vmem:[%s275 + $0x8] sm:$0xf]
        %v521 = vld [vmem:[%s275 + $0xc] sm:$0xf]
        %v522 = vld [vmem:[%s275 + $0x10] sm:$0xf]
        %v523 = vld [vmem:[%s275 + $0x14] sm:$0xf]
        %v524 = vld [vmem:[%s275 + $0x18] sm:$0xf]
        %v525 = vld [vmem:[%s275 + $0x1c] sm:$0xf]
        %v526 = vunpack.c.l.bf16 %v518
        %v527 = vunpack.c.l.bf16 %v519
        %v528 = vunpack.c.l.bf16 %v520
        %v529 = vunpack.c.l.bf16 %v521
        %v530 = vunpack.c.l.bf16 %v522
        %v531 = vunpack.c.l.bf16 %v523
        %v532 = vunpack.c.l.bf16 %v524
        %v533 = vunpack.c.l.bf16 %v525
        %v534 = vlaneseq
        %v535 = vand.u32 %v534, 127
        %vm536 = vcmp.lt.s32.totalorder %v535, 16
        %vm537 = vcmp.gt.f32.partialorder %v526, 0.0
        %vm538 = vcmp.gt.f32.partialorder %v527, 0.0
        %vm539 = vcmp.gt.f32.partialorder %v528, 0.0
        %vm540 = vcmp.gt.f32.partialorder %v529, 0.0
        %vm541 = vcmp.gt.f32.partialorder %v530, 0.0
        %vm542 = vcmp.gt.f32.partialorder %v531, 0.0
        %vm543 = vcmp.gt.f32.partialorder %v532, 0.0
        %vm544 = vcmp.gt.f32.partialorder %v533, 0.0
        %vm545 = vcmp.gt.f32.partialorder %v510, -1.0
        %vm546 = vcmp.gt.f32.partialorder %v511, -1.0
        %vm547 = vcmp.gt.f32.partialorder %v512, -1.0
        %vm548 = vcmp.gt.f32.partialorder %v513, -1.0
        %vm549 = vcmp.gt.f32.partialorder %v514, -1.0
        %vm550 = vcmp.gt.f32.partialorder %v515, -1.0
        %vm551 = vcmp.gt.f32.partialorder %v516, -1.0
        %vm552 = vcmp.gt.f32.partialorder %v517, -1.0
        %vm553 = vmand %vm536, %vm545
        %vm554 = vmand %vm536, %vm546
        %vm555 = vmand %vm536, %vm547
        %vm556 = vmand %vm536, %vm548
        %vm557 = vmand %vm536, %vm549
        %vm558 = vmand %vm536, %vm550
        %vm559 = vmand %vm536, %vm551
        %vm560 = vmand %vm536, %vm552
        %vm561 = vmxor %vm537, 1
        %vm562 = vmxor %vm538, 1
        %vm563 = vmxor %vm539, 1
        %vm564 = vmxor %vm540, 1
        %vm565 = vmxor %vm541, 1
        %vm566 = vmxor %vm542, 1
        %vm567 = vmxor %vm543, 1
        %vm568 = vmxor %vm544, 1
        %vm569 = vmand %vm553, %vm561
        %vm570 = vmand %vm554, %vm562
        %vm571 = vmand %vm555, %vm563
        %vm572 = vmand %vm556, %vm564
        %vm573 = vmand %vm557, %vm565
        %vm574 = vmand %vm558, %vm566
        %vm575 = vmand %vm559, %vm567
        %vm576 = vmand %vm560, %vm568
        %v577 = vadd.f32 %v510, 1.0
        %v578 = vadd.f32 %v511, 1.0
        %v579 = vadd.f32 %v512, 1.0
        %v580 = vadd.f32 %v513, 1.0
        %v581 = vadd.f32 %v514, 1.0
        %v582 = vadd.f32 %v515, 1.0
        %v583 = vadd.f32 %v516, 1.0
        %v584 = vadd.f32 %v517, 1.0
        %v585 = vmul.f32 %v577, %v577
        %v586 = vmul.f32 %v578, %v578
        %v587 = vmul.f32 %v579, %v579
        %v588 = vmul.f32 %v580, %v580
        %v589 = vmul.f32 %v581, %v581
        %v590 = vmul.f32 %v582, %v582
        %v591 = vmul.f32 %v583, %v583
        %v592 = vmul.f32 %v584, %v584
        %v593 = vsel %vm569, %v585, 0.0
        %v594 = vsel %vm570, %v586, 0.0
        %v595 = vsel %vm571, %v587, 0.0
        %v596 = vsel %vm572, %v588, 0.0
        %v597 = vsel %vm573, %v589, 0.0
        %v598 = vsel %vm574, %v590, 0.0
        %v599 = vsel %vm575, %v591, 0.0
        %v600 = vsel %vm576, %v592, 0.0
        %vm601 = vcmp.le.f32.partialorder %v510, 1.0
        %vm602 = vcmp.le.f32.partialorder %v511, 1.0
        %vm603 = vcmp.le.f32.partialorder %v512, 1.0
        %vm604 = vcmp.le.f32.partialorder %v513, 1.0
        %vm605 = vcmp.le.f32.partialorder %v514, 1.0
        %vm606 = vcmp.le.f32.partialorder %v515, 1.0
        %vm607 = vcmp.le.f32.partialorder %v516, 1.0
        %vm608 = vcmp.le.f32.partialorder %v517, 1.0
        %vm609 = vmand %vm536, %vm601
        %vm610 = vmand %vm536, %vm602
        %vm611 = vmand %vm536, %vm603
        %vm612 = vmand %vm536, %vm604
        %vm613 = vmand %vm536, %vm605
        %vm614 = vmand %vm536, %vm606
        %vm615 = vmand %vm536, %vm607
        %vm616 = vmand %vm536, %vm608
        %vm617 = vmand %vm609, %vm537
        %vm618 = vmand %vm610, %vm538
        %vm619 = vmand %vm611, %vm539
        %vm620 = vmand %vm612, %vm540
        %vm621 = vmand %vm613, %vm541
        %vm622 = vmand %vm614, %vm542
        %vm623 = vmand %vm615, %vm543
        %vm624 = vmand %vm616, %vm544
        %v625 = vsub.f32 %v510, 1.0
        %v626 = vsub.f32 %v511, 1.0
        %v627 = vsub.f32 %v512, 1.0
        %v628 = vsub.f32 %v513, 1.0
        %v629 = vsub.f32 %v514, 1.0
        %v630 = vsub.f32 %v515, 1.0
        %v631 = vsub.f32 %v516, 1.0
        %v632 = vsub.f32 %v517, 1.0
        %v633 = vmul.f32 %v625, %v625
        %v634 = vmul.f32 %v626, %v626
        %v635 = vmul.f32 %v627, %v627
        %v636 = vmul.f32 %v628, %v628
        %v637 = vmul.f32 %v629, %v629
        %v638 = vmul.f32 %v630, %v630
        %v639 = vmul.f32 %v631, %v631
        %v640 = vmul.f32 %v632, %v632
        %v641 = vsel %vm617, %v633, 0.0
        %v642 = vsel %vm618, %v634, 0.0
        %v643 = vsel %vm619, %v635, 0.0
        %v644 = vsel %vm620, %v636, 0.0
        %v645 = vsel %vm621, %v637, 0.0
        %v646 = vsel %vm622, %v638, 0.0
        %v647 = vsel %vm623, %v639, 0.0
        %v648 = vsel %vm624, %v640, 0.0
        %v649 = vadd.f32 %v593, %v641
        %v650 = vadd.f32 %v594, %v642
        %v651 = vadd.f32 %v595, %v643
        %v652 = vadd.f32 %v596, %v644
        %v653 = vadd.f32 %v597, %v645
        %v654 = vadd.f32 %v598, %v646
        %v655 = vadd.f32 %v599, %v647
        %v656 = vadd.f32 %v600, %v648
        %vm657 = vcmp.gt.f32.partialorder %v510, 0.0
        %vm658 = vcmp.gt.f32.partialorder %v511, 0.0
        %vm659 = vcmp.gt.f32.partialorder %v512, 0.0
        %vm660 = vcmp.gt.f32.partialorder %v513, 0.0
        %vm661 = vcmp.gt.f32.partialorder %v514, 0.0
        %vm662 = vcmp.gt.f32.partialorder %v515, 0.0
        %vm663 = vcmp.gt.f32.partialorder %v516, 0.0
        %vm664 = vcmp.gt.f32.partialorder %v517, 0.0
        %vm665 = vmxor %vm657, %vm537
        %vm666 = vmxor %vm658, %vm538
        %vm667 = vmxor %vm659, %vm539
        %vm668 = vmxor %vm660, %vm540
        %vm669 = vmxor %vm661, %vm541
        %vm670 = vmxor %vm662, %vm542
        %vm671 = vmxor %vm663, %vm543
        %vm672 = vmxor %vm664, %vm544
        %vm673 = vmand %vm536, %vm665
        %vm674 = vmand %vm536, %vm666
        %vm675 = vmand %vm536, %vm667
        %vm676 = vmand %vm536, %vm668
        %vm677 = vmand %vm536, %vm669
        %vm678 = vmand %vm536, %vm670
        %vm679 = vmand %vm536, %vm671
        %vm680 = vmand %vm536, %vm672
        %v681 = vsel %vm673, 1.0, 0.0
        %v682 = vsel %vm674, 1.0, 0.0
        %v683 = vsel %vm675, 1.0, 0.0
        %v684 = vsel %vm676, 1.0, 0.0
        %v685 = vsel %vm677, 1.0, 0.0
        %v686 = vsel %vm678, 1.0, 0.0
        %v687 = vsel %vm679, 1.0, 0.0
        %v688 = vsel %vm680, 1.0, 0.0
        %v689 = vld [vmem:[%s5] sm:$0x1]
        %v690 = vadd.f32 %v649, %v650
        %v691 = vadd.f32 %v690, %v651
        %v692 = vadd.f32 %v691, %v652
        %v693 = vadd.f32 %v692, %v653
        %v694 = vadd.f32 %v693, %v654
        %v695 = vadd.f32 %v694, %v655
        %v696 = vadd.f32 %v695, %v656
        %v697 = vrot.slane %v696, 4
        %v698 = vadd.f32 %v696, %v697
        %v699 = vrot.slane %v698, 2
        %v700 = vadd.f32 %v698, %v699
        %v701 = vrot.slane %v700, 1
        %v702 = vadd.f32 %v700, %v701
        %v703 = vmul.f32 %v702, 0.0009765625
        %v704 = vadd.f32 %v689, %v703
        %705 = vst [vmem:[%s5] sm:$0x1] %v704
        %v706 = vld [vmem:[%s6] sm:$0x1]
        %v707 = vadd.f32 %v681, %v682
        %v708 = vadd.f32 %v707, %v683
        %v709 = vadd.f32 %v708, %v684
        %v710 = vadd.f32 %v709, %v685
        %v711 = vadd.f32 %v710, %v686
        %v712 = vadd.f32 %v711, %v687
        %v713 = vadd.f32 %v712, %v688
        %v714 = vrot.slane %v713, 4
        %v715 = vadd.f32 %v713, %v714
        %v716 = vrot.slane %v715, 2
        %v717 = vadd.f32 %v715, %v716
        %v718 = vrot.slane %v717, 1
        %v719 = vadd.f32 %v717, %v718
        %v720 = vmul.f32 %v719, 0.00048828125
        %v721 = vadd.f32 %v706, %v720
        %722 = vst [vmem:[%s6] sm:$0x1] %v721
      $region60: #{ab_distill_forward.6} parent=39 // pred_fallthru
        _
      // Predicated region
      $region61: #{ab_distill_forward.6} parent=39 // pred_check
        %p723 = pneg %p160
      $region62: #{ab_distill_forward.6} parent=39 // pred_check_branch
        %725 = sbr.rel (%p723) target = $region64
      $region63: #{ab_distill_forward.6} parent=39 // pred_region
        _
      $region64: #{ab_distill_forward.6} parent=39 // pred_fallthru
        _
      // Predicated region
      $region65: #{ab_distill_forward.6} parent=39 // pred_check
        %p726 = pneg %p181
      $region66: #{ab_distill_forward.6} parent=39 // pred_check_branch
        %728 = sbr.rel (%p726) target = $region68
      $region67: #{ab_distill_forward.6} parent=39 // pred_region
        _
      $region68: #{ab_distill_forward.6} parent=39 // pred_fallthru
        _
      // Predicated region
      $region69: #{ab_distill_forward.6} parent=39 // pred_check
        %p729 = pneg %p160
      $region70: #{ab_distill_forward.6} parent=39 // pred_check_branch
        %731 = sbr.rel (%p729) target = $region72
      $region71: #{ab_distill_forward.6} parent=39 // pred_region
        _
      $region72: #{ab_distill_forward.6} parent=39 // pred_fallthru
        _
      // Predicated region
      $region73: #{ab_distill_forward.6} parent=39 // pred_check
        %p732 = pneg %p181
      $region74: #{ab_distill_forward.6} parent=39 // pred_check_branch
        %734 = sbr.rel (%p732) target = $region76
      $region75: #{ab_distill_forward.6} parent=39 // pred_region
        _
      $region76: #{ab_distill_forward.6} parent=39 // pred_fallthru
        _
    $region40: #{ab_distill_forward.6} parent=5 // pred_fallthru
      _
    %p735 = scmp.le.s32.totalorder 2, %s13
    // Predicated region
    $region77: #{ab_distill_forward.6} parent=5 // pred_check
      %p736 = pneg %p735
    $region78: #{ab_distill_forward.6} parent=5 // pred_check_branch
      %738 = sbr.rel (%p736) target = $region80
    $region79: #{ab_distill_forward.6} parent=5 // pred_region
      %s739 = ssub.s32 %s13, 2
    $region80: #{ab_distill_forward.6} parent=5 // pred_fallthru
      _
  $region6: #{ab_distill_forward.6} parent=0 // loop_footer
    %s17 = sadd.s32 1, %s13
  $region7: #{ab_distill_forward.6} parent=0 // loop_footer_branch
    %12 = sbr.rel target = $region3
  $region8: #{ab_distill_forward.6} parent=0 // loop_exit
    _

// kernel: ab_distill_forward.7
$region0: #{ab_distill_forward.7}
  #allocation0 [shape = 'u32[]', space=smem, size = 0x4, offset = 0x4, fixed_abs, tag = 'smem constant byte address 0x4 - core index']
  #allocation1 [shape = 'u32[72,128]{1,0:T(1,128)}', space=vmem, size = 0x9000, scoped, tag = 'internal scratch']
  #allocation2 [shape = 'f32[1,128]{1,0:T(1,128)}', space=vmem, size = 0x200, scoped, tag = 'scratch operand']
  #allocation3 [shape = 'f32[1,128]{1,0:T(1,128)}', space=vmem, size = 0x200, scoped, tag = 'scratch operand']
  #allocation4 [shape = 'f32[1,128]{1,0:T(1,128)}', space=vmem, size = 0x200, scoped, tag = 'scratch operand']
  #allocation5 [shape = 'f32[1,128]{1,0:T(1,128)}', space=vmem, size = 0x200, scoped, tag = 'scratch operand']
  %s0 = inlined_call_operand.vmem [shape: bf16[32,128], index: 0, kind: input, shape index: {}]
  %s1 = inlined_call_operand.vmem [shape: bf16[32,128], index: 1, kind: input, shape index: {}]
  %s2 = inlined_call_operand.vmem [shape: bf16[128,128], index: 2, kind: input, shape index: {}]
  %s3 = inlined_call_operand.vmem [shape: f32[1,128], index: 3, kind: input, shape index: {}]
  %s4 = inlined_call_operand.vmem [shape: f32[1,128], index: 4, kind: input, shape index: {}]
  %s5 = inlined_call_operand.vmem [shape: f32[1,128], index: 5, kind: output, shape index: {0}]
  %s6 = inlined_call_operand.vmem [shape: f32[1,128], index: 6, kind: output, shape index: {1}]
  %7 = xla_tuple %s5, %s6
  %s8 = sld [smem:[#allocation0]]
  $region81: #{ab_distill_forward.7} parent=0
    _
  %s10 = ssub.s32 1, %s8
  %s11 = scalar_select 0, %s10, %s8
  loop: start=0, step=1, limit=4
  $region2: #{ab_distill_forward.7} parent=0 // loop_pre_header
    _
  $region3: #{ab_distill_forward.7} parent=0 // loop_header
    %s13 = sphi 0, %s17
    %p14 = scmp.ge.s32.totalorder %s13, 4
    %s20 = sphi 0, %s32
    %s21 = sphi 0, %s28
    %s22 = sphi 0, %s20
    %s23 = sphi 0, %s21
    %s24 = sphi 0, %s22
    %s25 = sphi 0, %s23
    %s35 = sphi 0, %s37
    %s38 = sphi 0, %s35
    %s39 = sphi 0, %s38
    %s55 = sphi 0, %s39
    %s63 = sphi 0, %s65
    %s66 = sphi 0, %s63
    %s67 = sphi 0, %s66
    %s83 = sphi 0, %s67
    %s87 = sphi 0, %s87
    %s89 = sphi 0, %s87
    %s90 = sphi 0, %s89
    %s104 = sphi 0, %s90
    %s108 = sphi 0, %s108
    %s110 = sphi 0, %s108
    %s111 = sphi 0, %s110
    %s125 = sphi 0, %s111
    %s129 = sphi 0, %s129
    %s131 = sphi 0, %s129
    %s132 = sphi 0, %s131
    %s146 = sphi 0, %s132
    %s150 = sphi 0, %s150
    %s152 = sphi 0, %s150
    %s153 = sphi 0, %s152
    %s167 = sphi 0, %s153
    %s171 = sphi 0, %s171
    %s173 = sphi 0, %s171
    %s174 = sphi 0, %s173
    %s188 = sphi 0, %s174
  $region4: #{ab_distill_forward.7} parent=0 // loop_header_branch
    %16 = sbr.rel (%p14) target = $region8
  $region5: #{ab_distill_forward.7} parent=0 // loop_body
    %s18 = ssub.s32 %s13, 1
    %s19 = ssub.s32 %s13, 2
    %s26 = sadd.s32 1, %s21
    %p27 = scmp.ge.s32.totalorder %s26, 1
    %s28 = scalar_select %p27, 0, %s26
    %s29 = sadd.s32 1, %s20
    %s30 = scalar_select %p27, %s29, %s20
    %p31 = scmp.ge.s32.totalorder %s30, 2
    %s32 = scalar_select %p31, 0, %s30
    %s33 = ssub.s32 %s21, %s28
    %p34 = scmp.eq.s32.totalorder %s33, 0
    %s36 = sadd.s32 %s35, 1
    %s37 = scalar_select %p34, %s35, %s36
    %p40 = pneg %p34
    %p41 = scmp.eq.s32.totalorder %s13, 1
    %p42 = por %p40, %p41
    %p43 = scmp.ne.s32.totalorder %s35, %s38
    %p44 = scmp.eq.s32.totalorder %s13, 0
    %p45 = por %p43, %p44
    %p46 = scmp.ne.s32.totalorder %s35, %s38
    %p47 = scmp.eq.s32.totalorder %s18, 1
    %p48 = por %p46, %p47
    %p49 = scmp.ne.s32.totalorder %s38, %s39
    %p50 = scmp.eq.s32.totalorder %s18, 0
    %p51 = por %p49, %p50
    %p52 = scmp.ne.s32.totalorder %s38, %s39
    %p53 = scmp.eq.s32.totalorder %s19, 1
    %p54 = por %p52, %p53
    %p56 = scmp.ne.s32.totalorder %s39, %s55
    %p57 = scmp.eq.s32.totalorder %s19, 0
    %p58 = por %p56, %p57
    %s59 = smul.u32 %s20, %s21
    %s60 = smul.u32 %s32, %s28
    %s61 = ssub.s32 %s59, %s60
    %p62 = scmp.eq.s32.totalorder %s61, 0
    %s64 = sadd.s32 %s63, 1
    %s65 = scalar_select %p62, %s63, %s64
    %p68 = pneg %p62
    %p69 = scmp.eq.s32.totalorder %s13, 1
    %p70 = por %p68, %p69
    %p71 = scmp.ne.s32.totalorder %s63, %s66
    %p72 = scmp.eq.s32.totalorder %s13, 0
    %p73 = por %p71, %p72
    %p74 = scmp.ne.s32.totalorder %s63, %s66
    %p75 = scmp.eq.s32.totalorder %s18, 1
    %p76 = por %p74, %p75
    %p77 = scmp.ne.s32.totalorder %s66, %s67
    %p78 = scmp.eq.s32.totalorder %s18, 0
    %p79 = por %p77, %p78
    %p80 = scmp.ne.s32.totalorder %s66, %s67
    %p81 = scmp.eq.s32.totalorder %s19, 1
    %p82 = por %p80, %p81
    %p84 = scmp.ne.s32.totalorder %s67, %s83
    %p85 = scmp.eq.s32.totalorder %s19, 0
    %p86 = por %p84, %p85
    %s88 = sadd.s32 %s87, 1
    %p91 = scmp.eq.s32.totalorder %s13, 1
    %p92 = scmp.ne.s32.totalorder %s87, %s89
    %p93 = scmp.eq.s32.totalorder %s13, 0
    %p94 = por %p92, %p93
    %p95 = scmp.ne.s32.totalorder %s87, %s89
    %p96 = scmp.eq.s32.totalorder %s18, 1
    %p97 = por %p95, %p96
    %p98 = scmp.ne.s32.totalorder %s89, %s90
    %p99 = scmp.eq.s32.totalorder %s18, 0
    %p100 = por %p98, %p99
    %p101 = scmp.ne.s32.totalorder %s89, %s90
    %p102 = scmp.eq.s32.totalorder %s19, 1
    %p103 = por %p101, %p102
    %p105 = scmp.ne.s32.totalorder %s90, %s104
    %p106 = scmp.eq.s32.totalorder %s19, 0
    %p107 = por %p105, %p106
    %s109 = sadd.s32 %s108, 1
    %p112 = scmp.eq.s32.totalorder %s13, 1
    %p113 = scmp.ne.s32.totalorder %s108, %s110
    %p114 = scmp.eq.s32.totalorder %s13, 0
    %p115 = por %p113, %p114
    %p116 = scmp.ne.s32.totalorder %s108, %s110
    %p117 = scmp.eq.s32.totalorder %s18, 1
    %p118 = por %p116, %p117
    %p119 = scmp.ne.s32.totalorder %s110, %s111
    %p120 = scmp.eq.s32.totalorder %s18, 0
    %p121 = por %p119, %p120
    %p122 = scmp.ne.s32.totalorder %s110, %s111
    %p123 = scmp.eq.s32.totalorder %s19, 1
    %p124 = por %p122, %p123
    %p126 = scmp.ne.s32.totalorder %s111, %s125
    %p127 = scmp.eq.s32.totalorder %s19, 0
    %p128 = por %p126, %p127
    %s130 = sadd.s32 %s129, 1
    %p133 = scmp.eq.s32.totalorder %s13, 1
    %p134 = scmp.ne.s32.totalorder %s129, %s131
    %p135 = scmp.eq.s32.totalorder %s13, 0
    %p136 = por %p134, %p135
    %p137 = scmp.ne.s32.totalorder %s129, %s131
    %p138 = scmp.eq.s32.totalorder %s18, 1
    %p139 = por %p137, %p138
    %p140 = scmp.ne.s32.totalorder %s131, %s132
    %p141 = scmp.eq.s32.totalorder %s18, 0
    %p142 = por %p140, %p141
    %p143 = scmp.ne.s32.totalorder %s131, %s132
    %p144 = scmp.eq.s32.totalorder %s19, 1
    %p145 = por %p143, %p144
    %p147 = scmp.ne.s32.totalorder %s132, %s146
    %p148 = scmp.eq.s32.totalorder %s19, 0
    %p149 = por %p147, %p148
    %s151 = sadd.s32 %s150, 1
    %p154 = scmp.eq.s32.totalorder %s13, 1
    %p155 = scmp.ne.s32.totalorder %s150, %s152
    %p156 = scmp.eq.s32.totalorder %s13, 0
    %p157 = por %p155, %p156
    %p158 = scmp.ne.s32.totalorder %s150, %s152
    %p159 = scmp.eq.s32.totalorder %s18, 1
    %p160 = por %p158, %p159
    %p161 = scmp.ne.s32.totalorder %s152, %s153
    %p162 = scmp.eq.s32.totalorder %s18, 0
    %p163 = por %p161, %p162
    %p164 = scmp.ne.s32.totalorder %s152, %s153
    %p165 = scmp.eq.s32.totalorder %s19, 1
    %p166 = por %p164, %p165
    %p168 = scmp.ne.s32.totalorder %s153, %s167
    %p169 = scmp.eq.s32.totalorder %s19, 0
    %p170 = por %p168, %p169
    %s172 = sadd.s32 %s171, 1
    %p175 = scmp.eq.s32.totalorder %s13, 1
    %p176 = scmp.ne.s32.totalorder %s171, %s173
    %p177 = scmp.eq.s32.totalorder %s13, 0
    %p178 = por %p176, %p177
    %p179 = scmp.ne.s32.totalorder %s171, %s173
    %p180 = scmp.eq.s32.totalorder %s18, 1
    %p181 = por %p179, %p180
    %p182 = scmp.ne.s32.totalorder %s173, %s174
    %p183 = scmp.eq.s32.totalorder %s18, 0
    %p184 = por %p182, %p183
    %p185 = scmp.ne.s32.totalorder %s173, %s174
    %p186 = scmp.eq.s32.totalorder %s19, 1
    %p187 = por %p185, %p186
    %p189 = scmp.ne.s32.totalorder %s174, %s188
    %p190 = scmp.eq.s32.totalorder %s19, 0
    %p191 = por %p189, %p190
    %p192 = scmp.le.s32.totalorder 1, %s13
    %p193 = scmp.lt.s32.totalorder %s13, 3
    %p194 = pnand %p192, %p193
    %p195 = pneg %p194
    // Predicated region
    $region9: #{ab_distill_forward.7} parent=5 // pred_check
      _
    $region10: #{ab_distill_forward.7} parent=5 // pred_check_branch
      %197 = sbr.rel (%p194) target = $region12
    $region11: #{ab_distill_forward.7} parent=5 // pred_region
      %s198 = ssub.s32 %s13, 1
      // Predicated region
      $region13: #{ab_distill_forward.7} parent=11 // pred_check
        %p199 = pneg %p51
      $region14: #{ab_distill_forward.7} parent=11 // pred_check_branch
        %201 = sbr.rel (%p199) target = $region16
      $region15: #{ab_distill_forward.7} parent=11 // pred_region
        %s202 = smul.u32 4, %s23
        %p203 = scmp.lt.s32.totalorder %s202, 3
        %s204 = scalar_select %p203, %s202, 3
        %s205 = smul.addr %s204, 4
        %s206 = scalar_lea.vmem %s0, %s205
        %s207 = smul.u32 4, %s23
      $region16: #{ab_distill_forward.7} parent=11 // pred_fallthru
        _
      // Predicated region
      $region17: #{ab_distill_forward.7} parent=11 // pred_check
        %p208 = pneg %p100
      $region18: #{ab_distill_forward.7} parent=11 // pred_check_branch
        %210 = sbr.rel (%p208) target = $region20
      $region19: #{ab_distill_forward.7} parent=11 // pred_region
        _
      $region20: #{ab_distill_forward.7} parent=11 // pred_fallthru
        _
      // Predicated region
      $region21: #{ab_distill_forward.7} parent=11 // pred_check
        %p211 = pneg %p121
      $region22: #{ab_distill_forward.7} parent=11 // pred_check_branch
        %213 = sbr.rel (%p211) target = $region24
      $region23: #{ab_distill_forward.7} parent=11 // pred_region
        _
      $region24: #{ab_distill_forward.7} parent=11 // pred_fallthru
        _
      // Predicated region
      $region25: #{ab_distill_forward.7} parent=11 // pred_check
        %p214 = pneg %p142
      $region26: #{ab_distill_forward.7} parent=11 // pred_check_branch
        %216 = sbr.rel (%p214) target = $region28
      $region27: #{ab_distill_forward.7} parent=11 // pred_region
        _
      $region28: #{ab_distill_forward.7} parent=11 // pred_fallthru
        _
    $region12: #{ab_distill_forward.7} parent=5 // pred_fallthru
      _
    %p217 = scmp.lt.s32.totalorder %s13, 2
    // Predicated region
    $region29: #{ab_distill_forward.7} parent=5 // pred_check
      %p218 = pneg %p217
    $region30: #{ab_distill_forward.7} parent=5 // pred_check_branch
      %220 = sbr.rel (%p218) target = $region32
    $region31: #{ab_distill_forward.7} parent=5 // pred_region
      // Predicated region
      $region33: #{ab_distill_forward.7} parent=31 // pred_check
        %p221 = pneg %p73
      $region34: #{ab_distill_forward.7} parent=31 // pred_check_branch
        %223 = sbr.rel (%p221) target = $region36
      $region35: #{ab_distill_forward.7} parent=31 // pred_region
        %s224 = smul.u32 %s20, %s21
        %s225 = smul.u32 4, %s224
        %p226 = scmp.lt.s32.totalorder %s225, 3
        %s227 = scalar_select %p226, %s225, 3
        %s228 = smul.addr %s227, 4
        %s229 = scalar_lea.vmem %s1, %s228
        %s230 = smul.u32 %s20, %s21
        %s231 = smul.u32 4, %s230
      $region36: #{ab_distill_forward.7} parent=31 // pred_fallthru
        _
    $region32: #{ab_distill_forward.7} parent=5 // pred_fallthru
      _
    %p232 = scmp.le.s32.totalorder 1, %s13
    %p233 = scmp.lt.s32.totalorder %s13, 3
    %p234 = pnand %p232, %p233
    %p235 = pneg %p234
    // Predicated region
    $region37: #{ab_distill_forward.7} parent=5 // pred_check
      _
    $region38: #{ab_distill_forward.7} parent=5 // pred_check_branch
      %237 = sbr.rel (%p234) target = $region40
    $region39: #{ab_distill_forward.7} parent=5 // pred_region
      %s238 = ssub.s32 %s13, 1
      %s239 = smul.u32 4, %s23
      %p240 = scmp.lt.s32.totalorder %s239, 3
      %s241 = scalar_select %p240, %s239, 3
      %s242 = smul.addr %s241, 4
      %s243 = scalar_lea.vmem %s0, %s242
      %p244 = pneg %p51
      %p245 = pneg %p48
      %s246 = smul.u32 %s22, %s23
      %s247 = smul.u32 4, %s246
      %p248 = scmp.lt.s32.totalorder %s247, 3
      %s249 = scalar_select %p248, %s247, 3
      %s250 = smul.addr %s249, 4
      %s251 = scalar_lea.vmem %s1, %s250
      %p252 = pneg %p79
      %p253 = pneg %p76
      %p254 = pneg %p100
      %p255 = pneg %p97
      %p256 = pneg %p121
      %p257 = pneg %p118
      %p258 = pneg %p142
      %p259 = pneg %p139
      %p260 = pneg %p163
      %p261 = pneg %p160
      %p262 = pneg %p184
      %p263 = pneg %p181
      %s264 = smul.u32 4, %s23
      %p265 = scmp.lt.s32.totalorder %s264, 3
      %s266 = scalar_select %p265, %s264, 3
      %s267 = smul.addr %s266, 4
      %s268 = scalar_lea.vmem %s0, %s267
      %s269 = smul.u32 4, %s23
      %s270 = smul.u32 %s22, %s23
      %s271 = smul.u32 4, %s270
      %p272 = scmp.lt.s32.totalorder %s271, 3
      %s273 = scalar_select %p272, %s271, 3
      %s274 = smul.addr %s273, 4
      %s275 = scalar_lea.vmem %s1, %s274
      %s276 = smul.u32 %s22, %s23
      %s277 = smul.u32 4, %s276
      %v278 = vld [vmem:[%s268] sm:$0xf]
      %v279 = vld [vmem:[%s268 + $0x4] sm:$0xf]
      %v280 = vld [vmem:[%s268 + $0x8] sm:$0xf]
      %v281 = vld [vmem:[%s268 + $0xc] sm:$0xf]
      %v282 = vld [vmem:[%s2] sm:$0xf]
      %v283 = vld [vmem:[%s2 + $0x4] sm:$0xf]
      %v284 = vld [vmem:[%s2 + $0x8] sm:$0xf]
      %v285 = vld [vmem:[%s2 + $0xc] sm:$0xf]
      %v286 = vld [vmem:[%s2 + $0x10] sm:$0xf]
      %v287 = vld [vmem:[%s2 + $0x14] sm:$0xf]
      %v288 = vld [vmem:[%s2 + $0x18] sm:$0xf]
      %v289 = vld [vmem:[%s2 + $0x1c] sm:$0xf]
      %v290 = vld [vmem:[%s2 + $0x20] sm:$0xf]
      %v291 = vld [vmem:[%s2 + $0x24] sm:$0xf]
      %v292 = vld [vmem:[%s2 + $0x28] sm:$0xf]
      %v293 = vld [vmem:[%s2 + $0x2c] sm:$0xf]
      %v294 = vld [vmem:[%s2 + $0x30] sm:$0xf]
      %v295 = vld [vmem:[%s2 + $0x34] sm:$0xf]
      %v296 = vld [vmem:[%s2 + $0x38] sm:$0xf]
      %v297 = vld [vmem:[%s2 + $0x3c] sm:$0xf]
      %v302 = vunpack.c.l.b16 %v278
      %v303 = vunpack.c.l.b16 %v279
      %v304 = vunpack.c.l.b16 %v280
      %v305 = vunpack.c.l.b16 %v281
      %v306 = vpack.c.b16 %v303, %v302
      %v307 = vpack.c.b16 %v305, %v304
      %v326 = vunpack.c.l.b16 %v282
      %v327 = vunpack.c.l.b16 %v283
      %v328 = vunpack.c.l.b16 %v284
      %v329 = vunpack.c.l.b16 %v285
      %v330 = vunpack.c.l.b16 %v286
      %v331 = vunpack.c.l.b16 %v287
      %v332 = vunpack.c.l.b16 %v288
      %v333 = vunpack.c.l.b16 %v289
      %v334 = vunpack.c.l.b16 %v290
      %v335 = vunpack.c.l.b16 %v291
      %v336 = vunpack.c.l.b16 %v292
      %v337 = vunpack.c.l.b16 %v293
      %v338 = vunpack.c.l.b16 %v294
      %v339 = vunpack.c.l.b16 %v295
      %v340 = vunpack.c.l.b16 %v296
      %v341 = vunpack.c.l.b16 %v297
      %v342 = vpack.c.b16 %v327, %v326
      %v343 = vpack.c.b16 %v329, %v328
      %v344 = vpack.c.b16 %v331, %v330
      %v345 = vpack.c.b16 %v333, %v332
      %v346 = vpack.c.b16 %v335, %v334
      %v347 = vpack.c.b16 %v337, %v336
      %v348 = vpack.c.b16 %v339, %v338
      %v349 = vpack.c.b16 %v341, %v340
      %358 = vmatpush.bf16.msra.mxu0 %v349
      %359 = vmatpush.bf16.msra.mxu0 %v348
      %360 = vmatpush.bf16.msra.mxu0 %v347
      %361 = vmatpush.bf16.msra.mxu0 %v346
      %362 = vmatpush.bf16.msra.mxu0 %v345
      %363 = vmatpush.bf16.msra.mxu0 %v344
      %364 = vmatpush.bf16.msra.mxu0 %v343
      %365 = vmatpush.bf16.msra.mxu0 %v342
      %366 = vmatmul.bf16.gmra.mxu0 %v306
      %v367 = vpop.f32.mrf.mxu0
      %v368 = vadd.f32 0.0, %v367
      %v369 = vpop.f32.mrf.mxu0
      %v370 = vadd.f32 0.0, %v369
      %371 = vmatmul.bf16.gmra.mxu0 %v307
      %v372 = vpop.f32.mrf.mxu0
      %v373 = vadd.f32 0.0, %v372
      %v374 = vpop.f32.mrf.mxu0
      %v375 = vadd.f32 0.0, %v374
      %376 = vdwg.mxu0
      %p377 = scmp.eq.s32.totalorder %s22, 0
      %p378 = scmp.eq.s32.totalorder %s23, 0
      %p379 = pnand %p377, %p378
      %p380 = pneg %p379
      // Predicated region
      $region41: #{ab_distill_forward.7} parent=39 // pred_check
        _
      $region42: #{ab_distill_forward.7} parent=39 // pred_check_branch
        %382 = sbr.rel (%p379) target = $region44
      $region43: #{ab_distill_forward.7} parent=39 // pred_region
        %383 = vst [vmem:[#allocation2] sm:$0x1] 0.0
        %384 = vst [vmem:[#allocation3] sm:$0x1] 0.0
      $region44: #{ab_distill_forward.7} parent=39 // pred_fallthru
        _
      // Predicated region
      $region45: #{ab_distill_forward.7} parent=39 // pred_check
        %p385 = pneg %p377
      $region46: #{ab_distill_forward.7} parent=39 // pred_check_branch
        %387 = sbr.rel (%p385) target = $region48
      $region47: #{ab_distill_forward.7} parent=39 // pred_region
        %v388 = vld [vmem:[#allocation2] sm:$0x1]
        %v389 = vadd.f32 %v368, %v370
        %v390 = vadd.f32 %v389, %v373
        %v391 = vadd.f32 %v390, %v375
        %v392 = vrot.slane %v391, 4
        %v393 = vadd.f32 %v391, %v392
        %v394 = vrot.slane %v393, 2
        %v395 = vadd.f32 %v393, %v394
        %v396 = vrot.slane %v395, 1
        %v397 = vadd.f32 %v395, %v396
        %v398 = vadd.f32 %v388, %v397
        %399 = vst [vmem:[#allocation2] sm:$0x1] %v398
        %v400 = vld [vmem:[#allocation3] sm:$0x1]
        %v401 = vmul.f32 %v368, %v368
        %v402 = vmul.f32 %v370, %v370
        %v403 = vmul.f32 %v373, %v373
        %v404 = vmul.f32 %v375, %v375
        %v405 = vadd.f32 %v401, %v402
        %v406 = vadd.f32 %v405, %v403
        %v407 = vadd.f32 %v406, %v404
        %v408 = vrot.slane %v407, 4
        %v409 = vadd.f32 %v407, %v408
        %v410 = vrot.slane %v409, 2
        %v411 = vadd.f32 %v409, %v410
        %v412 = vrot.slane %v411, 1
        %v413 = vadd.f32 %v411, %v412
        %v414 = vadd.f32 %v400, %v413
        %415 = vst [vmem:[#allocation3] sm:$0x1] %v414
      $region48: #{ab_distill_forward.7} parent=39 // pred_fallthru
        _
      // Predicated region
      $region49: #{ab_distill_forward.7} parent=39 // pred_check
        _
      $region50: #{ab_distill_forward.7} parent=39 // pred_check_branch
        %417 = sbr.rel (%p379) target = $region52
      $region51: #{ab_distill_forward.7} parent=39 // pred_region
        %v418 = vld [vmem:[#allocation2] sm:$0x1]
        %v419 = vmul.f32 %v418, 0.03125
        %v420 = vld [vmem:[#allocation3] sm:$0x1]
        %v421 = vmul.f32 %v420, 0.03125
        %v422 = vmul.f32 %v419, %v419
        %v423 = vsub.f32 %v421, %v422
        %v424 = vmax.f32 %v423, 0.0
        %v425 = vld [vmem:[%s3] sm:$0x1]
        %v426 = vadd.f32 %v424, 1e-05
        %v427 = vrsqrt.pop %v426
        %v428 = vmul.f32 %v427, %v426
        %v429 = vmul.f32 %v428, %v427
        %v430 = vmul.f32 0.5, %v429
        %v431 = vsub.f32 1.5, %v430
        %v432 = vmul.f32 %v427, %v431
        %vm433 = vweird.f32 %v426
        %vm434 = vweird.f32 %v427
        %vm435 = vmor %vm433, %vm434
        %v436 = vsel %vm435, %v427, %v432
        %v437 = vmul.f32 %v425, %v436
        %438 = vst [vmem:[#allocation4] sm:$0x1] %v437
        %v439 = vld [vmem:[%s4] sm:$0x1]
        %v440 = vmul.f32 %v419, %v437
        %v441 = vsub.f32 %v439, %v440
        %442 = vst [vmem:[#allocation5] sm:$0x1] %v441
      $region52: #{ab_distill_forward.7} parent=39 // pred_fallthru
        _
      %p443 = scmp.eq.s32.totalorder %s22, 1
      %p444 = pnand %p443, %p378
      %p445 = pneg %p444
      // Predicated region
      $region53: #{ab_distill_forward.7} parent=39 // pred_check
        _
      $region54: #{ab_distill_forward.7} parent=39 // pred_check_branch
        %447 = sbr.rel (%p444) target = $region56
      $region55: #{ab_distill_forward.7} parent=39 // pred_region
        %448 = vst [vmem:[%s5] sm:$0x1] 0.0
        %449 = vst [vmem:[%s6] sm:$0x1] 0.0
      $region56: #{ab_distill_forward.7} parent=39 // pred_fallthru
        _
      // Predicated region
      $region57: #{ab_distill_forward.7} parent=39 // pred_check
        %p450 = pneg %p443
      $region58: #{ab_distill_forward.7} parent=39 // pred_check_branch
        %452 = sbr.rel (%p450) target = $region60
      $region59: #{ab_distill_forward.7} parent=39 // pred_region
        %v453 = vld [vmem:[#allocation4] sm:$0x1]
        %v455 = vperm.slane %v453, 0
        %v457 = vmul.f32 %v368, %v455
        %v458 = vmul.f32 %v370, %v455
        %v459 = vmul.f32 %v373, %v455
        %v460 = vmul.f32 %v375, %v455
        %v461 = vld [vmem:[#allocation5] sm:$0x1]
        %v463 = vperm.slane %v461, 0
        %v465 = vadd.f32 %v457, %v463
        %v466 = vadd.f32 %v458, %v463
        %v467 = vadd.f32 %v459, %v463
        %v468 = vadd.f32 %v460, %v463
        %v469 = vld [vmem:[%s275] sm:$0xf]
        %v470 = vld [vmem:[%s275 + $0x4] sm:$0xf]
        %v471 = vld [vmem:[%s275 + $0x8] sm:$0xf]
        %v472 = vld [vmem:[%s275 + $0xc] sm:$0xf]
        %v473 = vunpack.c.l.bf16 %v469
        %v474 = vunpack.c.l.bf16 %v470
        %v475 = vunpack.c.l.bf16 %v471
        %v476 = vunpack.c.l.bf16 %v472
        %v477 = vlaneseq
        %v478 = vand.u32 %v477, 127
        %vm479 = vcmp.lt.s32.totalorder %v478, 32
        %vm480 = vcmp.gt.f32.partialorder %v473, 0.0
        %vm481 = vcmp.gt.f32.partialorder %v474, 0.0
        %vm482 = vcmp.gt.f32.partialorder %v475, 0.0
        %vm483 = vcmp.gt.f32.partialorder %v476, 0.0
        %vm484 = vcmp.gt.f32.partialorder %v465, -1.0
        %vm485 = vcmp.gt.f32.partialorder %v466, -1.0
        %vm486 = vcmp.gt.f32.partialorder %v467, -1.0
        %vm487 = vcmp.gt.f32.partialorder %v468, -1.0
        %vm488 = vmand %vm479, %vm484
        %vm489 = vmand %vm479, %vm485
        %vm490 = vmand %vm479, %vm486
        %vm491 = vmand %vm479, %vm487
        %vm492 = vmxor %vm480, 1
        %vm493 = vmxor %vm481, 1
        %vm494 = vmxor %vm482, 1
        %vm495 = vmxor %vm483, 1
        %vm496 = vmand %vm488, %vm492
        %vm497 = vmand %vm489, %vm493
        %vm498 = vmand %vm490, %vm494
        %vm499 = vmand %vm491, %vm495
        %v500 = vadd.f32 %v465, 1.0
        %v501 = vadd.f32 %v466, 1.0
        %v502 = vadd.f32 %v467, 1.0
        %v503 = vadd.f32 %v468, 1.0
        %v504 = vmul.f32 %v500, %v500
        %v505 = vmul.f32 %v501, %v501
        %v506 = vmul.f32 %v502, %v502
        %v507 = vmul.f32 %v503, %v503
        %v508 = vsel %vm496, %v504, 0.0
        %v509 = vsel %vm497, %v505, 0.0
        %v510 = vsel %vm498, %v506, 0.0
        %v511 = vsel %vm499, %v507, 0.0
        %vm512 = vcmp.le.f32.partialorder %v465, 1.0
        %vm513 = vcmp.le.f32.partialorder %v466, 1.0
        %vm514 = vcmp.le.f32.partialorder %v467, 1.0
        %vm515 = vcmp.le.f32.partialorder %v468, 1.0
        %vm516 = vmand %vm479, %vm512
        %vm517 = vmand %vm479, %vm513
        %vm518 = vmand %vm479, %vm514
        %vm519 = vmand %vm479, %vm515
        %vm520 = vmand %vm516, %vm480
        %vm521 = vmand %vm517, %vm481
        %vm522 = vmand %vm518, %vm482
        %vm523 = vmand %vm519, %vm483
        %v524 = vsub.f32 %v465, 1.0
        %v525 = vsub.f32 %v466, 1.0
        %v526 = vsub.f32 %v467, 1.0
        %v527 = vsub.f32 %v468, 1.0
        %v528 = vmul.f32 %v524, %v524
        %v529 = vmul.f32 %v525, %v525
        %v530 = vmul.f32 %v526, %v526
        %v531 = vmul.f32 %v527, %v527
        %v532 = vsel %vm520, %v528, 0.0
        %v533 = vsel %vm521, %v529, 0.0
        %v534 = vsel %vm522, %v530, 0.0
        %v535 = vsel %vm523, %v531, 0.0
        %v536 = vadd.f32 %v508, %v532
        %v537 = vadd.f32 %v509, %v533
        %v538 = vadd.f32 %v510, %v534
        %v539 = vadd.f32 %v511, %v535
        %vm540 = vcmp.gt.f32.partialorder %v465, 0.0
        %vm541 = vcmp.gt.f32.partialorder %v466, 0.0
        %vm542 = vcmp.gt.f32.partialorder %v467, 0.0
        %vm543 = vcmp.gt.f32.partialorder %v468, 0.0
        %vm544 = vmxor %vm540, %vm480
        %vm545 = vmxor %vm541, %vm481
        %vm546 = vmxor %vm542, %vm482
        %vm547 = vmxor %vm543, %vm483
        %vm548 = vmand %vm479, %vm544
        %vm549 = vmand %vm479, %vm545
        %vm550 = vmand %vm479, %vm546
        %vm551 = vmand %vm479, %vm547
        %v552 = vsel %vm548, 1.0, 0.0
        %v553 = vsel %vm549, 1.0, 0.0
        %v554 = vsel %vm550, 1.0, 0.0
        %v555 = vsel %vm551, 1.0, 0.0
        %v556 = vld [vmem:[%s5] sm:$0x1]
        %v557 = vadd.f32 %v536, %v537
        %v558 = vadd.f32 %v557, %v538
        %v559 = vadd.f32 %v558, %v539
        %v560 = vrot.slane %v559, 4
        %v561 = vadd.f32 %v559, %v560
        %v562 = vrot.slane %v561, 2
        %v563 = vadd.f32 %v561, %v562
        %v564 = vrot.slane %v563, 1
        %v565 = vadd.f32 %v563, %v564
        %v566 = vmul.f32 %v565, 0.001953125
        %v567 = vadd.f32 %v556, %v566
        %568 = vst [vmem:[%s5] sm:$0x1] %v567
        %v569 = vld [vmem:[%s6] sm:$0x1]
        %v570 = vadd.f32 %v552, %v553
        %v571 = vadd.f32 %v570, %v554
        %v572 = vadd.f32 %v571, %v555
        %v573 = vrot.slane %v572, 4
        %v574 = vadd.f32 %v572, %v573
        %v575 = vrot.slane %v574, 2
        %v576 = vadd.f32 %v574, %v575
        %v577 = vrot.slane %v576, 1
        %v578 = vadd.f32 %v576, %v577
        %v579 = vmul.f32 %v578, 0.0009765625
        %v580 = vadd.f32 %v569, %v579
        %581 = vst [vmem:[%s6] sm:$0x1] %v580
      $region60: #{ab_distill_forward.7} parent=39 // pred_fallthru
        _
      // Predicated region
      $region61: #{ab_distill_forward.7} parent=39 // pred_check
        %p582 = pneg %p160
      $region62: #{ab_distill_forward.7} parent=39 // pred_check_branch
        %584 = sbr.rel (%p582) target = $region64
      $region63: #{ab_distill_forward.7} parent=39 // pred_region
        _
      $region64: #{ab_distill_forward.7} parent=39 // pred_fallthru
        _
      // Predicated region
      $region65: #{ab_distill_forward.7} parent=39 // pred_check
        %p585 = pneg %p181
      $region66: #{ab_distill_forward.7} parent=39 // pred_check_branch
        %587 = sbr.rel (%p585) target = $region68
      $region67: #{ab_distill_forward.7} parent=39 // pred_region
        _
      $region68: #{ab_distill_forward.7} parent=39 // pred_fallthru
        _
      // Predicated region
      $region69: #{ab_distill_forward.7} parent=39 // pred_check
        %p588 = pneg %p160
      $region70: #{ab_distill_forward.7} parent=39 // pred_check_branch
        %590 = sbr.rel (%p588) target = $region72
      $region71: #{ab_distill_forward.7} parent=39 // pred_region
        _
      $region72: #{ab_distill_forward.7} parent=39 // pred_fallthru
        _
      // Predicated region
      $region73: #{ab_distill_forward.7} parent=39 // pred_check
        %p591 = pneg %p181
      $region74: #{ab_distill_forward.7} parent=39 // pred_check_branch
        %593 = sbr.rel (%p591) target = $region76
      $region75: #{ab_distill_forward.7} parent=39 // pred_region
        _
      $region76: #{ab_distill_forward.7} parent=39 // pred_fallthru
        _
    $region40: #{ab_distill_forward.7} parent=5 // pred_fallthru
      _
    %p594 = scmp.le.s32.totalorder 2, %s13
    // Predicated region
    $region77: #{ab_distill_forward.7} parent=5 // pred_check
      %p595 = pneg %p594
    $region78: #{ab_distill_forward.7} parent=5 // pred_check_branch
      %597 = sbr.rel (%p595) target = $region80
    $region79: #{ab_distill_forward.7} parent=5 // pred_region
      %s598 = ssub.s32 %s13, 2
    $region80: #{ab_distill_forward.7} parent=5 // pred_fallthru
      _
  $region6: #{ab_distill_forward.7} parent=0 // loop_footer
    %s17 = sadd.s32 1, %s13
  $region7: #{ab_distill_forward.7} parent=0 // loop_footer_branch
    %12 = sbr.rel target = $region3
  $region8: #{ab_distill_forward.7} parent=0 // loop_exit
    _

// kernel: ab_distill_forward.9
$region0: #{ab_distill_forward.9}
  #allocation0 [shape = 'u32[]', space=smem, size = 0x4, offset = 0x4, fixed_abs, tag = 'smem constant byte address 0x4 - core index']
  #allocation1 [shape = 'u32[72,128]{1,0:T(1,128)}', space=vmem, size = 0x9000, scoped, tag = 'internal scratch']
  %s0 = inlined_call_operand.vmem [shape: bf16[2,32], index: 0, kind: input, shape index: {}]
  %s1 = inlined_call_operand.vmem [shape: bf16[2,32], index: 1, kind: input, shape index: {}]
  %s2 = inlined_call_operand.vmem [shape: bf16[32,128], index: 2, kind: input, shape index: {}]
  %s3 = inlined_call_operand.vmem [shape: f32[1,128], index: 3, kind: input, shape index: {}]
  %s4 = inlined_call_operand.vmem [shape: s32[2,1], index: 4, kind: input, shape index: {}]
  %s5 = inlined_call_operand.hbm [shape: f32[1,1], index: 5, kind: output, shape index: {0}]
  %s6 = inlined_call_operand.hbm [shape: f32[1,1], index: 6, kind: output, shape index: {1}]
  %7 = xla_tuple %s5, %s6
  %s8 = sld [smem:[#allocation0]]
  $region38: #{ab_distill_forward.9} parent=0
    _
  %s10 = ssub.s32 1, %s8
  %s11 = scalar_select 0, %s10, %s8
  $region1: #{ab_distill_forward.9} parent=0
    #allocation2 [shape = 'u8[512]{0}', space=smem, size = 0x200, scoped, tag = 'output window, operand 0, single buffered']
    #allocation3 [shape = 's32[1]{0}', space=sflag, size = 0x4, scoped, tag = 'scoped memory for ab_distill_forward.9']
    #allocation4 [shape = 'u8[512]{0}', space=smem, size = 0x200, scoped, tag = 'output window, operand 1, single buffered']
    #allocation5 [shape = 's32[1]{0}', space=sflag, size = 0x4, scoped, tag = 'scoped memory for ab_distill_forward.9']
    %12 = vsyncpa [#allocation3], 0
    %13 = vsyncpa [#allocation5], 0
    // Predicated region
    $region2: #{ab_distill_forward.9} parent=1 // pred_check
      _
    $region3: #{ab_distill_forward.9} parent=1 // pred_check_branch
      %15 = sbr.rel (0) target = $region5
    $region4: #{ab_distill_forward.9} parent=1 // pred_region
      _
    $region5: #{ab_distill_forward.9} parent=1 // pred_fallthru
      _
    // Predicated region
    $region6: #{ab_distill_forward.9} parent=1 // pred_check
      _
    $region7: #{ab_distill_forward.9} parent=1 // pred_check_branch
      %17 = sbr.rel (0) target = $region9
    $region8: #{ab_distill_forward.9} parent=1 // pred_region
      _
    $region9: #{ab_distill_forward.9} parent=1 // pred_fallthru
      _
    // Predicated region
    $region10: #{ab_distill_forward.9} parent=1 // pred_check
      _
    $region11: #{ab_distill_forward.9} parent=1 // pred_check_branch
      %19 = sbr.rel (0) target = $region13
    $region12: #{ab_distill_forward.9} parent=1 // pred_region
      _
    $region13: #{ab_distill_forward.9} parent=1 // pred_fallthru
      _
    // Predicated region
    $region14: #{ab_distill_forward.9} parent=1 // pred_check
      _
    $region15: #{ab_distill_forward.9} parent=1 // pred_check_branch
      %21 = sbr.rel (0) target = $region17
    $region16: #{ab_distill_forward.9} parent=1 // pred_region
      _
    $region17: #{ab_distill_forward.9} parent=1 // pred_fallthru
      _
    // Predicated region
    $region18: #{ab_distill_forward.9} parent=1 // pred_check
      _
    $region19: #{ab_distill_forward.9} parent=1 // pred_check_branch
      %23 = sbr.rel (0) target = $region21
    $region20: #{ab_distill_forward.9} parent=1 // pred_region
      _
    $region21: #{ab_distill_forward.9} parent=1 // pred_fallthru
      _
    %v25 = vld [vmem:[%s0] sm:$0x1]
    %v26 = vld [vmem:[%s2] sm:$0xf]
    %v27 = vld [vmem:[%s2 + $0x4] sm:$0xf]
    %v28 = vld [vmem:[%s2 + $0x8] sm:$0xf]
    %v29 = vld [vmem:[%s2 + $0xc] sm:$0xf]
    %v30 = vld [vmem:[%s3] sm:$0x1]
    %v32 = vperm.slane %v30, 0
    %v38 = vunpack.c.l.b16 %v26
    %v39 = vunpack.c.l.b16 %v27
    %v40 = vunpack.c.l.b16 %v28
    %v41 = vunpack.c.l.b16 %v29
    %v42 = vpack.c.b16 %v39, %v38
    %v43 = vpack.c.b16 %v41, %v40
    %vm46 = vcmask 261120
    %v48 = vsel %vm46, %v25, 0
    %50 = vmatpush.bf16.msra.mxu0 0
    %51 = vmatpush.bf16.msra.mxu0 0
    %52 = vmatpush.bf16.msra.mxu0 0
    %53 = vmatpush.bf16.msra.mxu0 0
    %54 = vmatpush.bf16.msra.mxu0 0
    %55 = vmatpush.bf16.msra.mxu0 0
    %56 = vmatpush.bf16.msra.mxu0 %v43
    %57 = vmatpush.bf16.msra.mxu0 %v42
    %58 = vmatmul.bf16.gmra.mxu0 %v48
    %v59 = vpop.f32.mrf.mxu0
    %v60 = vadd.f32 %v32, %v59
    %v61 = vpop.f32.mrf.mxu0
    %62 = vdwg.mxu0
    %v63 = vlaneseq
    %v64 = vand.u32 %v63, 127
    %vm65 = vcmp.lt.s32.totalorder %v64, 10
    %v66 = vsel %vm65, %v60, -1e+30
    %vm67 = vcmask 1041408
    %v68 = vsel %vm67, %v66, -inf
    %69 = vmax.xlane.f32.xlu0 %v68
    %v70 = vpop.xlane.xlu0 %69
    %v71 = vsub.f32 %v66, %v70
    %v72 = vmul.f32 %v71, 1.442695
    %v73 = vpow.pop %v72
    %v74 = vsel %vm65, %v73, 0.0
    %v75 = vsel %vm67, %v74, 0.0
    %76 = vadd.xlane.f32.xlu0 %v75
    %v77 = vpop.xlane.xlu0 %76
    %v78 = vlog2.pop %v77
    %v79 = vmul.f32 %v78, 0.6931472
    %v80 = vadd.f32 %v70, %v79
    %v81 = vld [vmem:[%s4] sm:$0x3]
    %82 = vset.pattern.permute.xlu0 0
    %83 = vperm.xlu0 %82, %v81
    %v84 = vpop.permute.xlu0 %83
    %vm85 = vcmp.eq.s32.totalorder %v64, %v84
    %v86 = vsub.f32 %v80, %v66
    %v87 = vsel %vm85, %v86, 0.0
    %v88 = vsel %vm67, %v87, 0.0
    %89 = vadd.xlane.f32.xlu0 %v88
    %v90 = vpop.xlane.xlu0 %89
    %vm91 = vcmask 1024
    %v92 = vsel %vm91, %v90, 0.0
    %93 = vadd.xlane.f32.xlu0 %v92
    %v94 = vpop.xlane.xlu0 %93
    %v95 = vrot.slane %v94, 4
    %v96 = vadd.f32 %v94, %v95
    %v97 = vrot.slane %v96, 2
    %v98 = vadd.f32 %v96, %v97
    %v99 = vrot.slane %v98, 1
    %v100 = vadd.f32 %v98, %v99
    %s101 = vtos %v100
    %v102 = vrcp.pop 2.0
    %v103 = vmul.f32 2.0, %v102
    %v104 = vsub.f32 1.0, %v103
    %v105 = vmul.f32 %v102, %v104
    %v106 = vadd.f32 %v102, %v105
    %vm107 = vweird.f32 %v102
    %v108 = vsel %vm107, %v102, %v106
    %s109 = vtos %v108
    %s110 = smul.f32 %s101, %s109
    %s111 = scalar_lea.smem [#allocation2], 0
    %112 = sst [smem:[%s111]] %s110
    %v113 = vld [vmem:[%s0] sm:$0x1]
    %v114 = vunpack.c.l.bf16 %v113
    %v115 = vld [vmem:[%s1] sm:$0x1]
    %v116 = vunpack.c.l.bf16 %v115
    %vm117 = vcmask 254976
    %v118 = vsel %vm117, %v114, 0.0
    %119 = vadd.xlane.f32.xlu0 %v118
    %v120 = vpop.xlane.xlu0 %119
    %v121 = vrcp.pop 32.0
    %v122 = vmul.f32 32.0, %v121
    %v123 = vsub.f32 1.0, %v122
    %v124 = vmul.f32 %v121, %v123
    %v125 = vadd.f32 %v121, %v124
    %vm126 = vweird.f32 %v121
    %v127 = vsel %vm126, %v121, %v125
    %v128 = vmul.f32 %v120, %v127
    %v129 = vsub.f32 %v114, %v128
    %v130 = vsel %vm117, %v116, 0.0
    %131 = vadd.xlane.f32.xlu0 %v130
    %v132 = vpop.xlane.xlu0 %131
    %v133 = vmul.f32 %v132, %v127
    %v134 = vsub.f32 %v116, %v133
    %v135 = vsub.f32 %v134, %v129
    %v136 = vmul.f32 %v135, %v135
    %v137 = vsel %vm117, %v136, 0.0
    %138 = vadd.xlane.f32.xlu0 %v137
    %v139 = vpop.xlane.xlu0 %138
    %v140 = vrot.slane %v139, 4
    %v141 = vadd.f32 %v139, %v140
    %v142 = vrot.slane %v141, 2
    %v143 = vadd.f32 %v141, %v142
    %v144 = vrot.slane %v143, 1
    %v145 = vadd.f32 %v143, %v144
    %s146 = vtos %v145
    %v147 = vrcp.pop 64.0
    %v148 = vmul.f32 64.0, %v147
    %v149 = vsub.f32 1.0, %v148
    %v150 = vmul.f32 %v147, %v149
    %v151 = vadd.f32 %v147, %v150
    %vm152 = vweird.f32 %v147
    %v153 = vsel %vm152, %v147, %v151
    %s154 = vtos %v153
    %s155 = smul.f32 %s146, %s154
    %s156 = smul.f32 %s155, 3.0
    %s157 = scalar_lea.smem [#allocation4], 0
    %158 = sst [smem:[%s157]] %s156
    // Predicated region
    $region22: #{ab_distill_forward.9} parent=1 // pred_check
      _
    $region23: #{ab_distill_forward.9} parent=1 // pred_check_branch
      %160 = sbr.rel (0) target = $region25
    $region24: #{ab_distill_forward.9} parent=1 // pred_region
      %162 = vsyncadd [#allocation3], 0
      %s164 = sshll.u32 %s5, 4
      %s165 = int_to_ptr.hbm [resolvable:$true] %s164
      %167 = dma.smem_to_hbm [#allocation2], 16, %s165, [#allocation3]
    $region25: #{ab_distill_forward.9} parent=1 // pred_fallthru
      _
    // Predicated region
    $region26: #{ab_distill_forward.9} parent=1 // pred_check
      _
    $region27: #{ab_distill_forward.9} parent=1 // pred_check_branch
      %169 = sbr.rel (0) target = $region29
    $region28: #{ab_distill_forward.9} parent=1 // pred_region
      %171 = vsyncadd [#allocation5], 0
      %s173 = sshll.u32 %s6, 4
      %s174 = int_to_ptr.hbm [resolvable:$true] %s173
      %176 = dma.smem_to_hbm [#allocation4], 16, %s174, [#allocation5]
    $region29: #{ab_distill_forward.9} parent=1 // pred_fallthru
      _
    // Predicated region
    $region30: #{ab_distill_forward.9} parent=1 // pred_check
      _
    $region31: #{ab_distill_forward.9} parent=1 // pred_check_branch
      %178 = sbr.rel (0) target = $region33
    $region32: #{ab_distill_forward.9} parent=1 // pred_region
      %180 = dma.done [#allocation3], 16
    $region33: #{ab_distill_forward.9} parent=1 // pred_fallthru
      _
    // Predicated region
    $region34: #{ab_distill_forward.9} parent=1 // pred_check
      _
    $region35: #{ab_distill_forward.9} parent=1 // pred_check_branch
      %182 = sbr.rel (0) target = $region37
    $region36: #{ab_distill_forward.9} parent=1 // pred_region
      %184 = dma.done [#allocation5], 16
    $region37: #{ab_distill_forward.9} parent=1 // pred_fallthru
      _
    %185 = sfence
    %186 = vsyncpa [#allocation3], 1
    %187 = vsyncpa [#allocation5], 1

</llo_original>
